<compile_context>
chip_gen: v5e
topology: v5e:2x2
jax: 0.10.0
libtpu: 0.0.40
codegen_flags: <defaults>
</compile_context>

<pallas_src>
import functools

import jax
import jax.numpy as jnp
from jax import lax
from jax.experimental import pallas as pl
from jax.experimental.pallas import tpu as pltpu

K = 5     # conv kernel size (CS224N char-CNN)
PAD = 1   # conv padding


def _round_up(x, m):
    return -(-x // m) * m


def char_cnn_embed_kernel(tok_ref, wfused_ref, bconv_ref, whw_ref, bhw_ref,
                          out_ref, *, w_valid):
    # tok_ref:    (tn, W_pad) int32 padded char ids (-1 == conv zero-padding)
    # wfused_ref: (K*Vp, E)   bf16 emb-folded conv weight (row dk*Vp + v)
    # bconv_ref:  (1, E)      f32 conv bias
    # whw_ref:    (E, 2E)     bf16 fused highway weight [proj | gate]
    # bhw_ref:    (1, 2E)     f32  fused highway bias   [proj | gate]
    # out_ref:    (tn, E)     f32  (lane-dense)
    tn, w_pad = tok_ref.shape
    kvp, e = wfused_ref.shape
    vp = kvp // K
    w_out = w_pad - K + 1

    tok = tok_ref[...]                                               # (tn, w_pad) int32

    # ---- One-hot im2col straight from char ids (exact; id -1 -> all-zero row) ----
    iota_v = lax.broadcasted_iota(jnp.int32, (tn, w_out, vp), 2)
    taps = [(tok[:, dk:dk + w_out, None] == iota_v).astype(jnp.bfloat16)
            for dk in range(K)]
    xs = jnp.concatenate(taps, axis=-1).reshape(tn * w_out, K * vp)  # (tn*w_out, K*Vp) bf16

    # ---- Embedding + Conv1d fused into a single MXU matmul ----
    conv = jnp.dot(xs, wfused_ref[...], preferred_element_type=jnp.float32)
    conv = conv.reshape(tn, w_out, e) + bconv_ref[...][None]         # (tn, w_out, E) f32

    # ---- Mask padded positions, max over word positions, then ReLU on the 2-D result ----
    if w_valid < w_out:
        pos = lax.broadcasted_iota(jnp.int32, (1, w_out, 1), 1)
        conv = jnp.where(pos < w_valid, conv, jnp.float32(-1e30))
    xm = jnp.maximum(jnp.max(conv, axis=1), 0.0)                     # (tn, E) f32

    # ---- Highway: one fused [proj | gate] matmul, f32 elementwise mix ----
    hw = jnp.dot(xm.astype(jnp.bfloat16), whw_ref[...],
                 preferred_element_type=jnp.float32) + bhw_ref[...]  # (tn, 2E) f32
    proj = jnp.maximum(hw[:, :e], 0.0)
    gate = jax.nn.sigmoid(hw[:, e:])
    out = gate * proj + (1.0 - gate) * xm

    # Dropout: identity in eval mode.
    # TODO(synk): training-mode dropout (rate 0.3) via pltpu.prng_seed / prng_random_bits.
    out_ref[...] = out.astype(out_ref.dtype)


@functools.partial(jax.jit, static_argnames=("tn",))
def model_embeddings_forward(tokens, params, *, tn=None):
    """tokens: (L, B, W) int32 char indices -> (L, B, E) float32 word embeddings."""
    L, B, W = tokens.shape
    V, E = params["emb"].shape
    N = L * B

    # 8-aligned number of conv output positions (extra ones masked inside the kernel).
    w_valid = W + 2 * PAD - K + 1
    w_out = max(8, _round_up(w_valid, 8))
    W_pad = w_out + K - 1

    # Word tile: aim for >= 8 grid steps (>= 4 per TC on v7x, pipelined on v5e/v6e),
    # multiple of 8, capped at 256 for v7x VMEM headroom at large batches.
    if tn is None:
        tn = max(8, min(256, (N // 8) // 8 * 8)) if N >= 64 else 8
    N_pad = _round_up(N, tn)

    # Clamp stray ids (gather-like semantics), pad char axis with -1 (exact zero-padding),
    # pad the word axis up to the tile (extra rows are sliced off below).
    tok = jnp.clip(tokens.reshape(N, W), 0, V - 1)
    tok = jnp.pad(tok, ((0, N_pad - N), (PAD, W_pad - W - PAD)), constant_values=-1)

    # Fold the char-embedding table into the conv weight; pad vocab to 128 lanes.
    Vp = _round_up(V, 128)
    emb_p = jnp.pad(params["emb"].astype(jnp.float32), ((0, Vp - V), (0, 0)))
    w_fused = jnp.einsum("vc,kco->kvo", emb_p, params["w_conv"].astype(jnp.float32))
    w_fused = w_fused.reshape(K * Vp, E).astype(jnp.bfloat16)        # (K*Vp, E)

    # Fuse the two highway matmuls into one 256-wide dot.
    w_hw = jnp.concatenate([params["w_proj"], params["w_gate"]], axis=1)   # (E, 2E) bf16
    b_hw = jnp.concatenate([params["b_proj"], params["b_gate"]], axis=1)   # (1, 2E) f32

    kernel = functools.partial(char_cnn_embed_kernel, w_valid=w_valid)

    out = pl.pallas_call(
        kernel,
        out_shape=jax.ShapeDtypeStruct((N_pad, E), jnp.float32),
        grid_spec=pltpu.PrefetchScalarGridSpec(
            num_scalar_prefetch=0,
            grid=(N_pad // tn,),
            in_specs=[
                pl.BlockSpec((tn, W_pad), lambda i: (i, 0)),     # padded char ids
                pl.BlockSpec((K * Vp, E), lambda i: (0, 0)),     # emb-folded conv weight
                pl.BlockSpec((1, E), lambda i: (0, 0)),          # conv bias
                pl.BlockSpec((E, 2 * E), lambda i: (0, 0)),      # highway [proj|gate] W
                pl.BlockSpec((1, 2 * E), lambda i: (0, 0)),      # highway [proj|gate] b
            ],
            out_specs=pl.BlockSpec((tn, E), lambda i: (i, 0)),
        ),
        compiler_params=pltpu.CompilerParams(dimension_semantics=("parallel",)),
    )(tok, w_fused, params["b_conv"], w_hw, b_hw)

    return out[:N].reshape(L, B, E)


def ref_forward(tokens, p):
    """Pure-JAX reference mirroring the PyTorch forward (eval mode), same bf16 weights."""
    L, B, W = tokens.shape
    V, E = p["emb"].shape
    x = jnp.take(p["emb"], tokens.reshape(L * B, W), axis=0)            # (N, W, E) bf16
    xp = jnp.pad(x, ((0, 0), (PAD, PAD), (0, 0)))                       # zero conv padding
    w_out = W + 2 * PAD - K + 1
    xs = jnp.concatenate([xp[:, dk:dk + w_out, :] for dk in range(K)], axis=-1)
    conv = jnp.einsum("nwc,co->nwo", xs, p["w_conv"].reshape(K * E, E),
                      preferred_element_type=jnp.float32) + p["b_conv"]
    xm = jnp.max(jax.nn.relu(conv), axis=1)
    xb = xm.astype(jnp.bfloat16)
    proj = jax.nn.relu(jnp.dot(xb, p["w_proj"], preferred_element_type=jnp.float32) + p["b_proj"])
    gate = jax.nn.sigmoid(jnp.dot(xb, p["w_gate"], preferred_element_type=jnp.float32) + p["b_gate"])
    hw = gate * proj + (1.0 - gate) * xm
    return hw.reshape(L, B, E)


def init_params(key, vocab_len, word_embed_size):
    E = word_embed_size
    ks = jax.random.split(key, 7)
    s = 0.1
    return {
        "emb":    (s * jax.random.normal(ks[0], (vocab_len, E), jnp.float32)).astype(jnp.bfloat16),
        "w_conv": (s * jax.random.normal(ks[1], (K, E, E), jnp.float32)).astype(jnp.bfloat16),
        "b_conv": s * jax.random.normal(ks[2], (1, E), jnp.float32),
        "w_proj": (s * jax.random.normal(ks[3], (E, E), jnp.float32)).astype(jnp.bfloat16),
        "b_proj": s * jax.random.normal(ks[4], (1, E), jnp.float32),
        "w_gate": (s * jax.random.normal(ks[5], (E, E), jnp.float32)).astype(jnp.bfloat16),
        "b_gate": s * jax.random.normal(ks[6], (1, E), jnp.float32),
    }


if __name__ == "__main__":
    # sentence_length=8, batch_size=16, max_word_length=14, word_embed_size=128, char vocab=64
    L, B, W, E, V = 8, 16, 14, 128, 64

    key = jax.random.PRNGKey(0)
    k_tok, k_par = jax.random.split(key)
    tokens = jax.random.randint(k_tok, (L, B, W), 0, V, dtype=jnp.int32)
    params = init_params(k_par, V, E)

    out = jax.block_until_ready(model_embeddings_forward(tokens, params))  # tn=16 -> grid=(8,)
    ref = ref_forward(tokens, params)

    assert out.shape == (L, B, E), out.shape
    err = float(jnp.max(jnp.abs(out - ref)))
    # Small tolerance covers the bf16 rounding of the emb-folded conv table.
    assert err < 2e-2, err
    print("KERNEL_OK")
</pallas_src>

<mosaic_0001>
module attributes {stable_mosaic.version = 11 : i64} {
  func.func @char_cnn_embed_kernel(%arg0: i32, %arg1: memref<16x20xi32, #tpu.memory_space<vmem>>, %arg2: memref<640x128xbf16, #tpu.memory_space<vmem>>, %arg3: memref<1x128xf32, #tpu.memory_space<vmem>>, %arg4: memref<128x256xbf16, #tpu.memory_space<vmem>>, %arg5: memref<1x256xf32, #tpu.memory_space<vmem>>, %arg6: memref<16x128xf32, #tpu.memory_space<vmem>>) attributes {dimension_semantics = [#tpu.dimension_semantics<parallel>], iteration_bounds = array<i64: 8>, scalar_prefetch = 0 : i64, scratch_operands = 0 : i64, tpu.core_type = #tpu.core_type<tc>, window_params = [{transform_indices = @transform_0, window_bounds = array<i64: 16, 20>}, {pipeline_mode = #tpu.pipeline_mode<synchronous>, transform_indices = @transform_1, window_bounds = array<i64: 640, 128>}, {pipeline_mode = #tpu.pipeline_mode<synchronous>, transform_indices = @transform_2, window_bounds = array<i64: 1, 128>}, {pipeline_mode = #tpu.pipeline_mode<synchronous>, transform_indices = @transform_3, window_bounds = array<i64: 128, 256>}, {pipeline_mode = #tpu.pipeline_mode<synchronous>, transform_indices = @transform_4, window_bounds = array<i64: 1, 256>}, {transform_indices = @transform_5, window_bounds = array<i64: 16, 128>}]} {
    %c0 = arith.constant 0 : index
    %c0_0 = arith.constant 0 : index
    %0 = vector.load %arg1[%c0, %c0_0] : memref<16x20xi32, #tpu.memory_space<vmem>>, vector<16x20xi32>
    %1 = tpu.iota {dimensions = array<i32: 2>} : vector<16x16x128xi32>
    %2 = vector.extract_strided_slice %0 {offsets = [0, 0], sizes = [16, 16], strides = [1, 1]} : vector<16x20xi32> to vector<16x16xi32>
    %3 = vector.shape_cast %2 : vector<16x16xi32> to vector<16x16x1xi32>
    %4 = vector.broadcast %3 : vector<16x16x1xi32> to vector<16x16x128xi32>
    %5 = arith.cmpi eq, %4, %1 : vector<16x16x128xi32>
    %6 = arith.extui %5 : vector<16x16x128xi1> to vector<16x16x128xi32>
    %7 = arith.sitofp %6 : vector<16x16x128xi32> to vector<16x16x128xf32>
    %8 = arith.truncf %7 : vector<16x16x128xf32> to vector<16x16x128xbf16>
    %9 = vector.extract_strided_slice %0 {offsets = [0, 1], sizes = [16, 16], strides = [1, 1]} : vector<16x20xi32> to vector<16x16xi32>
    %10 = vector.shape_cast %9 : vector<16x16xi32> to vector<16x16x1xi32>
    %11 = vector.broadcast %10 : vector<16x16x1xi32> to vector<16x16x128xi32>
    %12 = arith.cmpi eq, %11, %1 : vector<16x16x128xi32>
    %13 = arith.extui %12 : vector<16x16x128xi1> to vector<16x16x128xi32>
    %14 = arith.sitofp %13 : vector<16x16x128xi32> to vector<16x16x128xf32>
    %15 = arith.truncf %14 : vector<16x16x128xf32> to vector<16x16x128xbf16>
    %16 = vector.extract_strided_slice %0 {offsets = [0, 2], sizes = [16, 16], strides = [1, 1]} : vector<16x20xi32> to vector<16x16xi32>
    %17 = vector.shape_cast %16 : vector<16x16xi32> to vector<16x16x1xi32>
    %18 = vector.broadcast %17 : vector<16x16x1xi32> to vector<16x16x128xi32>
    %19 = arith.cmpi eq, %18, %1 : vector<16x16x128xi32>
    %20 = arith.extui %19 : vector<16x16x128xi1> to vector<16x16x128xi32>
    %21 = arith.sitofp %20 : vector<16x16x128xi32> to vector<16x16x128xf32>
    %22 = arith.truncf %21 : vector<16x16x128xf32> to vector<16x16x128xbf16>
    %23 = vector.extract_strided_slice %0 {offsets = [0, 3], sizes = [16, 16], strides = [1, 1]} : vector<16x20xi32> to vector<16x16xi32>
    %24 = vector.shape_cast %23 : vector<16x16xi32> to vector<16x16x1xi32>
    %25 = vector.broadcast %24 : vector<16x16x1xi32> to vector<16x16x128xi32>
    %26 = arith.cmpi eq, %25, %1 : vector<16x16x128xi32>
    %27 = arith.extui %26 : vector<16x16x128xi1> to vector<16x16x128xi32>
    %28 = arith.sitofp %27 : vector<16x16x128xi32> to vector<16x16x128xf32>
    %29 = arith.truncf %28 : vector<16x16x128xf32> to vector<16x16x128xbf16>
    %30 = vector.extract_strided_slice %0 {offsets = [0, 4], sizes = [16, 16], strides = [1, 1]} : vector<16x20xi32> to vector<16x16xi32>
    %31 = vector.shape_cast %30 : vector<16x16xi32> to vector<16x16x1xi32>
    %32 = vector.broadcast %31 : vector<16x16x1xi32> to vector<16x16x128xi32>
    %33 = arith.cmpi eq, %32, %1 : vector<16x16x128xi32>
    %34 = arith.extui %33 : vector<16x16x128xi1> to vector<16x16x128xi32>
    %35 = arith.sitofp %34 : vector<16x16x128xi32> to vector<16x16x128xf32>
    %36 = arith.truncf %35 : vector<16x16x128xf32> to vector<16x16x128xbf16>
    %37 = tpu.concatenate %8, %15, %22, %29, %36 in 2 : vector<16x16x128xbf16>, vector<16x16x128xbf16>, vector<16x16x128xbf16>, vector<16x16x128xbf16>, vector<16x16x128xbf16> -> vector<16x16x640xbf16>
    %38 = vector.shape_cast %37 : vector<16x16x640xbf16> to vector<256x640xbf16>
    %c0_1 = arith.constant 0 : index
    %c0_2 = arith.constant 0 : index
    %39 = vector.load %arg2[%c0_1, %c0_2] : memref<640x128xbf16, #tpu.memory_space<vmem>>, vector<640x128xbf16>
    %cst = arith.constant dense<0.000000e+00> : vector<256x128xf32>
    %40 = tpu.matmul %38, %39, %cst {dimension_numbers = #tpu.dot_dimension_numbers<[1], [0], [0], [1], [0, 0, 1, 1], [], []>} : vector<256x640xbf16>, vector<640x128xbf16>, vector<256x128xf32> -> vector<256x128xf32>
    %41 = vector.shape_cast %40 : vector<256x128xf32> to vector<16x16x128xf32>
    %c0_3 = arith.constant 0 : index
    %c0_4 = arith.constant 0 : index
    %42 = vector.load %arg3[%c0_3, %c0_4] : memref<1x128xf32, #tpu.memory_space<vmem>>, vector<1x128xf32>
    %43 = vector.shape_cast %42 : vector<1x128xf32> to vector<1x1x128xf32>
    %44 = vector.broadcast %43 : vector<1x1x128xf32> to vector<16x16x128xf32>
    %45 = arith.addf %41, %44 : vector<16x16x128xf32>
    %46 = tpu.iota {dimensions = array<i32: 1>} : vector<1x16x1xi32>
    %c12_i32 = arith.constant 12 : i32
    %47 = vector.broadcast %c12_i32 : i32 to vector<1x16x1xi32>
    %48 = arith.cmpi slt, %46, %47 : vector<1x16x1xi32>
    %cst_5 = arith.constant -1.000000e+30 : f32
    %49 = vector.shape_cast %48 : vector<1x16x1xi1> to vector<1x16x1xi1>
    %50 = vector.broadcast %49 : vector<1x16x1xi1> to vector<16x16x128xi1>
    %51 = vector.broadcast %cst_5 : f32 to vector<16x16x128xf32>
    %52 = arith.select %50, %45, %51 : vector<16x16x128xi1>, vector<16x16x128xf32>
    %cst_6 = arith.constant dense<0xFF800000> : vector<16x128xf32>
    %53 = vector.multi_reduction <maximumf>, %52, %cst_6 [1] : vector<16x16x128xf32> to vector<16x128xf32>
    %cst_7 = arith.constant 0.000000e+00 : f32
    %54 = vector.broadcast %cst_7 : f32 to vector<16x128xf32>
    %55 = arith.maximumf %53, %54 : vector<16x128xf32>
    %56 = arith.truncf %55 : vector<16x128xf32> to vector<16x128xbf16>
    %c0_8 = arith.constant 0 : index
    %c0_9 = arith.constant 0 : index
    %57 = vector.load %arg4[%c0_8, %c0_9] : memref<128x256xbf16, #tpu.memory_space<vmem>>, vector<128x256xbf16>
    %cst_10 = arith.constant dense<0.000000e+00> : vector<16x256xf32>
    %58 = tpu.matmul %56, %57, %cst_10 {dimension_numbers = #tpu.dot_dimension_numbers<[1], [0], [0], [1], [0, 0, 1, 1], [], []>} : vector<16x128xbf16>, vector<128x256xbf16>, vector<16x256xf32> -> vector<16x256xf32>
    %c0_11 = arith.constant 0 : index
    %c0_12 = arith.constant 0 : index
    %59 = vector.load %arg5[%c0_11, %c0_12] : memref<1x256xf32, #tpu.memory_space<vmem>>, vector<1x256xf32>
    %60 = vector.broadcast %59 : vector<1x256xf32> to vector<16x256xf32>
    %61 = arith.addf %58, %60 : vector<16x256xf32>
    %62 = vector.extract_strided_slice %61 {offsets = [0, 0], sizes = [16, 128], strides = [1, 1]} : vector<16x256xf32> to vector<16x128xf32>
    %cst_13 = arith.constant 0.000000e+00 : f32
    %63 = vector.broadcast %cst_13 : f32 to vector<16x128xf32>
    %64 = arith.maximumf %62, %63 : vector<16x128xf32>
    %65 = vector.extract_strided_slice %61 {offsets = [0, 128], sizes = [16, 128], strides = [1, 1]} : vector<16x256xf32> to vector<16x128xf32>
    %66 = arith.negf %65 : vector<16x128xf32>
    %67 = math.exp %66 : vector<16x128xf32>
    %cst_14 = arith.constant 1.000000e+00 : f32
    %68 = vector.broadcast %cst_14 : f32 to vector<16x128xf32>
    %69 = arith.addf %68, %67 : vector<16x128xf32>
    %70 = arith.divf %68, %69 : vector<16x128xf32>
    %71 = arith.mulf %70, %64 : vector<16x128xf32>
    %cst_15 = arith.constant 1.000000e+00 : f32
    %72 = vector.broadcast %cst_15 : f32 to vector<16x128xf32>
    %73 = arith.subf %72, %70 : vector<16x128xf32>
    %74 = arith.mulf %73, %55 : vector<16x128xf32>
    %75 = arith.addf %71, %74 : vector<16x128xf32>
    %c0_16 = arith.constant 0 : index
    %c0_17 = arith.constant 0 : index
    %76 = vector.load %arg6[%c0_16, %c0_17] : memref<16x128xf32, #tpu.memory_space<vmem>>, vector<16x128xf32>
    tpu.vector_store %arg6[%c0_16, %c0_17], %75 {strides = array<i32>} : memref<16x128xf32, #tpu.memory_space<vmem>>, vector<16x128xf32>,
    return
  }
  func.func @transform_0(%arg0: i32) -> (i32, i32) {
    %c0_i32 = arith.constant 0 : i32
    %c0_i32_0 = arith.constant 0 : i32
    return %arg0, %c0_i32 : i32, i32
  }
  func.func @transform_1(%arg0: i32) -> (i32, i32) {
    %c0_i32 = arith.constant 0 : i32
    %c0_i32_0 = arith.constant 0 : i32
    %c0_i32_1 = arith.constant 0 : i32
    return %c0_i32, %c0_i32_0 : i32, i32
  }
  func.func @transform_2(%arg0: i32) -> (i32, i32) {
    %c0_i32 = arith.constant 0 : i32
    %c0_i32_0 = arith.constant 0 : i32
    %c0_i32_1 = arith.constant 0 : i32
    return %c0_i32, %c0_i32_0 : i32, i32
  }
  func.func @transform_3(%arg0: i32) -> (i32, i32) {
    %c0_i32 = arith.constant 0 : i32
    %c0_i32_0 = arith.constant 0 : i32
    %c0_i32_1 = arith.constant 0 : i32
    return %c0_i32, %c0_i32_0 : i32, i32
  }
  func.func @transform_4(%arg0: i32) -> (i32, i32) {
    %c0_i32 = arith.constant 0 : i32
    %c0_i32_0 = arith.constant 0 : i32
    %c0_i32_1 = arith.constant 0 : i32
    return %c0_i32, %c0_i32_0 : i32, i32
  }
  func.func @transform_5(%arg0: i32) -> (i32, i32) {
    %c0_i32 = arith.constant 0 : i32
    %c0_i32_0 = arith.constant 0 : i32
    return %arg0, %c0_i32 : i32, i32
  }
}

</mosaic_0001>

<llo_original>
// kernel: model_embeddings_forward.1
$region0: #{model_embeddings_forward.1}
  #allocation0 [shape = 'u32[]', space=smem, size = 0x4, offset = 0x4, fixed_abs, tag = 'smem constant byte address 0x4 - core index']
  #allocation1 [shape = 'u32[72,128]{1,0:T(1,128)}', space=vmem, size = 0x9000, scoped, tag = 'internal scratch']
  %s0 = inlined_call_operand.vmem [shape: s32[128,20], index: 0, kind: input, shape index: {}]
  %s1 = inlined_call_operand.vmem [shape: bf16[640,128], index: 1, kind: input, shape index: {}]
  %s2 = inlined_call_operand.vmem [shape: f32[1,128], index: 2, kind: input, shape index: {}]
  %s3 = inlined_call_operand.vmem [shape: bf16[128,256], index: 3, kind: input, shape index: {}]
  %s4 = inlined_call_operand.vmem [shape: f32[1,256], index: 4, kind: input, shape index: {}]
  %s5 = inlined_call_operand.hbm [shape: f32[128,128], index: 5, kind: output, shape index: {}]
  %s6 = sld [smem:[#allocation0]]
  $region53: #{model_embeddings_forward.1} parent=0
    _
  %s8 = ssub.s32 1, %s6
  %s9 = scalar_select 0, %s8, %s6
  $region1: #{model_embeddings_forward.1} parent=0
    #allocation2 [shape = 'u8[16384]{0}', space=vmem, size = 0x4000, scoped, tag = 'output window, operand 0']
    #allocation3 [shape = 's32[2]{0}', space=sflag, size = 0x8, scoped, tag = 'scoped memory for model_embeddings_forward.1']
    %10 = vsyncpa [#allocation3], 0
    %s11 = scalar_lea.sflag [#allocation3], 1
    %12 = vsyncpa %s11, 0
    loop: start=0, step=1, limit=10
    $region2: #{model_embeddings_forward.1} parent=1 // loop_pre_header
      _
    $region3: #{model_embeddings_forward.1} parent=1 // loop_header
      %s14 = sphi 0, %s18
      %p15 = scmp.ge.s32.totalorder %s14, 10
      %s24 = sphi 0, %s26
      %s27 = sphi 0, %s24
      %s28 = sphi 0, %s27
      %s44 = sphi 0, %s28
      %s48 = sphi 0, %s48
      %s50 = sphi 0, %s48
      %s51 = sphi 0, %s50
      %s65 = sphi 0, %s51
      %s69 = sphi 0, %s69
      %s71 = sphi 0, %s69
      %s72 = sphi 0, %s71
      %s86 = sphi 0, %s72
      %s90 = sphi 0, %s90
      %s92 = sphi 0, %s90
      %s93 = sphi 0, %s92
      %s107 = sphi 0, %s93
      %s111 = sphi 0, %s111
      %s113 = sphi 0, %s111
      %s114 = sphi 0, %s113
      %s128 = sphi 0, %s114
      %s134 = sphi 0, %s136
      %s137 = sphi 0, %s134
      %s138 = sphi 0, %s137
      %s154 = sphi 0, %s138
    $region4: #{model_embeddings_forward.1} parent=1 // loop_header_branch
      %17 = sbr.rel (%p15) target = $region8
    $region5: #{model_embeddings_forward.1} parent=1 // loop_body
      %s19 = ssub.s32 %s14, 1
      %s20 = ssub.s32 %s14, 2
      %s21 = sadd.s32 %s14, 1
      %s22 = ssub.s32 %s14, %s21
      %p23 = scmp.eq.s32.totalorder %s22, 0
      %s25 = sadd.s32 %s24, 1
      %s26 = scalar_select %p23, %s24, %s25
      %p29 = pneg %p23
      %p30 = scmp.eq.s32.totalorder %s14, 7
      %p31 = por %p29, %p30
      %p32 = scmp.ne.s32.totalorder %s24, %s27
      %p33 = scmp.eq.s32.totalorder %s14, 0
      %p34 = por %p32, %p33
      %p35 = scmp.ne.s32.totalorder %s24, %s27
      %p36 = scmp.eq.s32.totalorder %s19, 7
      %p37 = por %p35, %p36
      %p38 = scmp.ne.s32.totalorder %s27, %s28
      %p39 = scmp.eq.s32.totalorder %s19, 0
      %p40 = por %p38, %p39
      %p41 = scmp.ne.s32.totalorder %s27, %s28
      %p42 = scmp.eq.s32.totalorder %s20, 7
      %p43 = por %p41, %p42
      %p45 = scmp.ne.s32.totalorder %s28, %s44
      %p46 = scmp.eq.s32.totalorder %s20, 0
      %p47 = por %p45, %p46
      %s49 = sadd.s32 %s48, 1
      %p52 = scmp.eq.s32.totalorder %s14, 7
      %p53 = scmp.ne.s32.totalorder %s48, %s50
      %p54 = scmp.eq.s32.totalorder %s14, 0
      %p55 = por %p53, %p54
      %p56 = scmp.ne.s32.totalorder %s48, %s50
      %p57 = scmp.eq.s32.totalorder %s19, 7
      %p58 = por %p56, %p57
      %p59 = scmp.ne.s32.totalorder %s50, %s51
      %p60 = scmp.eq.s32.totalorder %s19, 0
      %p61 = por %p59, %p60
      %p62 = scmp.ne.s32.totalorder %s50, %s51
      %p63 = scmp.eq.s32.totalorder %s20, 7
      %p64 = por %p62, %p63
      %p66 = scmp.ne.s32.totalorder %s51, %s65
      %p67 = scmp.eq.s32.totalorder %s20, 0
      %p68 = por %p66, %p67
      %s70 = sadd.s32 %s69, 1
      %p73 = scmp.eq.s32.totalorder %s14, 7
      %p74 = scmp.ne.s32.totalorder %s69, %s71
      %p75 = scmp.eq.s32.totalorder %s14, 0
      %p76 = por %p74, %p75
      %p77 = scmp.ne.s32.totalorder %s69, %s71
      %p78 = scmp.eq.s32.totalorder %s19, 7
      %p79 = por %p77, %p78
      %p80 = scmp.ne.s32.totalorder %s71, %s72
      %p81 = scmp.eq.s32.totalorder %s19, 0
      %p82 = por %p80, %p81
      %p83 = scmp.ne.s32.totalorder %s71, %s72
      %p84 = scmp.eq.s32.totalorder %s20, 7
      %p85 = por %p83, %p84
      %p87 = scmp.ne.s32.totalorder %s72, %s86
      %p88 = scmp.eq.s32.totalorder %s20, 0
      %p89 = por %p87, %p88
      %s91 = sadd.s32 %s90, 1
      %p94 = scmp.eq.s32.totalorder %s14, 7
      %p95 = scmp.ne.s32.totalorder %s90, %s92
      %p96 = scmp.eq.s32.totalorder %s14, 0
      %p97 = por %p95, %p96
      %p98 = scmp.ne.s32.totalorder %s90, %s92
      %p99 = scmp.eq.s32.totalorder %s19, 7
      %p100 = por %p98, %p99
      %p101 = scmp.ne.s32.totalorder %s92, %s93
      %p102 = scmp.eq.s32.totalorder %s19, 0
      %p103 = por %p101, %p102
      %p104 = scmp.ne.s32.totalorder %s92, %s93
      %p105 = scmp.eq.s32.totalorder %s20, 7
      %p106 = por %p104, %p105
      %p108 = scmp.ne.s32.totalorder %s93, %s107
      %p109 = scmp.eq.s32.totalorder %s20, 0
      %p110 = por %p108, %p109
      %s112 = sadd.s32 %s111, 1
      %p115 = scmp.eq.s32.totalorder %s14, 7
      %p116 = scmp.ne.s32.totalorder %s111, %s113
      %p117 = scmp.eq.s32.totalorder %s14, 0
      %p118 = por %p116, %p117
      %p119 = scmp.ne.s32.totalorder %s111, %s113
      %p120 = scmp.eq.s32.totalorder %s19, 7
      %p121 = por %p119, %p120
      %p122 = scmp.ne.s32.totalorder %s113, %s114
      %p123 = scmp.eq.s32.totalorder %s19, 0
      %p124 = por %p122, %p123
      %p125 = scmp.ne.s32.totalorder %s113, %s114
      %p126 = scmp.eq.s32.totalorder %s20, 7
      %p127 = por %p125, %p126
      %p129 = scmp.ne.s32.totalorder %s114, %s128
      %p130 = scmp.eq.s32.totalorder %s20, 0
      %p131 = por %p129, %p130
      %s132 = ssub.s32 %s14, %s21
      %p133 = scmp.eq.s32.totalorder %s132, 0
      %s135 = sadd.s32 %s134, 1
      %s136 = scalar_select %p133, %s134, %s135
      %p139 = pneg %p133
      %p140 = scmp.eq.s32.totalorder %s14, 7
      %p141 = por %p139, %p140
      %p142 = scmp.ne.s32.totalorder %s134, %s137
      %p143 = scmp.eq.s32.totalorder %s14, 0
      %p144 = por %p142, %p143
      %p145 = scmp.ne.s32.totalorder %s134, %s137
      %p146 = scmp.eq.s32.totalorder %s19, 7
      %p147 = por %p145, %p146
      %p148 = scmp.ne.s32.totalorder %s137, %s138
      %p149 = scmp.eq.s32.totalorder %s19, 0
      %p150 = por %p148, %p149
      %p151 = scmp.ne.s32.totalorder %s137, %s138
      %p152 = scmp.eq.s32.totalorder %s20, 7
      %p153 = por %p151, %p152
      %p155 = scmp.ne.s32.totalorder %s138, %s154
      %p156 = scmp.eq.s32.totalorder %s20, 0
      %p157 = por %p155, %p156
      %p158 = scmp.le.s32.totalorder 1, %s14
      %p159 = scmp.lt.s32.totalorder %s14, 9
      %p160 = pnand %p158, %p159
      %p161 = pneg %p160
      // Predicated region
      $region9: #{model_embeddings_forward.1} parent=5 // pred_check
        _
      $region10: #{model_embeddings_forward.1} parent=5 // pred_check_branch
        %163 = sbr.rel (%p160) target = $region12
      $region11: #{model_embeddings_forward.1} parent=5 // pred_region
        %s164 = ssub.s32 %s14, 1
        // Predicated region
        $region13: #{model_embeddings_forward.1} parent=11 // pred_check
          %p165 = pneg %p61
        $region14: #{model_embeddings_forward.1} parent=11 // pred_check_branch
          %167 = sbr.rel (%p165) target = $region16
        $region15: #{model_embeddings_forward.1} parent=11 // pred_region
          _
        $region16: #{model_embeddings_forward.1} parent=11 // pred_fallthru
          _
        // Predicated region
        $region17: #{model_embeddings_forward.1} parent=11 // pred_check
          %p168 = pneg %p82
        $region18: #{model_embeddings_forward.1} parent=11 // pred_check_branch
          %170 = sbr.rel (%p168) target = $region20
        $region19: #{model_embeddings_forward.1} parent=11 // pred_region
          _
        $region20: #{model_embeddings_forward.1} parent=11 // pred_fallthru
          _
        // Predicated region
        $region21: #{model_embeddings_forward.1} parent=11 // pred_check
          %p171 = pneg %p103
        $region22: #{model_embeddings_forward.1} parent=11 // pred_check_branch
          %173 = sbr.rel (%p171) target = $region24
        $region23: #{model_embeddings_forward.1} parent=11 // pred_region
          _
        $region24: #{model_embeddings_forward.1} parent=11 // pred_fallthru
          _
        // Predicated region
        $region25: #{model_embeddings_forward.1} parent=11 // pred_check
          %p174 = pneg %p124
        $region26: #{model_embeddings_forward.1} parent=11 // pred_check_branch
          %176 = sbr.rel (%p174) target = $region28
        $region27: #{model_embeddings_forward.1} parent=11 // pred_region
          _
        $region28: #{model_embeddings_forward.1} parent=11 // pred_fallthru
          _
      $region12: #{model_embeddings_forward.1} parent=5 // pred_fallthru
        _
      %p177 = scmp.lt.s32.totalorder %s14, 8
      // Predicated region
      $region29: #{model_embeddings_forward.1} parent=5 // pred_check
        %p178 = pneg %p177
      $region30: #{model_embeddings_forward.1} parent=5 // pred_check_branch
        %180 = sbr.rel (%p178) target = $region32
      $region31: #{model_embeddings_forward.1} parent=5 // pred_region
        // Predicated region
        $region33: #{model_embeddings_forward.1} parent=31 // pred_check
          %p181 = pneg %p34
        $region34: #{model_embeddings_forward.1} parent=31 // pred_check_branch
          %183 = sbr.rel (%p181) target = $region36
        $region35: #{model_embeddings_forward.1} parent=31 // pred_region
          %s184 = smul.u32 2, %s14
          %p185 = scmp.lt.s32.totalorder %s184, 15
          %s186 = scalar_select %p185, %s184, 15
          %s187 = smul.addr %s186, 8
          %s188 = scalar_lea.vmem %s0, %s187
          %s189 = smul.u32 2, %s14
        $region36: #{model_embeddings_forward.1} parent=31 // pred_fallthru
          _
      $region32: #{model_embeddings_forward.1} parent=5 // pred_fallthru
        _
      %p190 = scmp.le.s32.totalorder 1, %s14
      %p191 = scmp.lt.s32.totalorder %s14, 9
      %p192 = pnand %p190, %p191
      %p193 = pneg %p192
      // Predicated region
      $region37: #{model_embeddings_forward.1} parent=5 // pred_check
        _
      $region38: #{model_embeddings_forward.1} parent=5 // pred_check_branch
        %195 = sbr.rel (%p192) target = $region40
      $region39: #{model_embeddings_forward.1} parent=5 // pred_region
        %s196 = ssub.s32 %s14, 1
        %s197 = smul.u32 2, %s19
        %p198 = scmp.lt.s32.totalorder %s197, 15
        %s199 = scalar_select %p198, %s197, 15
        %s200 = smul.addr %s199, 8
        %s201 = scalar_lea.vmem %s0, %s200
        %p202 = pneg %p40
        %p203 = pneg %p37
        %p204 = pneg %p61
        %p205 = pneg %p58
        %p206 = pneg %p82
        %p207 = pneg %p79
        %p208 = pneg %p103
        %p209 = pneg %p100
        %p210 = pneg %p124
        %p211 = pneg %p121
        %p212 = pneg %p150
        %p213 = pneg %p147
        %s214 = sand.u32 %s137, 1
        %s215 = scalar_lea.sflag [#allocation3], %s214
        %s216 = sand.u32 %s137, 1
        %s217 = smul.addr %s216, 16
        %s218 = scalar_lea.vmem [#allocation2], %s217
        %s219 = smul.u32 2, %s19
        %p220 = scmp.lt.s32.totalorder %s219, 15
        %s221 = scalar_select %p220, %s219, 15
        %s222 = smul.addr %s221, 8
        %s223 = scalar_lea.vmem %s0, %s222
        %s224 = smul.u32 2, %s19
        %s225 = smul.u32 2, %s19
        %v226 = vld [vmem:[%s223] sm:$0xff]
        %v227 = vld [vmem:[%s223 + $0x8] sm:$0xff]
        %v228 = vlaneseq
        %v229 = vand.u32 %v228, 127
        %v230 = vperm.slane %v226, 0
        %v231 = vlaneseq
        %v232 = vshrl.u32 %v231, 7
        %234 = vset.pattern.permute.xlu0 %v232
        %235 = vperm.xlu0 %234, %v230
        %v236 = vpop.permute.xlu0 %235
        %v237 = vlaneseq
        %v238 = vshrl.u32 %v237, 7
        %v239 = vadd.s32 %v238, 8
        %240 = vset.pattern.permute.xlu0 %v239
        %241 = vperm.xlu0 %240, %v230
        %v242 = vpop.permute.xlu0 %241
        %v243 = vperm.slane %v226, 1
        %v244 = vlaneseq
        %v245 = vshrl.u32 %v244, 7
        %247 = vset.pattern.permute.xlu0 %v245
        %248 = vperm.xlu0 %247, %v243
        %v249 = vpop.permute.xlu0 %248
        %v250 = vlaneseq
        %v251 = vshrl.u32 %v250, 7
        %v252 = vadd.s32 %v251, 8
        %253 = vset.pattern.permute.xlu0 %v252
        %254 = vperm.xlu0 %253, %v243
        %v255 = vpop.permute.xlu0 %254
        %v256 = vperm.slane %v226, 2
        %v257 = vlaneseq
        %v258 = vshrl.u32 %v257, 7
        %260 = vset.pattern.permute.xlu0 %v258
        %261 = vperm.xlu0 %260, %v256
        %v262 = vpop.permute.xlu0 %261
        %v263 = vlaneseq
        %v264 = vshrl.u32 %v263, 7
        %v265 = vadd.s32 %v264, 8
        %266 = vset.pattern.permute.xlu0 %v265
        %267 = vperm.xlu0 %266, %v256
        %v268 = vpop.permute.xlu0 %267
        %v269 = vperm.slane %v226, 3
        %v270 = vlaneseq
        %v271 = vshrl.u32 %v270, 7
        %273 = vset.pattern.permute.xlu0 %v271
        %274 = vperm.xlu0 %273, %v269
        %v275 = vpop.permute.xlu0 %274
        %v276 = vlaneseq
        %v277 = vshrl.u32 %v276, 7
        %v278 = vadd.s32 %v277, 8
        %279 = vset.pattern.permute.xlu0 %v278
        %280 = vperm.xlu0 %279, %v269
        %v281 = vpop.permute.xlu0 %280
        %v282 = vperm.slane %v226, 4
        %v283 = vlaneseq
        %v284 = vshrl.u32 %v283, 7
        %286 = vset.pattern.permute.xlu0 %v284
        %287 = vperm.xlu0 %286, %v282
        %v288 = vpop.permute.xlu0 %287
        %v289 = vlaneseq
        %v290 = vshrl.u32 %v289, 7
        %v291 = vadd.s32 %v290, 8
        %292 = vset.pattern.permute.xlu0 %v291
        %293 = vperm.xlu0 %292, %v282
        %v294 = vpop.permute.xlu0 %293
        %v295 = vperm.slane %v226, 5
        %v296 = vlaneseq
        %v297 = vshrl.u32 %v296, 7
        %299 = vset.pattern.permute.xlu0 %v297
        %300 = vperm.xlu0 %299, %v295
        %v301 = vpop.permute.xlu0 %300
        %v302 = vlaneseq
        %v303 = vshrl.u32 %v302, 7
        %v304 = vadd.s32 %v303, 8
        %305 = vset.pattern.permute.xlu0 %v304
        %306 = vperm.xlu0 %305, %v295
        %v307 = vpop.permute.xlu0 %306
        %v308 = vperm.slane %v226, 6
        %v309 = vlaneseq
        %v310 = vshrl.u32 %v309, 7
        %312 = vset.pattern.permute.xlu0 %v310
        %313 = vperm.xlu0 %312, %v308
        %v314 = vpop.permute.xlu0 %313
        %v315 = vlaneseq
        %v316 = vshrl.u32 %v315, 7
        %v317 = vadd.s32 %v316, 8
        %318 = vset.pattern.permute.xlu0 %v317
        %319 = vperm.xlu0 %318, %v308
        %v320 = vpop.permute.xlu0 %319
        %v321 = vperm.slane %v226, 7
        %v322 = vlaneseq
        %v323 = vshrl.u32 %v322, 7
        %325 = vset.pattern.permute.xlu0 %v323
        %326 = vperm.xlu0 %325, %v321
        %v327 = vpop.permute.xlu0 %326
        %v328 = vlaneseq
        %v329 = vshrl.u32 %v328, 7
        %v330 = vadd.s32 %v329, 8
        %331 = vset.pattern.permute.xlu0 %v330
        %332 = vperm.xlu0 %331, %v321
        %v333 = vpop.permute.xlu0 %332
        %v334 = vperm.slane %v227, 0
        %v335 = vlaneseq
        %v336 = vshrl.u32 %v335, 7
        %338 = vset.pattern.permute.xlu0 %v336
        %339 = vperm.xlu0 %338, %v334
        %v340 = vpop.permute.xlu0 %339
        %v341 = vlaneseq
        %v342 = vshrl.u32 %v341, 7
        %v343 = vadd.s32 %v342, 8
        %344 = vset.pattern.permute.xlu0 %v343
        %345 = vperm.xlu0 %344, %v334
        %v346 = vpop.permute.xlu0 %345
        %v347 = vperm.slane %v227, 1
        %v348 = vlaneseq
        %v349 = vshrl.u32 %v348, 7
        %351 = vset.pattern.permute.xlu0 %v349
        %352 = vperm.xlu0 %351, %v347
        %v353 = vpop.permute.xlu0 %352
        %v354 = vlaneseq
        %v355 = vshrl.u32 %v354, 7
        %v356 = vadd.s32 %v355, 8
        %357 = vset.pattern.permute.xlu0 %v356
        %358 = vperm.xlu0 %357, %v347
        %v359 = vpop.permute.xlu0 %358
        %v360 = vperm.slane %v227, 2
        %v361 = vlaneseq
        %v362 = vshrl.u32 %v361, 7
        %364 = vset.pattern.permute.xlu0 %v362
        %365 = vperm.xlu0 %364, %v360
        %v366 = vpop.permute.xlu0 %365
        %v367 = vlaneseq
        %v368 = vshrl.u32 %v367, 7
        %v369 = vadd.s32 %v368, 8
        %370 = vset.pattern.permute.xlu0 %v369
        %371 = vperm.xlu0 %370, %v360
        %v372 = vpop.permute.xlu0 %371
        %v373 = vperm.slane %v227, 3
        %v374 = vlaneseq
        %v375 = vshrl.u32 %v374, 7
        %377 = vset.pattern.permute.xlu0 %v375
        %378 = vperm.xlu0 %377, %v373
        %v379 = vpop.permute.xlu0 %378
        %v380 = vlaneseq
        %v381 = vshrl.u32 %v380, 7
        %v382 = vadd.s32 %v381, 8
        %383 = vset.pattern.permute.xlu0 %v382
        %384 = vperm.xlu0 %383, %v373
        %v385 = vpop.permute.xlu0 %384
        %v386 = vperm.slane %v227, 4
        %v387 = vlaneseq
        %v388 = vshrl.u32 %v387, 7
        %390 = vset.pattern.permute.xlu0 %v388
        %391 = vperm.xlu0 %390, %v386
        %v392 = vpop.permute.xlu0 %391
        %v393 = vlaneseq
        %v394 = vshrl.u32 %v393, 7
        %v395 = vadd.s32 %v394, 8
        %396 = vset.pattern.permute.xlu0 %v395
        %397 = vperm.xlu0 %396, %v386
        %v398 = vpop.permute.xlu0 %397
        %v399 = vperm.slane %v227, 5
        %v400 = vlaneseq
        %v401 = vshrl.u32 %v400, 7
        %403 = vset.pattern.permute.xlu0 %v401
        %404 = vperm.xlu0 %403, %v399
        %v405 = vpop.permute.xlu0 %404
        %v406 = vlaneseq
        %v407 = vshrl.u32 %v406, 7
        %v408 = vadd.s32 %v407, 8
        %409 = vset.pattern.permute.xlu0 %v408
        %410 = vperm.xlu0 %409, %v399
        %v411 = vpop.permute.xlu0 %410
        %v412 = vperm.slane %v227, 6
        %v413 = vlaneseq
        %v414 = vshrl.u32 %v413, 7
        %416 = vset.pattern.permute.xlu0 %v414
        %417 = vperm.xlu0 %416, %v412
        %v418 = vpop.permute.xlu0 %417
        %v419 = vlaneseq
        %v420 = vshrl.u32 %v419, 7
        %v421 = vadd.s32 %v420, 8
        %422 = vset.pattern.permute.xlu0 %v421
        %423 = vperm.xlu0 %422, %v412
        %v424 = vpop.permute.xlu0 %423
        %v425 = vperm.slane %v227, 7
        %v426 = vlaneseq
        %v427 = vshrl.u32 %v426, 7
        %429 = vset.pattern.permute.xlu0 %v427
        %430 = vperm.xlu0 %429, %v425
        %v431 = vpop.permute.xlu0 %430
        %v432 = vlaneseq
        %v433 = vshrl.u32 %v432, 7
        %v434 = vadd.s32 %v433, 8
        %435 = vset.pattern.permute.xlu0 %v434
        %436 = vperm.xlu0 %435, %v425
        %v437 = vpop.permute.xlu0 %436
        %vm438 = vcmp.eq.s32.totalorder %v236, %v229
        %vm439 = vcmp.eq.s32.totalorder %v242, %v229
        %vm440 = vcmp.eq.s32.totalorder %v249, %v229
        %vm441 = vcmp.eq.s32.totalorder %v255, %v229
        %vm442 = vcmp.eq.s32.totalorder %v262, %v229
        %vm443 = vcmp.eq.s32.totalorder %v268, %v229
        %vm444 = vcmp.eq.s32.totalorder %v275, %v229
        %vm445 = vcmp.eq.s32.totalorder %v281, %v229
        %vm446 = vcmp.eq.s32.totalorder %v288, %v229
        %vm447 = vcmp.eq.s32.totalorder %v294, %v229
        %vm448 = vcmp.eq.s32.totalorder %v301, %v229
        %vm449 = vcmp.eq.s32.totalorder %v307, %v229
        %vm450 = vcmp.eq.s32.totalorder %v314, %v229
        %vm451 = vcmp.eq.s32.totalorder %v320, %v229
        %vm452 = vcmp.eq.s32.totalorder %v327, %v229
        %vm453 = vcmp.eq.s32.totalorder %v333, %v229
        %vm454 = vcmp.eq.s32.totalorder %v340, %v229
        %vm455 = vcmp.eq.s32.totalorder %v346, %v229
        %vm456 = vcmp.eq.s32.totalorder %v353, %v229
        %vm457 = vcmp.eq.s32.totalorder %v359, %v229
        %vm458 = vcmp.eq.s32.totalorder %v366, %v229
        %vm459 = vcmp.eq.s32.totalorder %v372, %v229
        %vm460 = vcmp.eq.s32.totalorder %v379, %v229
        %vm461 = vcmp.eq.s32.totalorder %v385, %v229
        %vm462 = vcmp.eq.s32.totalorder %v392, %v229
        %vm463 = vcmp.eq.s32.totalorder %v398, %v229
        %vm464 = vcmp.eq.s32.totalorder %v405, %v229
        %vm465 = vcmp.eq.s32.totalorder %v411, %v229
        %vm466 = vcmp.eq.s32.totalorder %v418, %v229
        %vm467 = vcmp.eq.s32.totalorder %v424, %v229
        %vm468 = vcmp.eq.s32.totalorder %v431, %v229
        %vm469 = vcmp.eq.s32.totalorder %v437, %v229
        %v470 = vsel %vm438, 1, 0
        %v471 = vsel %vm439, 1, 0
        %v472 = vsel %vm440, 1, 0
        %v473 = vsel %vm441, 1, 0
        %v474 = vsel %vm442, 1, 0
        %v475 = vsel %vm443, 1, 0
        %v476 = vsel %vm444, 1, 0
        %v477 = vsel %vm445, 1, 0
        %v478 = vsel %vm446, 1, 0
        %v479 = vsel %vm447, 1, 0
        %v480 = vsel %vm448, 1, 0
        %v481 = vsel %vm449, 1, 0
        %v482 = vsel %vm450, 1, 0
        %v483 = vsel %vm451, 1, 0
        %v484 = vsel %vm452, 1, 0
        %v485 = vsel %vm453, 1, 0
        %v486 = vsel %vm454, 1, 0
        %v487 = vsel %vm455, 1, 0
        %v488 = vsel %vm456, 1, 0
        %v489 = vsel %vm457, 1, 0
        %v490 = vsel %vm458, 1, 0
        %v491 = vsel %vm459, 1, 0
        %v492 = vsel %vm460, 1, 0
        %v493 = vsel %vm461, 1, 0
        %v494 = vsel %vm462, 1, 0
        %v495 = vsel %vm463, 1, 0
        %v496 = vsel %vm464, 1, 0
        %v497 = vsel %vm465, 1, 0
        %v498 = vsel %vm466, 1, 0
        %v499 = vsel %vm467, 1, 0
        %v500 = vsel %vm468, 1, 0
        %v501 = vsel %vm469, 1, 0
        %v502 = vcvt.s32.f32 %v470
        %v503 = vcvt.s32.f32 %v471
        %v504 = vcvt.s32.f32 %v472
        %v505 = vcvt.s32.f32 %v473
        %v506 = vcvt.s32.f32 %v474
        %v507 = vcvt.s32.f32 %v475
        %v508 = vcvt.s32.f32 %v476
        %v509 = vcvt.s32.f32 %v477
        %v510 = vcvt.s32.f32 %v478
        %v511 = vcvt.s32.f32 %v479
        %v512 = vcvt.s32.f32 %v480
        %v513 = vcvt.s32.f32 %v481
        %v514 = vcvt.s32.f32 %v482
        %v515 = vcvt.s32.f32 %v483
        %v516 = vcvt.s32.f32 %v484
        %v517 = vcvt.s32.f32 %v485
        %v518 = vcvt.s32.f32 %v486
        %v519 = vcvt.s32.f32 %v487
        %v520 = vcvt.s32.f32 %v488
        %v521 = vcvt.s32.f32 %v489
        %v522 = vcvt.s32.f32 %v490
        %v523 = vcvt.s32.f32 %v491
        %v524 = vcvt.s32.f32 %v492
        %v525 = vcvt.s32.f32 %v493
        %v526 = vcvt.s32.f32 %v494
        %v527 = vcvt.s32.f32 %v495
        %v528 = vcvt.s32.f32 %v496
        %v529 = vcvt.s32.f32 %v497
        %v530 = vcvt.s32.f32 %v498
        %v531 = vcvt.s32.f32 %v499
        %v532 = vcvt.s32.f32 %v500
        %v533 = vcvt.s32.f32 %v501
        %v534 = vpack.c.bf16 %v502, %v502
        %v535 = vpack.c.bf16 %v503, %v503
        %v536 = vpack.c.bf16 %v504, %v504
        %v537 = vpack.c.bf16 %v505, %v505
        %v538 = vpack.c.bf16 %v506, %v506
        %v539 = vpack.c.bf16 %v507, %v507
        %v540 = vpack.c.bf16 %v508, %v508
        %v541 = vpack.c.bf16 %v509, %v509
        %v542 = vpack.c.bf16 %v510, %v510
        %v543 = vpack.c.bf16 %v511, %v511
        %v544 = vpack.c.bf16 %v512, %v512
        %v545 = vpack.c.bf16 %v513, %v513
        %v546 = vpack.c.bf16 %v514, %v514
        %v547 = vpack.c.bf16 %v515, %v515
        %v548 = vpack.c.bf16 %v516, %v516
        %v549 = vpack.c.bf16 %v517, %v517
        %v550 = vpack.c.bf16 %v518, %v518
        %v551 = vpack.c.bf16 %v519, %v519
        %v552 = vpack.c.bf16 %v520, %v520
        %v553 = vpack.c.bf16 %v521, %v521
        %v554 = vpack.c.bf16 %v522, %v522
        %v555 = vpack.c.bf16 %v523, %v523
        %v556 = vpack.c.bf16 %v524, %v524
        %v557 = vpack.c.bf16 %v525, %v525
        %v558 = vpack.c.bf16 %v526, %v526
        %v559 = vpack.c.bf16 %v527, %v527
        %v560 = vpack.c.bf16 %v528, %v528
        %v561 = vpack.c.bf16 %v529, %v529
        %v562 = vpack.c.bf16 %v530, %v530
        %v563 = vpack.c.bf16 %v531, %v531
        %v564 = vpack.c.bf16 %v532, %v532
        %v565 = vpack.c.bf16 %v533, %v533
        %v566 = vlaneseq
        %v567 = vshrl.u32 %v566, 7
        %v568 = vadd.s32 %v567, 1
        %569 = vset.pattern.permute.xlu0 %v568
        %570 = vperm.xlu0 %569, %v230
        %v571 = vpop.permute.xlu0 %570
        %v572 = vlaneseq
        %v573 = vshrl.u32 %v572, 7
        %v574 = vadd.s32 %v573, 9
        %575 = vset.pattern.permute.xlu0 %v574
        %576 = vperm.xlu0 %575, %v230
        %v577 = vpop.permute.xlu0 %576
        %v578 = vlaneseq
        %v579 = vshrl.u32 %v578, 7
        %v580 = vadd.s32 %v579, 1
        %581 = vset.pattern.permute.xlu0 %v580
        %582 = vperm.xlu0 %581, %v243
        %v583 = vpop.permute.xlu0 %582
        %v584 = vlaneseq
        %v585 = vshrl.u32 %v584, 7
        %v586 = vadd.s32 %v585, 9
        %587 = vset.pattern.permute.xlu0 %v586
        %588 = vperm.xlu0 %587, %v243
        %v589 = vpop.permute.xlu0 %588
        %v590 = vlaneseq
        %v591 = vshrl.u32 %v590, 7
        %v592 = vadd.s32 %v591, 1
        %593 = vset.pattern.permute.xlu0 %v592
        %594 = vperm.xlu0 %593, %v256
        %v595 = vpop.permute.xlu0 %594
        %v596 = vlaneseq
        %v597 = vshrl.u32 %v596, 7
        %v598 = vadd.s32 %v597, 9
        %599 = vset.pattern.permute.xlu0 %v598
        %600 = vperm.xlu0 %599, %v256
        %v601 = vpop.permute.xlu0 %600
        %v602 = vlaneseq
        %v603 = vshrl.u32 %v602, 7
        %v604 = vadd.s32 %v603, 1
        %605 = vset.pattern.permute.xlu0 %v604
        %606 = vperm.xlu0 %605, %v269
        %v607 = vpop.permute.xlu0 %606
        %v608 = vlaneseq
        %v609 = vshrl.u32 %v608, 7
        %v610 = vadd.s32 %v609, 9
        %611 = vset.pattern.permute.xlu0 %v610
        %612 = vperm.xlu0 %611, %v269
        %v613 = vpop.permute.xlu0 %612
        %v614 = vlaneseq
        %v615 = vshrl.u32 %v614, 7
        %v616 = vadd.s32 %v615, 1
        %617 = vset.pattern.permute.xlu0 %v616
        %618 = vperm.xlu0 %617, %v282
        %v619 = vpop.permute.xlu0 %618
        %v620 = vlaneseq
        %v621 = vshrl.u32 %v620, 7
        %v622 = vadd.s32 %v621, 9
        %623 = vset.pattern.permute.xlu0 %v622
        %624 = vperm.xlu0 %623, %v282
        %v625 = vpop.permute.xlu0 %624
        %v626 = vlaneseq
        %v627 = vshrl.u32 %v626, 7
        %v628 = vadd.s32 %v627, 1
        %629 = vset.pattern.permute.xlu0 %v628
        %630 = vperm.xlu0 %629, %v295
        %v631 = vpop.permute.xlu0 %630
        %v632 = vlaneseq
        %v633 = vshrl.u32 %v632, 7
        %v634 = vadd.s32 %v633, 9
        %635 = vset.pattern.permute.xlu0 %v634
        %636 = vperm.xlu0 %635, %v295
        %v637 = vpop.permute.xlu0 %636
        %v638 = vlaneseq
        %v639 = vshrl.u32 %v638, 7
        %v640 = vadd.s32 %v639, 1
        %641 = vset.pattern.permute.xlu0 %v640
        %642 = vperm.xlu0 %641, %v308
        %v643 = vpop.permute.xlu0 %642
        %v644 = vlaneseq
        %v645 = vshrl.u32 %v644, 7
        %v646 = vadd.s32 %v645, 9
        %647 = vset.pattern.permute.xlu0 %v646
        %648 = vperm.xlu0 %647, %v308
        %v649 = vpop.permute.xlu0 %648
        %v650 = vlaneseq
        %v651 = vshrl.u32 %v650, 7
        %v652 = vadd.s32 %v651, 1
        %653 = vset.pattern.permute.xlu0 %v652
        %654 = vperm.xlu0 %653, %v321
        %v655 = vpop.permute.xlu0 %654
        %v656 = vlaneseq
        %v657 = vshrl.u32 %v656, 7
        %v658 = vadd.s32 %v657, 9
        %659 = vset.pattern.permute.xlu0 %v658
        %660 = vperm.xlu0 %659, %v321
        %v661 = vpop.permute.xlu0 %660
        %v662 = vlaneseq
        %v663 = vshrl.u32 %v662, 7
        %v664 = vadd.s32 %v663, 1
        %665 = vset.pattern.permute.xlu0 %v664
        %666 = vperm.xlu0 %665, %v334
        %v667 = vpop.permute.xlu0 %666
        %v668 = vlaneseq
        %v669 = vshrl.u32 %v668, 7
        %v670 = vadd.s32 %v669, 9
        %671 = vset.pattern.permute.xlu0 %v670
        %672 = vperm.xlu0 %671, %v334
        %v673 = vpop.permute.xlu0 %672
        %v674 = vlaneseq
        %v675 = vshrl.u32 %v674, 7
        %v676 = vadd.s32 %v675, 1
        %677 = vset.pattern.permute.xlu0 %v676
        %678 = vperm.xlu0 %677, %v347
        %v679 = vpop.permute.xlu0 %678
        %v680 = vlaneseq
        %v681 = vshrl.u32 %v680, 7
        %v682 = vadd.s32 %v681, 9
        %683 = vset.pattern.permute.xlu0 %v682
        %684 = vperm.xlu0 %683, %v347
        %v685 = vpop.permute.xlu0 %684
        %v686 = vlaneseq
        %v687 = vshrl.u32 %v686, 7
        %v688 = vadd.s32 %v687, 1
        %689 = vset.pattern.permute.xlu0 %v688
        %690 = vperm.xlu0 %689, %v360
        %v691 = vpop.permute.xlu0 %690
        %v692 = vlaneseq
        %v693 = vshrl.u32 %v692, 7
        %v694 = vadd.s32 %v693, 9
        %695 = vset.pattern.permute.xlu0 %v694
        %696 = vperm.xlu0 %695, %v360
        %v697 = vpop.permute.xlu0 %696
        %v698 = vlaneseq
        %v699 = vshrl.u32 %v698, 7
        %v700 = vadd.s32 %v699, 1
        %701 = vset.pattern.permute.xlu0 %v700
        %702 = vperm.xlu0 %701, %v373
        %v703 = vpop.permute.xlu0 %702
        %v704 = vlaneseq
        %v705 = vshrl.u32 %v704, 7
        %v706 = vadd.s32 %v705, 9
        %707 = vset.pattern.permute.xlu0 %v706
        %708 = vperm.xlu0 %707, %v373
        %v709 = vpop.permute.xlu0 %708
        %v710 = vlaneseq
        %v711 = vshrl.u32 %v710, 7
        %v712 = vadd.s32 %v711, 1
        %713 = vset.pattern.permute.xlu0 %v712
        %714 = vperm.xlu0 %713, %v386
        %v715 = vpop.permute.xlu0 %714
        %v716 = vlaneseq
        %v717 = vshrl.u32 %v716, 7
        %v718 = vadd.s32 %v717, 9
        %719 = vset.pattern.permute.xlu0 %v718
        %720 = vperm.xlu0 %719, %v386
        %v721 = vpop.permute.xlu0 %720
        %v722 = vlaneseq
        %v723 = vshrl.u32 %v722, 7
        %v724 = vadd.s32 %v723, 1
        %725 = vset.pattern.permute.xlu0 %v724
        %726 = vperm.xlu0 %725, %v399
        %v727 = vpop.permute.xlu0 %726
        %v728 = vlaneseq
        %v729 = vshrl.u32 %v728, 7
        %v730 = vadd.s32 %v729, 9
        %731 = vset.pattern.permute.xlu0 %v730
        %732 = vperm.xlu0 %731, %v399
        %v733 = vpop.permute.xlu0 %732
        %v734 = vlaneseq
        %v735 = vshrl.u32 %v734, 7
        %v736 = vadd.s32 %v735, 1
        %737 = vset.pattern.permute.xlu0 %v736
        %738 = vperm.xlu0 %737, %v412
        %v739 = vpop.permute.xlu0 %738
        %v740 = vlaneseq
        %v741 = vshrl.u32 %v740, 7
        %v742 = vadd.s32 %v741, 9
        %743 = vset.pattern.permute.xlu0 %v742
        %744 = vperm.xlu0 %743, %v412
        %v745 = vpop.permute.xlu0 %744
        %v746 = vlaneseq
        %v747 = vshrl.u32 %v746, 7
        %v748 = vadd.s32 %v747, 1
        %749 = vset.pattern.permute.xlu0 %v748
        %750 = vperm.xlu0 %749, %v425
        %v751 = vpop.permute.xlu0 %750
        %v752 = vlaneseq
        %v753 = vshrl.u32 %v752, 7
        %v754 = vadd.s32 %v753, 9
        %755 = vset.pattern.permute.xlu0 %v754
        %756 = vperm.xlu0 %755, %v425
        %v757 = vpop.permute.xlu0 %756
        %vm758 = vcmp.eq.s32.totalorder %v571, %v229
        %vm759 = vcmp.eq.s32.totalorder %v577, %v229
        %vm760 = vcmp.eq.s32.totalorder %v583, %v229
        %vm761 = vcmp.eq.s32.totalorder %v589, %v229
        %vm762 = vcmp.eq.s32.totalorder %v595, %v229
        %vm763 = vcmp.eq.s32.totalorder %v601, %v229
        %vm764 = vcmp.eq.s32.totalorder %v607, %v229
        %vm765 = vcmp.eq.s32.totalorder %v613, %v229
        %vm766 = vcmp.eq.s32.totalorder %v619, %v229
        %vm767 = vcmp.eq.s32.totalorder %v625, %v229
        %vm768 = vcmp.eq.s32.totalorder %v631, %v229
        %vm769 = vcmp.eq.s32.totalorder %v637, %v229
        %vm770 = vcmp.eq.s32.totalorder %v643, %v229
        %vm771 = vcmp.eq.s32.totalorder %v649, %v229
        %vm772 = vcmp.eq.s32.totalorder %v655, %v229
        %vm773 = vcmp.eq.s32.totalorder %v661, %v229
        %vm774 = vcmp.eq.s32.totalorder %v667, %v229
        %vm775 = vcmp.eq.s32.totalorder %v673, %v229
        %vm776 = vcmp.eq.s32.totalorder %v679, %v229
        %vm777 = vcmp.eq.s32.totalorder %v685, %v229
        %vm778 = vcmp.eq.s32.totalorder %v691, %v229
        %vm779 = vcmp.eq.s32.totalorder %v697, %v229
        %vm780 = vcmp.eq.s32.totalorder %v703, %v229
        %vm781 = vcmp.eq.s32.totalorder %v709, %v229
        %vm782 = vcmp.eq.s32.totalorder %v715, %v229
        %vm783 = vcmp.eq.s32.totalorder %v721, %v229
        %vm784 = vcmp.eq.s32.totalorder %v727, %v229
        %vm785 = vcmp.eq.s32.totalorder %v733, %v229
        %vm786 = vcmp.eq.s32.totalorder %v739, %v229
        %vm787 = vcmp.eq.s32.totalorder %v745, %v229
        %vm788 = vcmp.eq.s32.totalorder %v751, %v229
        %vm789 = vcmp.eq.s32.totalorder %v757, %v229
        %v790 = vsel %vm758, 1, 0
        %v791 = vsel %vm759, 1, 0
        %v792 = vsel %vm760, 1, 0
        %v793 = vsel %vm761, 1, 0
        %v794 = vsel %vm762, 1, 0
        %v795 = vsel %vm763, 1, 0
        %v796 = vsel %vm764, 1, 0
        %v797 = vsel %vm765, 1, 0
        %v798 = vsel %vm766, 1, 0
        %v799 = vsel %vm767, 1, 0
        %v800 = vsel %vm768, 1, 0
        %v801 = vsel %vm769, 1, 0
        %v802 = vsel %vm770, 1, 0
        %v803 = vsel %vm771, 1, 0
        %v804 = vsel %vm772, 1, 0
        %v805 = vsel %vm773, 1, 0
        %v806 = vsel %vm774, 1, 0
        %v807 = vsel %vm775, 1, 0
        %v808 = vsel %vm776, 1, 0
        %v809 = vsel %vm777, 1, 0
        %v810 = vsel %vm778, 1, 0
        %v811 = vsel %vm779, 1, 0
        %v812 = vsel %vm780, 1, 0
        %v813 = vsel %vm781, 1, 0
        %v814 = vsel %vm782, 1, 0
        %v815 = vsel %vm783, 1, 0
        %v816 = vsel %vm784, 1, 0
        %v817 = vsel %vm785, 1, 0
        %v818 = vsel %vm786, 1, 0
        %v819 = vsel %vm787, 1, 0
        %v820 = vsel %vm788, 1, 0
        %v821 = vsel %vm789, 1, 0
        %v822 = vcvt.s32.f32 %v790
        %v823 = vcvt.s32.f32 %v791
        %v824 = vcvt.s32.f32 %v792
        %v825 = vcvt.s32.f32 %v793
        %v826 = vcvt.s32.f32 %v794
        %v827 = vcvt.s32.f32 %v795
        %v828 = vcvt.s32.f32 %v796
        %v829 = vcvt.s32.f32 %v797
        %v830 = vcvt.s32.f32 %v798
        %v831 = vcvt.s32.f32 %v799
        %v832 = vcvt.s32.f32 %v800
        %v833 = vcvt.s32.f32 %v801
        %v834 = vcvt.s32.f32 %v802
        %v835 = vcvt.s32.f32 %v803
        %v836 = vcvt.s32.f32 %v804
        %v837 = vcvt.s32.f32 %v805
        %v838 = vcvt.s32.f32 %v806
        %v839 = vcvt.s32.f32 %v807
        %v840 = vcvt.s32.f32 %v808
        %v841 = vcvt.s32.f32 %v809
        %v842 = vcvt.s32.f32 %v810
        %v843 = vcvt.s32.f32 %v811
        %v844 = vcvt.s32.f32 %v812
        %v845 = vcvt.s32.f32 %v813
        %v846 = vcvt.s32.f32 %v814
        %v847 = vcvt.s32.f32 %v815
        %v848 = vcvt.s32.f32 %v816
        %v849 = vcvt.s32.f32 %v817
        %v850 = vcvt.s32.f32 %v818
        %v851 = vcvt.s32.f32 %v819
        %v852 = vcvt.s32.f32 %v820
        %v853 = vcvt.s32.f32 %v821
        %v854 = vpack.c.bf16 %v822, %v822
        %v855 = vpack.c.bf16 %v823, %v823
        %v856 = vpack.c.bf16 %v824, %v824
        %v857 = vpack.c.bf16 %v825, %v825
        %v858 = vpack.c.bf16 %v826, %v826
        %v859 = vpack.c.bf16 %v827, %v827
        %v860 = vpack.c.bf16 %v828, %v828
        %v861 = vpack.c.bf16 %v829, %v829
        %v862 = vpack.c.bf16 %v830, %v830
        %v863 = vpack.c.bf16 %v831, %v831
        %v864 = vpack.c.bf16 %v832, %v832
        %v865 = vpack.c.bf16 %v833, %v833
        %v866 = vpack.c.bf16 %v834, %v834
        %v867 = vpack.c.bf16 %v835, %v835
        %v868 = vpack.c.bf16 %v836, %v836
        %v869 = vpack.c.bf16 %v837, %v837
        %v870 = vpack.c.bf16 %v838, %v838
        %v871 = vpack.c.bf16 %v839, %v839
        %v872 = vpack.c.bf16 %v840, %v840
        %v873 = vpack.c.bf16 %v841, %v841
        %v874 = vpack.c.bf16 %v842, %v842
        %v875 = vpack.c.bf16 %v843, %v843
        %v876 = vpack.c.bf16 %v844, %v844
        %v877 = vpack.c.bf16 %v845, %v845
        %v878 = vpack.c.bf16 %v846, %v846
        %v879 = vpack.c.bf16 %v847, %v847
        %v880 = vpack.c.bf16 %v848, %v848
        %v881 = vpack.c.bf16 %v849, %v849
        %v882 = vpack.c.bf16 %v850, %v850
        %v883 = vpack.c.bf16 %v851, %v851
        %v884 = vpack.c.bf16 %v852, %v852
        %v885 = vpack.c.bf16 %v853, %v853
        %v886 = vlaneseq
        %v887 = vshrl.u32 %v886, 7
        %v888 = vadd.s32 %v887, 2
        %889 = vset.pattern.permute.xlu0 %v888
        %890 = vperm.xlu0 %889, %v230
        %v891 = vpop.permute.xlu0 %890
        %v892 = vlaneseq
        %v893 = vshrl.u32 %v892, 7
        %v894 = vadd.s32 %v893, 10
        %895 = vset.pattern.permute.xlu0 %v894
        %896 = vperm.xlu0 %895, %v230
        %v897 = vpop.permute.xlu0 %896
        %v898 = vlaneseq
        %v899 = vshrl.u32 %v898, 7
        %v900 = vadd.s32 %v899, 2
        %901 = vset.pattern.permute.xlu0 %v900
        %902 = vperm.xlu0 %901, %v243
        %v903 = vpop.permute.xlu0 %902
        %v904 = vlaneseq
        %v905 = vshrl.u32 %v904, 7
        %v906 = vadd.s32 %v905, 10
        %907 = vset.pattern.permute.xlu0 %v906
        %908 = vperm.xlu0 %907, %v243
        %v909 = vpop.permute.xlu0 %908
        %v910 = vlaneseq
        %v911 = vshrl.u32 %v910, 7
        %v912 = vadd.s32 %v911, 2
        %913 = vset.pattern.permute.xlu0 %v912
        %914 = vperm.xlu0 %913, %v256
        %v915 = vpop.permute.xlu0 %914
        %v916 = vlaneseq
        %v917 = vshrl.u32 %v916, 7
        %v918 = vadd.s32 %v917, 10
        %919 = vset.pattern.permute.xlu0 %v918
        %920 = vperm.xlu0 %919, %v256
        %v921 = vpop.permute.xlu0 %920
        %v922 = vlaneseq
        %v923 = vshrl.u32 %v922, 7
        %v924 = vadd.s32 %v923, 2
        %925 = vset.pattern.permute.xlu0 %v924
        %926 = vperm.xlu0 %925, %v269
        %v927 = vpop.permute.xlu0 %926
        %v928 = vlaneseq
        %v929 = vshrl.u32 %v928, 7
        %v930 = vadd.s32 %v929, 10
        %931 = vset.pattern.permute.xlu0 %v930
        %932 = vperm.xlu0 %931, %v269
        %v933 = vpop.permute.xlu0 %932
        %v934 = vlaneseq
        %v935 = vshrl.u32 %v934, 7
        %v936 = vadd.s32 %v935, 2
        %937 = vset.pattern.permute.xlu0 %v936
        %938 = vperm.xlu0 %937, %v282
        %v939 = vpop.permute.xlu0 %938
        %v940 = vlaneseq
        %v941 = vshrl.u32 %v940, 7
        %v942 = vadd.s32 %v941, 10
        %943 = vset.pattern.permute.xlu0 %v942
        %944 = vperm.xlu0 %943, %v282
        %v945 = vpop.permute.xlu0 %944
        %v946 = vlaneseq
        %v947 = vshrl.u32 %v946, 7
        %v948 = vadd.s32 %v947, 2
        %949 = vset.pattern.permute.xlu0 %v948
        %950 = vperm.xlu0 %949, %v295
        %v951 = vpop.permute.xlu0 %950
        %v952 = vlaneseq
        %v953 = vshrl.u32 %v952, 7
        %v954 = vadd.s32 %v953, 10
        %955 = vset.pattern.permute.xlu0 %v954
        %956 = vperm.xlu0 %955, %v295
        %v957 = vpop.permute.xlu0 %956
        %v958 = vlaneseq
        %v959 = vshrl.u32 %v958, 7
        %v960 = vadd.s32 %v959, 2
        %961 = vset.pattern.permute.xlu0 %v960
        %962 = vperm.xlu0 %961, %v308
        %v963 = vpop.permute.xlu0 %962
        %v964 = vlaneseq
        %v965 = vshrl.u32 %v964, 7
        %v966 = vadd.s32 %v965, 10
        %967 = vset.pattern.permute.xlu0 %v966
        %968 = vperm.xlu0 %967, %v308
        %v969 = vpop.permute.xlu0 %968
        %v970 = vlaneseq
        %v971 = vshrl.u32 %v970, 7
        %v972 = vadd.s32 %v971, 2
        %973 = vset.pattern.permute.xlu0 %v972
        %974 = vperm.xlu0 %973, %v321
        %v975 = vpop.permute.xlu0 %974
        %v976 = vlaneseq
        %v977 = vshrl.u32 %v976, 7
        %v978 = vadd.s32 %v977, 10
        %979 = vset.pattern.permute.xlu0 %v978
        %980 = vperm.xlu0 %979, %v321
        %v981 = vpop.permute.xlu0 %980
        %v982 = vlaneseq
        %v983 = vshrl.u32 %v982, 7
        %v984 = vadd.s32 %v983, 2
        %985 = vset.pattern.permute.xlu0 %v984
        %986 = vperm.xlu0 %985, %v334
        %v987 = vpop.permute.xlu0 %986
        %v988 = vlaneseq
        %v989 = vshrl.u32 %v988, 7
        %v990 = vadd.s32 %v989, 10
        %991 = vset.pattern.permute.xlu0 %v990
        %992 = vperm.xlu0 %991, %v334
        %v993 = vpop.permute.xlu0 %992
        %v994 = vlaneseq
        %v995 = vshrl.u32 %v994, 7
        %v996 = vadd.s32 %v995, 2
        %997 = vset.pattern.permute.xlu0 %v996
        %998 = vperm.xlu0 %997, %v347
        %v999 = vpop.permute.xlu0 %998
        %v1000 = vlaneseq
        %v1001 = vshrl.u32 %v1000, 7
        %v1002 = vadd.s32 %v1001, 10
        %1003 = vset.pattern.permute.xlu0 %v1002
        %1004 = vperm.xlu0 %1003, %v347
        %v1005 = vpop.permute.xlu0 %1004
        %v1006 = vlaneseq
        %v1007 = vshrl.u32 %v1006, 7
        %v1008 = vadd.s32 %v1007, 2
        %1009 = vset.pattern.permute.xlu0 %v1008
        %1010 = vperm.xlu0 %1009, %v360
        %v1011 = vpop.permute.xlu0 %1010
        %v1012 = vlaneseq
        %v1013 = vshrl.u32 %v1012, 7
        %v1014 = vadd.s32 %v1013, 10
        %1015 = vset.pattern.permute.xlu0 %v1014
        %1016 = vperm.xlu0 %1015, %v360
        %v1017 = vpop.permute.xlu0 %1016
        %v1018 = vlaneseq
        %v1019 = vshrl.u32 %v1018, 7
        %v1020 = vadd.s32 %v1019, 2
        %1021 = vset.pattern.permute.xlu0 %v1020
        %1022 = vperm.xlu0 %1021, %v373
        %v1023 = vpop.permute.xlu0 %1022
        %v1024 = vlaneseq
        %v1025 = vshrl.u32 %v1024, 7
        %v1026 = vadd.s32 %v1025, 10
        %1027 = vset.pattern.permute.xlu0 %v1026
        %1028 = vperm.xlu0 %1027, %v373
        %v1029 = vpop.permute.xlu0 %1028
        %v1030 = vlaneseq
        %v1031 = vshrl.u32 %v1030, 7
        %v1032 = vadd.s32 %v1031, 2
        %1033 = vset.pattern.permute.xlu0 %v1032
        %1034 = vperm.xlu0 %1033, %v386
        %v1035 = vpop.permute.xlu0 %1034
        %v1036 = vlaneseq
        %v1037 = vshrl.u32 %v1036, 7
        %v1038 = vadd.s32 %v1037, 10
        %1039 = vset.pattern.permute.xlu0 %v1038
        %1040 = vperm.xlu0 %1039, %v386
        %v1041 = vpop.permute.xlu0 %1040
        %v1042 = vlaneseq
        %v1043 = vshrl.u32 %v1042, 7
        %v1044 = vadd.s32 %v1043, 2
        %1045 = vset.pattern.permute.xlu0 %v1044
        %1046 = vperm.xlu0 %1045, %v399
        %v1047 = vpop.permute.xlu0 %1046
        %v1048 = vlaneseq
        %v1049 = vshrl.u32 %v1048, 7
        %v1050 = vadd.s32 %v1049, 10
        %1051 = vset.pattern.permute.xlu0 %v1050
        %1052 = vperm.xlu0 %1051, %v399
        %v1053 = vpop.permute.xlu0 %1052
        %v1054 = vlaneseq
        %v1055 = vshrl.u32 %v1054, 7
        %v1056 = vadd.s32 %v1055, 2
        %1057 = vset.pattern.permute.xlu0 %v1056
        %1058 = vperm.xlu0 %1057, %v412
        %v1059 = vpop.permute.xlu0 %1058
        %v1060 = vlaneseq
        %v1061 = vshrl.u32 %v1060, 7
        %v1062 = vadd.s32 %v1061, 10
        %1063 = vset.pattern.permute.xlu0 %v1062
        %1064 = vperm.xlu0 %1063, %v412
        %v1065 = vpop.permute.xlu0 %1064
        %v1066 = vlaneseq
        %v1067 = vshrl.u32 %v1066, 7
        %v1068 = vadd.s32 %v1067, 2
        %1069 = vset.pattern.permute.xlu0 %v1068
        %1070 = vperm.xlu0 %1069, %v425
        %v1071 = vpop.permute.xlu0 %1070
        %v1072 = vlaneseq
        %v1073 = vshrl.u32 %v1072, 7
        %v1074 = vadd.s32 %v1073, 10
        %1075 = vset.pattern.permute.xlu0 %v1074
        %1076 = vperm.xlu0 %1075, %v425
        %v1077 = vpop.permute.xlu0 %1076
        %vm1078 = vcmp.eq.s32.totalorder %v891, %v229
        %vm1079 = vcmp.eq.s32.totalorder %v897, %v229
        %vm1080 = vcmp.eq.s32.totalorder %v903, %v229
        %vm1081 = vcmp.eq.s32.totalorder %v909, %v229
        %vm1082 = vcmp.eq.s32.totalorder %v915, %v229
        %vm1083 = vcmp.eq.s32.totalorder %v921, %v229
        %vm1084 = vcmp.eq.s32.totalorder %v927, %v229
        %vm1085 = vcmp.eq.s32.totalorder %v933, %v229
        %vm1086 = vcmp.eq.s32.totalorder %v939, %v229
        %vm1087 = vcmp.eq.s32.totalorder %v945, %v229
        %vm1088 = vcmp.eq.s32.totalorder %v951, %v229
        %vm1089 = vcmp.eq.s32.totalorder %v957, %v229
        %vm1090 = vcmp.eq.s32.totalorder %v963, %v229
        %vm1091 = vcmp.eq.s32.totalorder %v969, %v229
        %vm1092 = vcmp.eq.s32.totalorder %v975, %v229
        %vm1093 = vcmp.eq.s32.totalorder %v981, %v229
        %vm1094 = vcmp.eq.s32.totalorder %v987, %v229
        %vm1095 = vcmp.eq.s32.totalorder %v993, %v229
        %vm1096 = vcmp.eq.s32.totalorder %v999, %v229
        %vm1097 = vcmp.eq.s32.totalorder %v1005, %v229
        %vm1098 = vcmp.eq.s32.totalorder %v1011, %v229
        %vm1099 = vcmp.eq.s32.totalorder %v1017, %v229
        %vm1100 = vcmp.eq.s32.totalorder %v1023, %v229
        %vm1101 = vcmp.eq.s32.totalorder %v1029, %v229
        %vm1102 = vcmp.eq.s32.totalorder %v1035, %v229
        %vm1103 = vcmp.eq.s32.totalorder %v1041, %v229
        %vm1104 = vcmp.eq.s32.totalorder %v1047, %v229
        %vm1105 = vcmp.eq.s32.totalorder %v1053, %v229
        %vm1106 = vcmp.eq.s32.totalorder %v1059, %v229
        %vm1107 = vcmp.eq.s32.totalorder %v1065, %v229
        %vm1108 = vcmp.eq.s32.totalorder %v1071, %v229
        %vm1109 = vcmp.eq.s32.totalorder %v1077, %v229
        %v1110 = vsel %vm1078, 1, 0
        %v1111 = vsel %vm1079, 1, 0
        %v1112 = vsel %vm1080, 1, 0
        %v1113 = vsel %vm1081, 1, 0
        %v1114 = vsel %vm1082, 1, 0
        %v1115 = vsel %vm1083, 1, 0
        %v1116 = vsel %vm1084, 1, 0
        %v1117 = vsel %vm1085, 1, 0
        %v1118 = vsel %vm1086, 1, 0
        %v1119 = vsel %vm1087, 1, 0
        %v1120 = vsel %vm1088, 1, 0
        %v1121 = vsel %vm1089, 1, 0
        %v1122 = vsel %vm1090, 1, 0
        %v1123 = vsel %vm1091, 1, 0
        %v1124 = vsel %vm1092, 1, 0
        %v1125 = vsel %vm1093, 1, 0
        %v1126 = vsel %vm1094, 1, 0
        %v1127 = vsel %vm1095, 1, 0
        %v1128 = vsel %vm1096, 1, 0
        %v1129 = vsel %vm1097, 1, 0
        %v1130 = vsel %vm1098, 1, 0
        %v1131 = vsel %vm1099, 1, 0
        %v1132 = vsel %vm1100, 1, 0
        %v1133 = vsel %vm1101, 1, 0
        %v1134 = vsel %vm1102, 1, 0
        %v1135 = vsel %vm1103, 1, 0
        %v1136 = vsel %vm1104, 1, 0
        %v1137 = vsel %vm1105, 1, 0
        %v1138 = vsel %vm1106, 1, 0
        %v1139 = vsel %vm1107, 1, 0
        %v1140 = vsel %vm1108, 1, 0
        %v1141 = vsel %vm1109, 1, 0
        %v1142 = vcvt.s32.f32 %v1110
        %v1143 = vcvt.s32.f32 %v1111
        %v1144 = vcvt.s32.f32 %v1112
        %v1145 = vcvt.s32.f32 %v1113
        %v1146 = vcvt.s32.f32 %v1114
        %v1147 = vcvt.s32.f32 %v1115
        %v1148 = vcvt.s32.f32 %v1116
        %v1149 = vcvt.s32.f32 %v1117
        %v1150 = vcvt.s32.f32 %v1118
        %v1151 = vcvt.s32.f32 %v1119
        %v1152 = vcvt.s32.f32 %v1120
        %v1153 = vcvt.s32.f32 %v1121
        %v1154 = vcvt.s32.f32 %v1122
        %v1155 = vcvt.s32.f32 %v1123
        %v1156 = vcvt.s32.f32 %v1124
        %v1157 = vcvt.s32.f32 %v1125
        %v1158 = vcvt.s32.f32 %v1126
        %v1159 = vcvt.s32.f32 %v1127
        %v1160 = vcvt.s32.f32 %v1128
        %v1161 = vcvt.s32.f32 %v1129
        %v1162 = vcvt.s32.f32 %v1130
        %v1163 = vcvt.s32.f32 %v1131
        %v1164 = vcvt.s32.f32 %v1132
        %v1165 = vcvt.s32.f32 %v1133
        %v1166 = vcvt.s32.f32 %v1134
        %v1167 = vcvt.s32.f32 %v1135
        %v1168 = vcvt.s32.f32 %v1136
        %v1169 = vcvt.s32.f32 %v1137
        %v1170 = vcvt.s32.f32 %v1138
        %v1171 = vcvt.s32.f32 %v1139
        %v1172 = vcvt.s32.f32 %v1140
        %v1173 = vcvt.s32.f32 %v1141
        %v1174 = vpack.c.bf16 %v1142, %v1142
        %v1175 = vpack.c.bf16 %v1143, %v1143
        %v1176 = vpack.c.bf16 %v1144, %v1144
        %v1177 = vpack.c.bf16 %v1145, %v1145
        %v1178 = vpack.c.bf16 %v1146, %v1146
        %v1179 = vpack.c.bf16 %v1147, %v1147
        %v1180 = vpack.c.bf16 %v1148, %v1148
        %v1181 = vpack.c.bf16 %v1149, %v1149
        %v1182 = vpack.c.bf16 %v1150, %v1150
        %v1183 = vpack.c.bf16 %v1151, %v1151
        %v1184 = vpack.c.bf16 %v1152, %v1152
        %v1185 = vpack.c.bf16 %v1153, %v1153
        %v1186 = vpack.c.bf16 %v1154, %v1154
        %v1187 = vpack.c.bf16 %v1155, %v1155
        %v1188 = vpack.c.bf16 %v1156, %v1156
        %v1189 = vpack.c.bf16 %v1157, %v1157
        %v1190 = vpack.c.bf16 %v1158, %v1158
        %v1191 = vpack.c.bf16 %v1159, %v1159
        %v1192 = vpack.c.bf16 %v1160, %v1160
        %v1193 = vpack.c.bf16 %v1161, %v1161
        %v1194 = vpack.c.bf16 %v1162, %v1162
        %v1195 = vpack.c.bf16 %v1163, %v1163
        %v1196 = vpack.c.bf16 %v1164, %v1164
        %v1197 = vpack.c.bf16 %v1165, %v1165
        %v1198 = vpack.c.bf16 %v1166, %v1166
        %v1199 = vpack.c.bf16 %v1167, %v1167
        %v1200 = vpack.c.bf16 %v1168, %v1168
        %v1201 = vpack.c.bf16 %v1169, %v1169
        %v1202 = vpack.c.bf16 %v1170, %v1170
        %v1203 = vpack.c.bf16 %v1171, %v1171
        %v1204 = vpack.c.bf16 %v1172, %v1172
        %v1205 = vpack.c.bf16 %v1173, %v1173
        %v1206 = vlaneseq
        %v1207 = vshrl.u32 %v1206, 7
        %v1208 = vadd.s32 %v1207, 3
        %1209 = vset.pattern.permute.xlu0 %v1208
        %1210 = vperm.xlu0 %1209, %v230
        %v1211 = vpop.permute.xlu0 %1210
        %v1212 = vlaneseq
        %v1213 = vshrl.u32 %v1212, 7
        %v1214 = vadd.s32 %v1213, 11
        %1215 = vset.pattern.permute.xlu0 %v1214
        %1216 = vperm.xlu0 %1215, %v230
        %v1217 = vpop.permute.xlu0 %1216
        %v1218 = vlaneseq
        %v1219 = vshrl.u32 %v1218, 7
        %v1220 = vadd.s32 %v1219, 3
        %1221 = vset.pattern.permute.xlu0 %v1220
        %1222 = vperm.xlu0 %1221, %v243
        %v1223 = vpop.permute.xlu0 %1222
        %v1224 = vlaneseq
        %v1225 = vshrl.u32 %v1224, 7
        %v1226 = vadd.s32 %v1225, 11
        %1227 = vset.pattern.permute.xlu0 %v1226
        %1228 = vperm.xlu0 %1227, %v243
        %v1229 = vpop.permute.xlu0 %1228
        %v1230 = vlaneseq
        %v1231 = vshrl.u32 %v1230, 7
        %v1232 = vadd.s32 %v1231, 3
        %1233 = vset.pattern.permute.xlu0 %v1232
        %1234 = vperm.xlu0 %1233, %v256
        %v1235 = vpop.permute.xlu0 %1234
        %v1236 = vlaneseq
        %v1237 = vshrl.u32 %v1236, 7
        %v1238 = vadd.s32 %v1237, 11
        %1239 = vset.pattern.permute.xlu0 %v1238
        %1240 = vperm.xlu0 %1239, %v256
        %v1241 = vpop.permute.xlu0 %1240
        %v1242 = vlaneseq
        %v1243 = vshrl.u32 %v1242, 7
        %v1244 = vadd.s32 %v1243, 3
        %1245 = vset.pattern.permute.xlu0 %v1244
        %1246 = vperm.xlu0 %1245, %v269
        %v1247 = vpop.permute.xlu0 %1246
        %v1248 = vlaneseq
        %v1249 = vshrl.u32 %v1248, 7
        %v1250 = vadd.s32 %v1249, 11
        %1251 = vset.pattern.permute.xlu0 %v1250
        %1252 = vperm.xlu0 %1251, %v269
        %v1253 = vpop.permute.xlu0 %1252
        %v1254 = vlaneseq
        %v1255 = vshrl.u32 %v1254, 7
        %v1256 = vadd.s32 %v1255, 3
        %1257 = vset.pattern.permute.xlu0 %v1256
        %1258 = vperm.xlu0 %1257, %v282
        %v1259 = vpop.permute.xlu0 %1258
        %v1260 = vlaneseq
        %v1261 = vshrl.u32 %v1260, 7
        %v1262 = vadd.s32 %v1261, 11
        %1263 = vset.pattern.permute.xlu0 %v1262
        %1264 = vperm.xlu0 %1263, %v282
        %v1265 = vpop.permute.xlu0 %1264
        %v1266 = vlaneseq
        %v1267 = vshrl.u32 %v1266, 7
        %v1268 = vadd.s32 %v1267, 3
        %1269 = vset.pattern.permute.xlu0 %v1268
        %1270 = vperm.xlu0 %1269, %v295
        %v1271 = vpop.permute.xlu0 %1270
        %v1272 = vlaneseq
        %v1273 = vshrl.u32 %v1272, 7
        %v1274 = vadd.s32 %v1273, 11
        %1275 = vset.pattern.permute.xlu0 %v1274
        %1276 = vperm.xlu0 %1275, %v295
        %v1277 = vpop.permute.xlu0 %1276
        %v1278 = vlaneseq
        %v1279 = vshrl.u32 %v1278, 7
        %v1280 = vadd.s32 %v1279, 3
        %1281 = vset.pattern.permute.xlu0 %v1280
        %1282 = vperm.xlu0 %1281, %v308
        %v1283 = vpop.permute.xlu0 %1282
        %v1284 = vlaneseq
        %v1285 = vshrl.u32 %v1284, 7
        %v1286 = vadd.s32 %v1285, 11
        %1287 = vset.pattern.permute.xlu0 %v1286
        %1288 = vperm.xlu0 %1287, %v308
        %v1289 = vpop.permute.xlu0 %1288
        %v1290 = vlaneseq
        %v1291 = vshrl.u32 %v1290, 7
        %v1292 = vadd.s32 %v1291, 3
        %1293 = vset.pattern.permute.xlu0 %v1292
        %1294 = vperm.xlu0 %1293, %v321
        %v1295 = vpop.permute.xlu0 %1294
        %v1296 = vlaneseq
        %v1297 = vshrl.u32 %v1296, 7
        %v1298 = vadd.s32 %v1297, 11
        %1299 = vset.pattern.permute.xlu0 %v1298
        %1300 = vperm.xlu0 %1299, %v321
        %v1301 = vpop.permute.xlu0 %1300
        %v1302 = vlaneseq
        %v1303 = vshrl.u32 %v1302, 7
        %v1304 = vadd.s32 %v1303, 3
        %1305 = vset.pattern.permute.xlu0 %v1304
        %1306 = vperm.xlu0 %1305, %v334
        %v1307 = vpop.permute.xlu0 %1306
        %v1308 = vlaneseq
        %v1309 = vshrl.u32 %v1308, 7
        %v1310 = vadd.s32 %v1309, 11
        %1311 = vset.pattern.permute.xlu0 %v1310
        %1312 = vperm.xlu0 %1311, %v334
        %v1313 = vpop.permute.xlu0 %1312
        %v1314 = vlaneseq
        %v1315 = vshrl.u32 %v1314, 7
        %v1316 = vadd.s32 %v1315, 3
        %1317 = vset.pattern.permute.xlu0 %v1316
        %1318 = vperm.xlu0 %1317, %v347
        %v1319 = vpop.permute.xlu0 %1318
        %v1320 = vlaneseq
        %v1321 = vshrl.u32 %v1320, 7
        %v1322 = vadd.s32 %v1321, 11
        %1323 = vset.pattern.permute.xlu0 %v1322
        %1324 = vperm.xlu0 %1323, %v347
        %v1325 = vpop.permute.xlu0 %1324
        %v1326 = vlaneseq
        %v1327 = vshrl.u32 %v1326, 7
        %v1328 = vadd.s32 %v1327, 3
        %1329 = vset.pattern.permute.xlu0 %v1328
        %1330 = vperm.xlu0 %1329, %v360
        %v1331 = vpop.permute.xlu0 %1330
        %v1332 = vlaneseq
        %v1333 = vshrl.u32 %v1332, 7
        %v1334 = vadd.s32 %v1333, 11
        %1335 = vset.pattern.permute.xlu0 %v1334
        %1336 = vperm.xlu0 %1335, %v360
        %v1337 = vpop.permute.xlu0 %1336
        %v1338 = vlaneseq
        %v1339 = vshrl.u32 %v1338, 7
        %v1340 = vadd.s32 %v1339, 3
        %1341 = vset.pattern.permute.xlu0 %v1340
        %1342 = vperm.xlu0 %1341, %v373
        %v1343 = vpop.permute.xlu0 %1342
        %v1344 = vlaneseq
        %v1345 = vshrl.u32 %v1344, 7
        %v1346 = vadd.s32 %v1345, 11
        %1347 = vset.pattern.permute.xlu0 %v1346
        %1348 = vperm.xlu0 %1347, %v373
        %v1349 = vpop.permute.xlu0 %1348
        %v1350 = vlaneseq
        %v1351 = vshrl.u32 %v1350, 7
        %v1352 = vadd.s32 %v1351, 3
        %1353 = vset.pattern.permute.xlu0 %v1352
        %1354 = vperm.xlu0 %1353, %v386
        %v1355 = vpop.permute.xlu0 %1354
        %v1356 = vlaneseq
        %v1357 = vshrl.u32 %v1356, 7
        %v1358 = vadd.s32 %v1357, 11
        %1359 = vset.pattern.permute.xlu0 %v1358
        %1360 = vperm.xlu0 %1359, %v386
        %v1361 = vpop.permute.xlu0 %1360
        %v1362 = vlaneseq
        %v1363 = vshrl.u32 %v1362, 7
        %v1364 = vadd.s32 %v1363, 3
        %1365 = vset.pattern.permute.xlu0 %v1364
        %1366 = vperm.xlu0 %1365, %v399
        %v1367 = vpop.permute.xlu0 %1366
        %v1368 = vlaneseq
        %v1369 = vshrl.u32 %v1368, 7
        %v1370 = vadd.s32 %v1369, 11
        %1371 = vset.pattern.permute.xlu0 %v1370
        %1372 = vperm.xlu0 %1371, %v399
        %v1373 = vpop.permute.xlu0 %1372
        %v1374 = vlaneseq
        %v1375 = vshrl.u32 %v1374, 7
        %v1376 = vadd.s32 %v1375, 3
        %1377 = vset.pattern.permute.xlu0 %v1376
        %1378 = vperm.xlu0 %1377, %v412
        %v1379 = vpop.permute.xlu0 %1378
        %v1380 = vlaneseq
        %v1381 = vshrl.u32 %v1380, 7
        %v1382 = vadd.s32 %v1381, 11
        %1383 = vset.pattern.permute.xlu0 %v1382
        %1384 = vperm.xlu0 %1383, %v412
        %v1385 = vpop.permute.xlu0 %1384
        %v1386 = vlaneseq
        %v1387 = vshrl.u32 %v1386, 7
        %v1388 = vadd.s32 %v1387, 3
        %1389 = vset.pattern.permute.xlu0 %v1388
        %1390 = vperm.xlu0 %1389, %v425
        %v1391 = vpop.permute.xlu0 %1390
        %v1392 = vlaneseq
        %v1393 = vshrl.u32 %v1392, 7
        %v1394 = vadd.s32 %v1393, 11
        %1395 = vset.pattern.permute.xlu0 %v1394
        %1396 = vperm.xlu0 %1395, %v425
        %v1397 = vpop.permute.xlu0 %1396
        %vm1398 = vcmp.eq.s32.totalorder %v1211, %v229
        %vm1399 = vcmp.eq.s32.totalorder %v1217, %v229
        %vm1400 = vcmp.eq.s32.totalorder %v1223, %v229
        %vm1401 = vcmp.eq.s32.totalorder %v1229, %v229
        %vm1402 = vcmp.eq.s32.totalorder %v1235, %v229
        %vm1403 = vcmp.eq.s32.totalorder %v1241, %v229
        %vm1404 = vcmp.eq.s32.totalorder %v1247, %v229
        %vm1405 = vcmp.eq.s32.totalorder %v1253, %v229
        %vm1406 = vcmp.eq.s32.totalorder %v1259, %v229
        %vm1407 = vcmp.eq.s32.totalorder %v1265, %v229
        %vm1408 = vcmp.eq.s32.totalorder %v1271, %v229
        %vm1409 = vcmp.eq.s32.totalorder %v1277, %v229
        %vm1410 = vcmp.eq.s32.totalorder %v1283, %v229
        %vm1411 = vcmp.eq.s32.totalorder %v1289, %v229
        %vm1412 = vcmp.eq.s32.totalorder %v1295, %v229
        %vm1413 = vcmp.eq.s32.totalorder %v1301, %v229
        %vm1414 = vcmp.eq.s32.totalorder %v1307, %v229
        %vm1415 = vcmp.eq.s32.totalorder %v1313, %v229
        %vm1416 = vcmp.eq.s32.totalorder %v1319, %v229
        %vm1417 = vcmp.eq.s32.totalorder %v1325, %v229
        %vm1418 = vcmp.eq.s32.totalorder %v1331, %v229
        %vm1419 = vcmp.eq.s32.totalorder %v1337, %v229
        %vm1420 = vcmp.eq.s32.totalorder %v1343, %v229
        %vm1421 = vcmp.eq.s32.totalorder %v1349, %v229
        %vm1422 = vcmp.eq.s32.totalorder %v1355, %v229
        %vm1423 = vcmp.eq.s32.totalorder %v1361, %v229
        %vm1424 = vcmp.eq.s32.totalorder %v1367, %v229
        %vm1425 = vcmp.eq.s32.totalorder %v1373, %v229
        %vm1426 = vcmp.eq.s32.totalorder %v1379, %v229
        %vm1427 = vcmp.eq.s32.totalorder %v1385, %v229
        %vm1428 = vcmp.eq.s32.totalorder %v1391, %v229
        %vm1429 = vcmp.eq.s32.totalorder %v1397, %v229
        %v1430 = vsel %vm1398, 1, 0
        %v1431 = vsel %vm1399, 1, 0
        %v1432 = vsel %vm1400, 1, 0
        %v1433 = vsel %vm1401, 1, 0
        %v1434 = vsel %vm1402, 1, 0
        %v1435 = vsel %vm1403, 1, 0
        %v1436 = vsel %vm1404, 1, 0
        %v1437 = vsel %vm1405, 1, 0
        %v1438 = vsel %vm1406, 1, 0
        %v1439 = vsel %vm1407, 1, 0
        %v1440 = vsel %vm1408, 1, 0
        %v1441 = vsel %vm1409, 1, 0
        %v1442 = vsel %vm1410, 1, 0
        %v1443 = vsel %vm1411, 1, 0
        %v1444 = vsel %vm1412, 1, 0
        %v1445 = vsel %vm1413, 1, 0
        %v1446 = vsel %vm1414, 1, 0
        %v1447 = vsel %vm1415, 1, 0
        %v1448 = vsel %vm1416, 1, 0
        %v1449 = vsel %vm1417, 1, 0
        %v1450 = vsel %vm1418, 1, 0
        %v1451 = vsel %vm1419, 1, 0
        %v1452 = vsel %vm1420, 1, 0
        %v1453 = vsel %vm1421, 1, 0
        %v1454 = vsel %vm1422, 1, 0
        %v1455 = vsel %vm1423, 1, 0
        %v1456 = vsel %vm1424, 1, 0
        %v1457 = vsel %vm1425, 1, 0
        %v1458 = vsel %vm1426, 1, 0
        %v1459 = vsel %vm1427, 1, 0
        %v1460 = vsel %vm1428, 1, 0
        %v1461 = vsel %vm1429, 1, 0
        %v1462 = vcvt.s32.f32 %v1430
        %v1463 = vcvt.s32.f32 %v1431
        %v1464 = vcvt.s32.f32 %v1432
        %v1465 = vcvt.s32.f32 %v1433
        %v1466 = vcvt.s32.f32 %v1434
        %v1467 = vcvt.s32.f32 %v1435
        %v1468 = vcvt.s32.f32 %v1436
        %v1469 = vcvt.s32.f32 %v1437
        %v1470 = vcvt.s32.f32 %v1438
        %v1471 = vcvt.s32.f32 %v1439
        %v1472 = vcvt.s32.f32 %v1440
        %v1473 = vcvt.s32.f32 %v1441
        %v1474 = vcvt.s32.f32 %v1442
        %v1475 = vcvt.s32.f32 %v1443
        %v1476 = vcvt.s32.f32 %v1444
        %v1477 = vcvt.s32.f32 %v1445
        %v1478 = vcvt.s32.f32 %v1446
        %v1479 = vcvt.s32.f32 %v1447
        %v1480 = vcvt.s32.f32 %v1448
        %v1481 = vcvt.s32.f32 %v1449
        %v1482 = vcvt.s32.f32 %v1450
        %v1483 = vcvt.s32.f32 %v1451
        %v1484 = vcvt.s32.f32 %v1452
        %v1485 = vcvt.s32.f32 %v1453
        %v1486 = vcvt.s32.f32 %v1454
        %v1487 = vcvt.s32.f32 %v1455
        %v1488 = vcvt.s32.f32 %v1456
        %v1489 = vcvt.s32.f32 %v1457
        %v1490 = vcvt.s32.f32 %v1458
        %v1491 = vcvt.s32.f32 %v1459
        %v1492 = vcvt.s32.f32 %v1460
        %v1493 = vcvt.s32.f32 %v1461
        %v1494 = vpack.c.bf16 %v1462, %v1462
        %v1495 = vpack.c.bf16 %v1463, %v1463
        %v1496 = vpack.c.bf16 %v1464, %v1464
        %v1497 = vpack.c.bf16 %v1465, %v1465
        %v1498 = vpack.c.bf16 %v1466, %v1466
        %v1499 = vpack.c.bf16 %v1467, %v1467
        %v1500 = vpack.c.bf16 %v1468, %v1468
        %v1501 = vpack.c.bf16 %v1469, %v1469
        %v1502 = vpack.c.bf16 %v1470, %v1470
        %v1503 = vpack.c.bf16 %v1471, %v1471
        %v1504 = vpack.c.bf16 %v1472, %v1472
        %v1505 = vpack.c.bf16 %v1473, %v1473
        %v1506 = vpack.c.bf16 %v1474, %v1474
        %v1507 = vpack.c.bf16 %v1475, %v1475
        %v1508 = vpack.c.bf16 %v1476, %v1476
        %v1509 = vpack.c.bf16 %v1477, %v1477
        %v1510 = vpack.c.bf16 %v1478, %v1478
        %v1511 = vpack.c.bf16 %v1479, %v1479
        %v1512 = vpack.c.bf16 %v1480, %v1480
        %v1513 = vpack.c.bf16 %v1481, %v1481
        %v1514 = vpack.c.bf16 %v1482, %v1482
        %v1515 = vpack.c.bf16 %v1483, %v1483
        %v1516 = vpack.c.bf16 %v1484, %v1484
        %v1517 = vpack.c.bf16 %v1485, %v1485
        %v1518 = vpack.c.bf16 %v1486, %v1486
        %v1519 = vpack.c.bf16 %v1487, %v1487
        %v1520 = vpack.c.bf16 %v1488, %v1488
        %v1521 = vpack.c.bf16 %v1489, %v1489
        %v1522 = vpack.c.bf16 %v1490, %v1490
        %v1523 = vpack.c.bf16 %v1491, %v1491
        %v1524 = vpack.c.bf16 %v1492, %v1492
        %v1525 = vpack.c.bf16 %v1493, %v1493
        %v1526 = vlaneseq
        %v1527 = vshrl.u32 %v1526, 7
        %v1528 = vadd.s32 %v1527, 4
        %1529 = vset.pattern.permute.xlu0 %v1528
        %1530 = vperm.xlu0 %1529, %v230
        %v1531 = vpop.permute.xlu0 %1530
        %v1532 = vlaneseq
        %v1533 = vshrl.u32 %v1532, 7
        %v1534 = vadd.s32 %v1533, 12
        %1535 = vset.pattern.permute.xlu0 %v1534
        %1536 = vperm.xlu0 %1535, %v230
        %v1537 = vpop.permute.xlu0 %1536
        %v1538 = vlaneseq
        %v1539 = vshrl.u32 %v1538, 7
        %v1540 = vadd.s32 %v1539, 4
        %1541 = vset.pattern.permute.xlu0 %v1540
        %1542 = vperm.xlu0 %1541, %v243
        %v1543 = vpop.permute.xlu0 %1542
        %v1544 = vlaneseq
        %v1545 = vshrl.u32 %v1544, 7
        %v1546 = vadd.s32 %v1545, 12
        %1547 = vset.pattern.permute.xlu0 %v1546
        %1548 = vperm.xlu0 %1547, %v243
        %v1549 = vpop.permute.xlu0 %1548
        %v1550 = vlaneseq
        %v1551 = vshrl.u32 %v1550, 7
        %v1552 = vadd.s32 %v1551, 4
        %1553 = vset.pattern.permute.xlu0 %v1552
        %1554 = vperm.xlu0 %1553, %v256
        %v1555 = vpop.permute.xlu0 %1554
        %v1556 = vlaneseq
        %v1557 = vshrl.u32 %v1556, 7
        %v1558 = vadd.s32 %v1557, 12
        %1559 = vset.pattern.permute.xlu0 %v1558
        %1560 = vperm.xlu0 %1559, %v256
        %v1561 = vpop.permute.xlu0 %1560
        %v1562 = vlaneseq
        %v1563 = vshrl.u32 %v1562, 7
        %v1564 = vadd.s32 %v1563, 4
        %1565 = vset.pattern.permute.xlu0 %v1564
        %1566 = vperm.xlu0 %1565, %v269
        %v1567 = vpop.permute.xlu0 %1566
        %v1568 = vlaneseq
        %v1569 = vshrl.u32 %v1568, 7
        %v1570 = vadd.s32 %v1569, 12
        %1571 = vset.pattern.permute.xlu0 %v1570
        %1572 = vperm.xlu0 %1571, %v269
        %v1573 = vpop.permute.xlu0 %1572
        %v1574 = vlaneseq
        %v1575 = vshrl.u32 %v1574, 7
        %v1576 = vadd.s32 %v1575, 4
        %1577 = vset.pattern.permute.xlu0 %v1576
        %1578 = vperm.xlu0 %1577, %v282
        %v1579 = vpop.permute.xlu0 %1578
        %v1580 = vlaneseq
        %v1581 = vshrl.u32 %v1580, 7
        %v1582 = vadd.s32 %v1581, 12
        %1583 = vset.pattern.permute.xlu0 %v1582
        %1584 = vperm.xlu0 %1583, %v282
        %v1585 = vpop.permute.xlu0 %1584
        %v1586 = vlaneseq
        %v1587 = vshrl.u32 %v1586, 7
        %v1588 = vadd.s32 %v1587, 4
        %1589 = vset.pattern.permute.xlu0 %v1588
        %1590 = vperm.xlu0 %1589, %v295
        %v1591 = vpop.permute.xlu0 %1590
        %v1592 = vlaneseq
        %v1593 = vshrl.u32 %v1592, 7
        %v1594 = vadd.s32 %v1593, 12
        %1595 = vset.pattern.permute.xlu0 %v1594
        %1596 = vperm.xlu0 %1595, %v295
        %v1597 = vpop.permute.xlu0 %1596
        %v1598 = vlaneseq
        %v1599 = vshrl.u32 %v1598, 7
        %v1600 = vadd.s32 %v1599, 4
        %1601 = vset.pattern.permute.xlu0 %v1600
        %1602 = vperm.xlu0 %1601, %v308
        %v1603 = vpop.permute.xlu0 %1602
        %v1604 = vlaneseq
        %v1605 = vshrl.u32 %v1604, 7
        %v1606 = vadd.s32 %v1605, 12
        %1607 = vset.pattern.permute.xlu0 %v1606
        %1608 = vperm.xlu0 %1607, %v308
        %v1609 = vpop.permute.xlu0 %1608
        %v1610 = vlaneseq
        %v1611 = vshrl.u32 %v1610, 7
        %v1612 = vadd.s32 %v1611, 4
        %1613 = vset.pattern.permute.xlu0 %v1612
        %1614 = vperm.xlu0 %1613, %v321
        %v1615 = vpop.permute.xlu0 %1614
        %v1616 = vlaneseq
        %v1617 = vshrl.u32 %v1616, 7
        %v1618 = vadd.s32 %v1617, 12
        %1619 = vset.pattern.permute.xlu0 %v1618
        %1620 = vperm.xlu0 %1619, %v321
        %v1621 = vpop.permute.xlu0 %1620
        %v1622 = vlaneseq
        %v1623 = vshrl.u32 %v1622, 7
        %v1624 = vadd.s32 %v1623, 4
        %1625 = vset.pattern.permute.xlu0 %v1624
        %1626 = vperm.xlu0 %1625, %v334
        %v1627 = vpop.permute.xlu0 %1626
        %v1628 = vlaneseq
        %v1629 = vshrl.u32 %v1628, 7
        %v1630 = vadd.s32 %v1629, 12
        %1631 = vset.pattern.permute.xlu0 %v1630
        %1632 = vperm.xlu0 %1631, %v334
        %v1633 = vpop.permute.xlu0 %1632
        %v1634 = vlaneseq
        %v1635 = vshrl.u32 %v1634, 7
        %v1636 = vadd.s32 %v1635, 4
        %1637 = vset.pattern.permute.xlu0 %v1636
        %1638 = vperm.xlu0 %1637, %v347
        %v1639 = vpop.permute.xlu0 %1638
        %v1640 = vlaneseq
        %v1641 = vshrl.u32 %v1640, 7
        %v1642 = vadd.s32 %v1641, 12
        %1643 = vset.pattern.permute.xlu0 %v1642
        %1644 = vperm.xlu0 %1643, %v347
        %v1645 = vpop.permute.xlu0 %1644
        %v1646 = vlaneseq
        %v1647 = vshrl.u32 %v1646, 7
        %v1648 = vadd.s32 %v1647, 4
        %1649 = vset.pattern.permute.xlu0 %v1648
        %1650 = vperm.xlu0 %1649, %v360
        %v1651 = vpop.permute.xlu0 %1650
        %v1652 = vlaneseq
        %v1653 = vshrl.u32 %v1652, 7
        %v1654 = vadd.s32 %v1653, 12
        %1655 = vset.pattern.permute.xlu0 %v1654
        %1656 = vperm.xlu0 %1655, %v360
        %v1657 = vpop.permute.xlu0 %1656
        %v1658 = vlaneseq
        %v1659 = vshrl.u32 %v1658, 7
        %v1660 = vadd.s32 %v1659, 4
        %1661 = vset.pattern.permute.xlu0 %v1660
        %1662 = vperm.xlu0 %1661, %v373
        %v1663 = vpop.permute.xlu0 %1662
        %v1664 = vlaneseq
        %v1665 = vshrl.u32 %v1664, 7
        %v1666 = vadd.s32 %v1665, 12
        %1667 = vset.pattern.permute.xlu0 %v1666
        %1668 = vperm.xlu0 %1667, %v373
        %v1669 = vpop.permute.xlu0 %1668
        %v1670 = vlaneseq
        %v1671 = vshrl.u32 %v1670, 7
        %v1672 = vadd.s32 %v1671, 4
        %1673 = vset.pattern.permute.xlu0 %v1672
        %1674 = vperm.xlu0 %1673, %v386
        %v1675 = vpop.permute.xlu0 %1674
        %v1676 = vlaneseq
        %v1677 = vshrl.u32 %v1676, 7
        %v1678 = vadd.s32 %v1677, 12
        %1679 = vset.pattern.permute.xlu0 %v1678
        %1680 = vperm.xlu0 %1679, %v386
        %v1681 = vpop.permute.xlu0 %1680
        %v1682 = vlaneseq
        %v1683 = vshrl.u32 %v1682, 7
        %v1684 = vadd.s32 %v1683, 4
        %1685 = vset.pattern.permute.xlu0 %v1684
        %1686 = vperm.xlu0 %1685, %v399
        %v1687 = vpop.permute.xlu0 %1686
        %v1688 = vlaneseq
        %v1689 = vshrl.u32 %v1688, 7
        %v1690 = vadd.s32 %v1689, 12
        %1691 = vset.pattern.permute.xlu0 %v1690
        %1692 = vperm.xlu0 %1691, %v399
        %v1693 = vpop.permute.xlu0 %1692
        %v1694 = vlaneseq
        %v1695 = vshrl.u32 %v1694, 7
        %v1696 = vadd.s32 %v1695, 4
        %1697 = vset.pattern.permute.xlu0 %v1696
        %1698 = vperm.xlu0 %1697, %v412
        %v1699 = vpop.permute.xlu0 %1698
        %v1700 = vlaneseq
        %v1701 = vshrl.u32 %v1700, 7
        %v1702 = vadd.s32 %v1701, 12
        %1703 = vset.pattern.permute.xlu0 %v1702
        %1704 = vperm.xlu0 %1703, %v412
        %v1705 = vpop.permute.xlu0 %1704
        %v1706 = vlaneseq
        %v1707 = vshrl.u32 %v1706, 7
        %v1708 = vadd.s32 %v1707, 4
        %1709 = vset.pattern.permute.xlu0 %v1708
        %1710 = vperm.xlu0 %1709, %v425
        %v1711 = vpop.permute.xlu0 %1710
        %v1712 = vlaneseq
        %v1713 = vshrl.u32 %v1712, 7
        %v1714 = vadd.s32 %v1713, 12
        %1715 = vset.pattern.permute.xlu0 %v1714
        %1716 = vperm.xlu0 %1715, %v425
        %v1717 = vpop.permute.xlu0 %1716
        %vm1718 = vcmp.eq.s32.totalorder %v1531, %v229
        %vm1719 = vcmp.eq.s32.totalorder %v1537, %v229
        %vm1720 = vcmp.eq.s32.totalorder %v1543, %v229
        %vm1721 = vcmp.eq.s32.totalorder %v1549, %v229
        %vm1722 = vcmp.eq.s32.totalorder %v1555, %v229
        %vm1723 = vcmp.eq.s32.totalorder %v1561, %v229
        %vm1724 = vcmp.eq.s32.totalorder %v1567, %v229
        %vm1725 = vcmp.eq.s32.totalorder %v1573, %v229
        %vm1726 = vcmp.eq.s32.totalorder %v1579, %v229
        %vm1727 = vcmp.eq.s32.totalorder %v1585, %v229
        %vm1728 = vcmp.eq.s32.totalorder %v1591, %v229
        %vm1729 = vcmp.eq.s32.totalorder %v1597, %v229
        %vm1730 = vcmp.eq.s32.totalorder %v1603, %v229
        %vm1731 = vcmp.eq.s32.totalorder %v1609, %v229
        %vm1732 = vcmp.eq.s32.totalorder %v1615, %v229
        %vm1733 = vcmp.eq.s32.totalorder %v1621, %v229
        %vm1734 = vcmp.eq.s32.totalorder %v1627, %v229
        %vm1735 = vcmp.eq.s32.totalorder %v1633, %v229
        %vm1736 = vcmp.eq.s32.totalorder %v1639, %v229
        %vm1737 = vcmp.eq.s32.totalorder %v1645, %v229
        %vm1738 = vcmp.eq.s32.totalorder %v1651, %v229
        %vm1739 = vcmp.eq.s32.totalorder %v1657, %v229
        %vm1740 = vcmp.eq.s32.totalorder %v1663, %v229
        %vm1741 = vcmp.eq.s32.totalorder %v1669, %v229
        %vm1742 = vcmp.eq.s32.totalorder %v1675, %v229
        %vm1743 = vcmp.eq.s32.totalorder %v1681, %v229
        %vm1744 = vcmp.eq.s32.totalorder %v1687, %v229
        %vm1745 = vcmp.eq.s32.totalorder %v1693, %v229
        %vm1746 = vcmp.eq.s32.totalorder %v1699, %v229
        %vm1747 = vcmp.eq.s32.totalorder %v1705, %v229
        %vm1748 = vcmp.eq.s32.totalorder %v1711, %v229
        %vm1749 = vcmp.eq.s32.totalorder %v1717, %v229
        %v1750 = vsel %vm1718, 1, 0
        %v1751 = vsel %vm1719, 1, 0
        %v1752 = vsel %vm1720, 1, 0
        %v1753 = vsel %vm1721, 1, 0
        %v1754 = vsel %vm1722, 1, 0
        %v1755 = vsel %vm1723, 1, 0
        %v1756 = vsel %vm1724, 1, 0
        %v1757 = vsel %vm1725, 1, 0
        %v1758 = vsel %vm1726, 1, 0
        %v1759 = vsel %vm1727, 1, 0
        %v1760 = vsel %vm1728, 1, 0
        %v1761 = vsel %vm1729, 1, 0
        %v1762 = vsel %vm1730, 1, 0
        %v1763 = vsel %vm1731, 1, 0
        %v1764 = vsel %vm1732, 1, 0
        %v1765 = vsel %vm1733, 1, 0
        %v1766 = vsel %vm1734, 1, 0
        %v1767 = vsel %vm1735, 1, 0
        %v1768 = vsel %vm1736, 1, 0
        %v1769 = vsel %vm1737, 1, 0
        %v1770 = vsel %vm1738, 1, 0
        %v1771 = vsel %vm1739, 1, 0
        %v1772 = vsel %vm1740, 1, 0
        %v1773 = vsel %vm1741, 1, 0
        %v1774 = vsel %vm1742, 1, 0
        %v1775 = vsel %vm1743, 1, 0
        %v1776 = vsel %vm1744, 1, 0
        %v1777 = vsel %vm1745, 1, 0
        %v1778 = vsel %vm1746, 1, 0
        %v1779 = vsel %vm1747, 1, 0
        %v1780 = vsel %vm1748, 1, 0
        %v1781 = vsel %vm1749, 1, 0
        %v1782 = vcvt.s32.f32 %v1750
        %v1783 = vcvt.s32.f32 %v1751
        %v1784 = vcvt.s32.f32 %v1752
        %v1785 = vcvt.s32.f32 %v1753
        %v1786 = vcvt.s32.f32 %v1754
        %v1787 = vcvt.s32.f32 %v1755
        %v1788 = vcvt.s32.f32 %v1756
        %v1789 = vcvt.s32.f32 %v1757
        %v1790 = vcvt.s32.f32 %v1758
        %v1791 = vcvt.s32.f32 %v1759
        %v1792 = vcvt.s32.f32 %v1760
        %v1793 = vcvt.s32.f32 %v1761
        %v1794 = vcvt.s32.f32 %v1762
        %v1795 = vcvt.s32.f32 %v1763
        %v1796 = vcvt.s32.f32 %v1764
        %v1797 = vcvt.s32.f32 %v1765
        %v1798 = vcvt.s32.f32 %v1766
        %v1799 = vcvt.s32.f32 %v1767
        %v1800 = vcvt.s32.f32 %v1768
        %v1801 = vcvt.s32.f32 %v1769
        %v1802 = vcvt.s32.f32 %v1770
        %v1803 = vcvt.s32.f32 %v1771
        %v1804 = vcvt.s32.f32 %v1772
        %v1805 = vcvt.s32.f32 %v1773
        %v1806 = vcvt.s32.f32 %v1774
        %v1807 = vcvt.s32.f32 %v1775
        %v1808 = vcvt.s32.f32 %v1776
        %v1809 = vcvt.s32.f32 %v1777
        %v1810 = vcvt.s32.f32 %v1778
        %v1811 = vcvt.s32.f32 %v1779
        %v1812 = vcvt.s32.f32 %v1780
        %v1813 = vcvt.s32.f32 %v1781
        %v1814 = vpack.c.bf16 %v1782, %v1782
        %v1815 = vpack.c.bf16 %v1783, %v1783
        %v1816 = vpack.c.bf16 %v1784, %v1784
        %v1817 = vpack.c.bf16 %v1785, %v1785
        %v1818 = vpack.c.bf16 %v1786, %v1786
        %v1819 = vpack.c.bf16 %v1787, %v1787
        %v1820 = vpack.c.bf16 %v1788, %v1788
        %v1821 = vpack.c.bf16 %v1789, %v1789
        %v1822 = vpack.c.bf16 %v1790, %v1790
        %v1823 = vpack.c.bf16 %v1791, %v1791
        %v1824 = vpack.c.bf16 %v1792, %v1792
        %v1825 = vpack.c.bf16 %v1793, %v1793
        %v1826 = vpack.c.bf16 %v1794, %v1794
        %v1827 = vpack.c.bf16 %v1795, %v1795
        %v1828 = vpack.c.bf16 %v1796, %v1796
        %v1829 = vpack.c.bf16 %v1797, %v1797
        %v1830 = vpack.c.bf16 %v1798, %v1798
        %v1831 = vpack.c.bf16 %v1799, %v1799
        %v1832 = vpack.c.bf16 %v1800, %v1800
        %v1833 = vpack.c.bf16 %v1801, %v1801
        %v1834 = vpack.c.bf16 %v1802, %v1802
        %v1835 = vpack.c.bf16 %v1803, %v1803
        %v1836 = vpack.c.bf16 %v1804, %v1804
        %v1837 = vpack.c.bf16 %v1805, %v1805
        %v1838 = vpack.c.bf16 %v1806, %v1806
        %v1839 = vpack.c.bf16 %v1807, %v1807
        %v1840 = vpack.c.bf16 %v1808, %v1808
        %v1841 = vpack.c.bf16 %v1809, %v1809
        %v1842 = vpack.c.bf16 %v1810, %v1810
        %v1843 = vpack.c.bf16 %v1811, %v1811
        %v1844 = vpack.c.bf16 %v1812, %v1812
        %v1845 = vpack.c.bf16 %v1813, %v1813
        %v1878 = vunpack.c.l.b16 %v534
        %v1879 = vunpack.c.l.b16 %v535
        %v1880 = vunpack.c.l.b16 %v536
        %v1881 = vunpack.c.l.b16 %v537
        %v1882 = vunpack.c.l.b16 %v538
        %v1883 = vunpack.c.l.b16 %v539
        %v1884 = vunpack.c.l.b16 %v540
        %v1885 = vunpack.c.l.b16 %v541
        %v1886 = vunpack.c.l.b16 %v542
        %v1887 = vunpack.c.l.b16 %v543
        %v1888 = vunpack.c.l.b16 %v544
        %v1889 = vunpack.c.l.b16 %v545
        %v1890 = vunpack.c.l.b16 %v546
        %v1891 = vunpack.c.l.b16 %v547
        %v1892 = vunpack.c.l.b16 %v548
        %v1893 = vunpack.c.l.b16 %v549
        %v1894 = vunpack.c.l.b16 %v550
        %v1895 = vunpack.c.l.b16 %v551
        %v1896 = vunpack.c.l.b16 %v552
        %v1897 = vunpack.c.l.b16 %v553
        %v1898 = vunpack.c.l.b16 %v554
        %v1899 = vunpack.c.l.b16 %v555
        %v1900 = vunpack.c.l.b16 %v556
        %v1901 = vunpack.c.l.b16 %v557
        %v1902 = vunpack.c.l.b16 %v558
        %v1903 = vunpack.c.l.b16 %v559
        %v1904 = vunpack.c.l.b16 %v560
        %v1905 = vunpack.c.l.b16 %v561
        %v1906 = vunpack.c.l.b16 %v562
        %v1907 = vunpack.c.l.b16 %v563
        %v1908 = vunpack.c.l.b16 %v564
        %v1909 = vunpack.c.l.b16 %v565
        %v1910 = vpack.c.b16 %v1879, %v1878
        %v1911 = vpack.c.b16 %v1881, %v1880
        %v1912 = vpack.c.b16 %v1883, %v1882
        %v1913 = vpack.c.b16 %v1885, %v1884
        %v1914 = vpack.c.b16 %v1887, %v1886
        %v1915 = vpack.c.b16 %v1889, %v1888
        %v1916 = vpack.c.b16 %v1891, %v1890
        %v1917 = vpack.c.b16 %v1893, %v1892
        %v1918 = vpack.c.b16 %v1895, %v1894
        %v1919 = vpack.c.b16 %v1897, %v1896
        %v1920 = vpack.c.b16 %v1899, %v1898
        %v1921 = vpack.c.b16 %v1901, %v1900
        %v1922 = vpack.c.b16 %v1903, %v1902
        %v1923 = vpack.c.b16 %v1905, %v1904
        %v1924 = vpack.c.b16 %v1907, %v1906
        %v1925 = vpack.c.b16 %v1909, %v1908
        %v1974 = vunpack.c.l.b16 %v854
        %v1975 = vunpack.c.l.b16 %v855
        %v1976 = vunpack.c.l.b16 %v856
        %v1977 = vunpack.c.l.b16 %v857
        %v1978 = vunpack.c.l.b16 %v858
        %v1979 = vunpack.c.l.b16 %v859
        %v1980 = vunpack.c.l.b16 %v860
        %v1981 = vunpack.c.l.b16 %v861
        %v1982 = vunpack.c.l.b16 %v862
        %v1983 = vunpack.c.l.b16 %v863
        %v1984 = vunpack.c.l.b16 %v864
        %v1985 = vunpack.c.l.b16 %v865
        %v1986 = vunpack.c.l.b16 %v866
        %v1987 = vunpack.c.l.b16 %v867
        %v1988 = vunpack.c.l.b16 %v868
        %v1989 = vunpack.c.l.b16 %v869
        %v1990 = vunpack.c.l.b16 %v870
        %v1991 = vunpack.c.l.b16 %v871
        %v1992 = vunpack.c.l.b16 %v872
        %v1993 = vunpack.c.l.b16 %v873
        %v1994 = vunpack.c.l.b16 %v874
        %v1995 = vunpack.c.l.b16 %v875
        %v1996 = vunpack.c.l.b16 %v876
        %v1997 = vunpack.c.l.b16 %v877
        %v1998 = vunpack.c.l.b16 %v878
        %v1999 = vunpack.c.l.b16 %v879
        %v2000 = vunpack.c.l.b16 %v880
        %v2001 = vunpack.c.l.b16 %v881
        %v2002 = vunpack.c.l.b16 %v882
        %v2003 = vunpack.c.l.b16 %v883
        %v2004 = vunpack.c.l.b16 %v884
        %v2005 = vunpack.c.l.b16 %v885
        %v2006 = vpack.c.b16 %v1975, %v1974
        %v2007 = vpack.c.b16 %v1977, %v1976
        %v2008 = vpack.c.b16 %v1979, %v1978
        %v2009 = vpack.c.b16 %v1981, %v1980
        %v2010 = vpack.c.b16 %v1983, %v1982
        %v2011 = vpack.c.b16 %v1985, %v1984
        %v2012 = vpack.c.b16 %v1987, %v1986
        %v2013 = vpack.c.b16 %v1989, %v1988
        %v2014 = vpack.c.b16 %v1991, %v1990
        %v2015 = vpack.c.b16 %v1993, %v1992
        %v2016 = vpack.c.b16 %v1995, %v1994
        %v2017 = vpack.c.b16 %v1997, %v1996
        %v2018 = vpack.c.b16 %v1999, %v1998
        %v2019 = vpack.c.b16 %v2001, %v2000
        %v2020 = vpack.c.b16 %v2003, %v2002
        %v2021 = vpack.c.b16 %v2005, %v2004
        %v2070 = vunpack.c.l.b16 %v1174
        %v2071 = vunpack.c.l.b16 %v1175
        %v2072 = vunpack.c.l.b16 %v1176
        %v2073 = vunpack.c.l.b16 %v1177
        %v2074 = vunpack.c.l.b16 %v1178
        %v2075 = vunpack.c.l.b16 %v1179
        %v2076 = vunpack.c.l.b16 %v1180
        %v2077 = vunpack.c.l.b16 %v1181
        %v2078 = vunpack.c.l.b16 %v1182
        %v2079 = vunpack.c.l.b16 %v1183
        %v2080 = vunpack.c.l.b16 %v1184
        %v2081 = vunpack.c.l.b16 %v1185
        %v2082 = vunpack.c.l.b16 %v1186
        %v2083 = vunpack.c.l.b16 %v1187
        %v2084 = vunpack.c.l.b16 %v1188
        %v2085 = vunpack.c.l.b16 %v1189
        %v2086 = vunpack.c.l.b16 %v1190
        %v2087 = vunpack.c.l.b16 %v1191
        %v2088 = vunpack.c.l.b16 %v1192
        %v2089 = vunpack.c.l.b16 %v1193
        %v2090 = vunpack.c.l.b16 %v1194
        %v2091 = vunpack.c.l.b16 %v1195
        %v2092 = vunpack.c.l.b16 %v1196
        %v2093 = vunpack.c.l.b16 %v1197
        %v2094 = vunpack.c.l.b16 %v1198
        %v2095 = vunpack.c.l.b16 %v1199
        %v2096 = vunpack.c.l.b16 %v1200
        %v2097 = vunpack.c.l.b16 %v1201
        %v2098 = vunpack.c.l.b16 %v1202
        %v2099 = vunpack.c.l.b16 %v1203
        %v2100 = vunpack.c.l.b16 %v1204
        %v2101 = vunpack.c.l.b16 %v1205
        %v2102 = vpack.c.b16 %v2071, %v2070
        %v2103 = vpack.c.b16 %v2073, %v2072
        %v2104 = vpack.c.b16 %v2075, %v2074
        %v2105 = vpack.c.b16 %v2077, %v2076
        %v2106 = vpack.c.b16 %v2079, %v2078
        %v2107 = vpack.c.b16 %v2081, %v2080
        %v2108 = vpack.c.b16 %v2083, %v2082
        %v2109 = vpack.c.b16 %v2085, %v2084
        %v2110 = vpack.c.b16 %v2087, %v2086
        %v2111 = vpack.c.b16 %v2089, %v2088
        %v2112 = vpack.c.b16 %v2091, %v2090
        %v2113 = vpack.c.b16 %v2093, %v2092
        %v2114 = vpack.c.b16 %v2095, %v2094
        %v2115 = vpack.c.b16 %v2097, %v2096
        %v2116 = vpack.c.b16 %v2099, %v2098
        %v2117 = vpack.c.b16 %v2101, %v2100
        %v2166 = vunpack.c.l.b16 %v1494
        %v2167 = vunpack.c.l.b16 %v1495
        %v2168 = vunpack.c.l.b16 %v1496
        %v2169 = vunpack.c.l.b16 %v1497
        %v2170 = vunpack.c.l.b16 %v1498
        %v2171 = vunpack.c.l.b16 %v1499
        %v2172 = vunpack.c.l.b16 %v1500
        %v2173 = vunpack.c.l.b16 %v1501
        %v2174 = vunpack.c.l.b16 %v1502
        %v2175 = vunpack.c.l.b16 %v1503
        %v2176 = vunpack.c.l.b16 %v1504
        %v2177 = vunpack.c.l.b16 %v1505
        %v2178 = vunpack.c.l.b16 %v1506
        %v2179 = vunpack.c.l.b16 %v1507
        %v2180 = vunpack.c.l.b16 %v1508
        %v2181 = vunpack.c.l.b16 %v1509
        %v2182 = vunpack.c.l.b16 %v1510
        %v2183 = vunpack.c.l.b16 %v1511
        %v2184 = vunpack.c.l.b16 %v1512
        %v2185 = vunpack.c.l.b16 %v1513
        %v2186 = vunpack.c.l.b16 %v1514
        %v2187 = vunpack.c.l.b16 %v1515
        %v2188 = vunpack.c.l.b16 %v1516
        %v2189 = vunpack.c.l.b16 %v1517
        %v2190 = vunpack.c.l.b16 %v1518
        %v2191 = vunpack.c.l.b16 %v1519
        %v2192 = vunpack.c.l.b16 %v1520
        %v2193 = vunpack.c.l.b16 %v1521
        %v2194 = vunpack.c.l.b16 %v1522
        %v2195 = vunpack.c.l.b16 %v1523
        %v2196 = vunpack.c.l.b16 %v1524
        %v2197 = vunpack.c.l.b16 %v1525
        %v2198 = vpack.c.b16 %v2167, %v2166
        %v2199 = vpack.c.b16 %v2169, %v2168
        %v2200 = vpack.c.b16 %v2171, %v2170
        %v2201 = vpack.c.b16 %v2173, %v2172
        %v2202 = vpack.c.b16 %v2175, %v2174
        %v2203 = vpack.c.b16 %v2177, %v2176
        %v2204 = vpack.c.b16 %v2179, %v2178
        %v2205 = vpack.c.b16 %v2181, %v2180
        %v2206 = vpack.c.b16 %v2183, %v2182
        %v2207 = vpack.c.b16 %v2185, %v2184
        %v2208 = vpack.c.b16 %v2187, %v2186
        %v2209 = vpack.c.b16 %v2189, %v2188
        %v2210 = vpack.c.b16 %v2191, %v2190
        %v2211 = vpack.c.b16 %v2193, %v2192
        %v2212 = vpack.c.b16 %v2195, %v2194
        %v2213 = vpack.c.b16 %v2197, %v2196
        %v2262 = vunpack.c.l.b16 %v1814
        %v2263 = vunpack.c.l.b16 %v1815
        %v2264 = vunpack.c.l.b16 %v1816
        %v2265 = vunpack.c.l.b16 %v1817
        %v2266 = vunpack.c.l.b16 %v1818
        %v2267 = vunpack.c.l.b16 %v1819
        %v2268 = vunpack.c.l.b16 %v1820
        %v2269 = vunpack.c.l.b16 %v1821
        %v2270 = vunpack.c.l.b16 %v1822
        %v2271 = vunpack.c.l.b16 %v1823
        %v2272 = vunpack.c.l.b16 %v1824
        %v2273 = vunpack.c.l.b16 %v1825
        %v2274 = vunpack.c.l.b16 %v1826
        %v2275 = vunpack.c.l.b16 %v1827
        %v2276 = vunpack.c.l.b16 %v1828
        %v2277 = vunpack.c.l.b16 %v1829
        %v2278 = vunpack.c.l.b16 %v1830
        %v2279 = vunpack.c.l.b16 %v1831
        %v2280 = vunpack.c.l.b16 %v1832
        %v2281 = vunpack.c.l.b16 %v1833
        %v2282 = vunpack.c.l.b16 %v1834
        %v2283 = vunpack.c.l.b16 %v1835
        %v2284 = vunpack.c.l.b16 %v1836
        %v2285 = vunpack.c.l.b16 %v1837
        %v2286 = vunpack.c.l.b16 %v1838
        %v2287 = vunpack.c.l.b16 %v1839
        %v2288 = vunpack.c.l.b16 %v1840
        %v2289 = vunpack.c.l.b16 %v1841
        %v2290 = vunpack.c.l.b16 %v1842
        %v2291 = vunpack.c.l.b16 %v1843
        %v2292 = vunpack.c.l.b16 %v1844
        %v2293 = vunpack.c.l.b16 %v1845
        %v2294 = vpack.c.b16 %v2263, %v2262
        %v2295 = vpack.c.b16 %v2265, %v2264
        %v2296 = vpack.c.b16 %v2267, %v2266
        %v2297 = vpack.c.b16 %v2269, %v2268
        %v2298 = vpack.c.b16 %v2271, %v2270
        %v2299 = vpack.c.b16 %v2273, %v2272
        %v2300 = vpack.c.b16 %v2275, %v2274
        %v2301 = vpack.c.b16 %v2277, %v2276
        %v2302 = vpack.c.b16 %v2279, %v2278
        %v2303 = vpack.c.b16 %v2281, %v2280
        %v2304 = vpack.c.b16 %v2283, %v2282
        %v2305 = vpack.c.b16 %v2285, %v2284
        %v2306 = vpack.c.b16 %v2287, %v2286
        %v2307 = vpack.c.b16 %v2289, %v2288
        %v2308 = vpack.c.b16 %v2291, %v2290
        %v2309 = vpack.c.b16 %v2293, %v2292
        %v2326 = vld [vmem:[%s1] sm:$0xf]
        %v2327 = vld [vmem:[%s1 + $0x4] sm:$0xf]
        %v2328 = vld [vmem:[%s1 + $0x8] sm:$0xf]
        %v2329 = vld [vmem:[%s1 + $0xc] sm:$0xf]
        %v2330 = vld [vmem:[%s1 + $0x10] sm:$0xf]
        %v2331 = vld [vmem:[%s1 + $0x14] sm:$0xf]
        %v2332 = vld [vmem:[%s1 + $0x18] sm:$0xf]
        %v2333 = vld [vmem:[%s1 + $0x1c] sm:$0xf]
        %v2334 = vld [vmem:[%s1 + $0x20] sm:$0xf]
        %v2335 = vld [vmem:[%s1 + $0x24] sm:$0xf]
        %v2336 = vld [vmem:[%s1 + $0x28] sm:$0xf]
        %v2337 = vld [vmem:[%s1 + $0x2c] sm:$0xf]
        %v2338 = vld [vmem:[%s1 + $0x30] sm:$0xf]
        %v2339 = vld [vmem:[%s1 + $0x34] sm:$0xf]
        %v2340 = vld [vmem:[%s1 + $0x38] sm:$0xf]
        %v2341 = vld [vmem:[%s1 + $0x3c] sm:$0xf]
        %v2342 = vld [vmem:[%s1 + $0x40] sm:$0xf]
        %v2343 = vld [vmem:[%s1 + $0x44] sm:$0xf]
        %v2344 = vld [vmem:[%s1 + $0x48] sm:$0xf]
        %v2345 = vld [vmem:[%s1 + $0x4c] sm:$0xf]
        %v2346 = vld [vmem:[%s1 + $0x50] sm:$0xf]
        %v2347 = vld [vmem:[%s1 + $0x54] sm:$0xf]
        %v2348 = vld [vmem:[%s1 + $0x58] sm:$0xf]
        %v2349 = vld [vmem:[%s1 + $0x5c] sm:$0xf]
        %v2350 = vld [vmem:[%s1 + $0x60] sm:$0xf]
        %v2351 = vld [vmem:[%s1 + $0x64] sm:$0xf]
        %v2352 = vld [vmem:[%s1 + $0x68] sm:$0xf]
        %v2353 = vld [vmem:[%s1 + $0x6c] sm:$0xf]
        %v2354 = vld [vmem:[%s1 + $0x70] sm:$0xf]
        %v2355 = vld [vmem:[%s1 + $0x74] sm:$0xf]
        %v2356 = vld [vmem:[%s1 + $0x78] sm:$0xf]
        %v2357 = vld [vmem:[%s1 + $0x7c] sm:$0xf]
        %v2358 = vld [vmem:[%s1 + $0x80] sm:$0xf]
        %v2359 = vld [vmem:[%s1 + $0x84] sm:$0xf]
        %v2360 = vld [vmem:[%s1 + $0x88] sm:$0xf]
        %v2361 = vld [vmem:[%s1 + $0x8c] sm:$0xf]
        %v2362 = vld [vmem:[%s1 + $0x90] sm:$0xf]
        %v2363 = vld [vmem:[%s1 + $0x94] sm:$0xf]
        %v2364 = vld [vmem:[%s1 + $0x98] sm:$0xf]
        %v2365 = vld [vmem:[%s1 + $0x9c] sm:$0xf]
        %v2366 = vld [vmem:[%s1 + $0xa0] sm:$0xf]
        %v2367 = vld [vmem:[%s1 + $0xa4] sm:$0xf]
        %v2368 = vld [vmem:[%s1 + $0xa8] sm:$0xf]
        %v2369 = vld [vmem:[%s1 + $0xac] sm:$0xf]
        %v2370 = vld [vmem:[%s1 + $0xb0] sm:$0xf]
        %v2371 = vld [vmem:[%s1 + $0xb4] sm:$0xf]
        %v2372 = vld [vmem:[%s1 + $0xb8] sm:$0xf]
        %v2373 = vld [vmem:[%s1 + $0xbc] sm:$0xf]
        %v2374 = vld [vmem:[%s1 + $0xc0] sm:$0xf]
        %v2375 = vld [vmem:[%s1 + $0xc4] sm:$0xf]
        %v2376 = vld [vmem:[%s1 + $0xc8] sm:$0xf]
        %v2377 = vld [vmem:[%s1 + $0xcc] sm:$0xf]
        %v2378 = vld [vmem:[%s1 + $0xd0] sm:$0xf]
        %v2379 = vld [vmem:[%s1 + $0xd4] sm:$0xf]
        %v2380 = vld [vmem:[%s1 + $0xd8] sm:$0xf]
        %v2381 = vld [vmem:[%s1 + $0xdc] sm:$0xf]
        %v2382 = vld [vmem:[%s1 + $0xe0] sm:$0xf]
        %v2383 = vld [vmem:[%s1 + $0xe4] sm:$0xf]
        %v2384 = vld [vmem:[%s1 + $0xe8] sm:$0xf]
        %v2385 = vld [vmem:[%s1 + $0xec] sm:$0xf]
        %v2386 = vld [vmem:[%s1 + $0xf0] sm:$0xf]
        %v2387 = vld [vmem:[%s1 + $0xf4] sm:$0xf]
        %v2388 = vld [vmem:[%s1 + $0xf8] sm:$0xf]
        %v2389 = vld [vmem:[%s1 + $0xfc] sm:$0xf]
        %v2390 = vld [vmem:[%s1 + $0x100] sm:$0xf]
        %v2391 = vld [vmem:[%s1 + $0x104] sm:$0xf]
        %v2392 = vld [vmem:[%s1 + $0x108] sm:$0xf]
        %v2393 = vld [vmem:[%s1 + $0x10c] sm:$0xf]
        %v2394 = vld [vmem:[%s1 + $0x110] sm:$0xf]
        %v2395 = vld [vmem:[%s1 + $0x114] sm:$0xf]
        %v2396 = vld [vmem:[%s1 + $0x118] sm:$0xf]
        %v2397 = vld [vmem:[%s1 + $0x11c] sm:$0xf]
        %v2398 = vld [vmem:[%s1 + $0x120] sm:$0xf]
        %v2399 = vld [vmem:[%s1 + $0x124] sm:$0xf]
        %v2400 = vld [vmem:[%s1 + $0x128] sm:$0xf]
        %v2401 = vld [vmem:[%s1 + $0x12c] sm:$0xf]
        %v2402 = vld [vmem:[%s1 + $0x130] sm:$0xf]
        %v2403 = vld [vmem:[%s1 + $0x134] sm:$0xf]
        %v2404 = vld [vmem:[%s1 + $0x138] sm:$0xf]
        %v2405 = vld [vmem:[%s1 + $0x13c] sm:$0xf]
        %v2486 = vunpack.c.l.b16 %v2326
        %v2487 = vunpack.c.l.b16 %v2327
        %v2488 = vunpack.c.l.b16 %v2328
        %v2489 = vunpack.c.l.b16 %v2329
        %v2490 = vunpack.c.l.b16 %v2330
        %v2491 = vunpack.c.l.b16 %v2331
        %v2492 = vunpack.c.l.b16 %v2332
        %v2493 = vunpack.c.l.b16 %v2333
        %v2494 = vunpack.c.l.b16 %v2334
        %v2495 = vunpack.c.l.b16 %v2335
        %v2496 = vunpack.c.l.b16 %v2336
        %v2497 = vunpack.c.l.b16 %v2337
        %v2498 = vunpack.c.l.b16 %v2338
        %v2499 = vunpack.c.l.b16 %v2339
        %v2500 = vunpack.c.l.b16 %v2340
        %v2501 = vunpack.c.l.b16 %v2341
        %v2502 = vunpack.c.l.b16 %v2342
        %v2503 = vunpack.c.l.b16 %v2343
        %v2504 = vunpack.c.l.b16 %v2344
        %v2505 = vunpack.c.l.b16 %v2345
        %v2506 = vunpack.c.l.b16 %v2346
        %v2507 = vunpack.c.l.b16 %v2347
        %v2508 = vunpack.c.l.b16 %v2348
        %v2509 = vunpack.c.l.b16 %v2349
        %v2510 = vunpack.c.l.b16 %v2350
        %v2511 = vunpack.c.l.b16 %v2351
        %v2512 = vunpack.c.l.b16 %v2352
        %v2513 = vunpack.c.l.b16 %v2353
        %v2514 = vunpack.c.l.b16 %v2354
        %v2515 = vunpack.c.l.b16 %v2355
        %v2516 = vunpack.c.l.b16 %v2356
        %v2517 = vunpack.c.l.b16 %v2357
        %v2518 = vunpack.c.l.b16 %v2358
        %v2519 = vunpack.c.l.b16 %v2359
        %v2520 = vunpack.c.l.b16 %v2360
        %v2521 = vunpack.c.l.b16 %v2361
        %v2522 = vunpack.c.l.b16 %v2362
        %v2523 = vunpack.c.l.b16 %v2363
        %v2524 = vunpack.c.l.b16 %v2364
        %v2525 = vunpack.c.l.b16 %v2365
        %v2526 = vunpack.c.l.b16 %v2366
        %v2527 = vunpack.c.l.b16 %v2367
        %v2528 = vunpack.c.l.b16 %v2368
        %v2529 = vunpack.c.l.b16 %v2369
        %v2530 = vunpack.c.l.b16 %v2370
        %v2531 = vunpack.c.l.b16 %v2371
        %v2532 = vunpack.c.l.b16 %v2372
        %v2533 = vunpack.c.l.b16 %v2373
        %v2534 = vunpack.c.l.b16 %v2374
        %v2535 = vunpack.c.l.b16 %v2375
        %v2536 = vunpack.c.l.b16 %v2376
        %v2537 = vunpack.c.l.b16 %v2377
        %v2538 = vunpack.c.l.b16 %v2378
        %v2539 = vunpack.c.l.b16 %v2379
        %v2540 = vunpack.c.l.b16 %v2380
        %v2541 = vunpack.c.l.b16 %v2381
        %v2542 = vunpack.c.l.b16 %v2382
        %v2543 = vunpack.c.l.b16 %v2383
        %v2544 = vunpack.c.l.b16 %v2384
        %v2545 = vunpack.c.l.b16 %v2385
        %v2546 = vunpack.c.l.b16 %v2386
        %v2547 = vunpack.c.l.b16 %v2387
        %v2548 = vunpack.c.l.b16 %v2388
        %v2549 = vunpack.c.l.b16 %v2389
        %v2550 = vunpack.c.l.b16 %v2390
        %v2551 = vunpack.c.l.b16 %v2391
        %v2552 = vunpack.c.l.b16 %v2392
        %v2553 = vunpack.c.l.b16 %v2393
        %v2554 = vunpack.c.l.b16 %v2394
        %v2555 = vunpack.c.l.b16 %v2395
        %v2556 = vunpack.c.l.b16 %v2396
        %v2557 = vunpack.c.l.b16 %v2397
        %v2558 = vunpack.c.l.b16 %v2398
        %v2559 = vunpack.c.l.b16 %v2399
        %v2560 = vunpack.c.l.b16 %v2400
        %v2561 = vunpack.c.l.b16 %v2401
        %v2562 = vunpack.c.l.b16 %v2402
        %v2563 = vunpack.c.l.b16 %v2403
        %v2564 = vunpack.c.l.b16 %v2404
        %v2565 = vunpack.c.l.b16 %v2405
        %v2566 = vpack.c.b16 %v2487, %v2486
        %v2567 = vpack.c.b16 %v2489, %v2488
        %v2568 = vpack.c.b16 %v2491, %v2490
        %v2569 = vpack.c.b16 %v2493, %v2492
        %v2570 = vpack.c.b16 %v2495, %v2494
        %v2571 = vpack.c.b16 %v2497, %v2496
        %v2572 = vpack.c.b16 %v2499, %v2498
        %v2573 = vpack.c.b16 %v2501, %v2500
        %v2574 = vpack.c.b16 %v2503, %v2502
        %v2575 = vpack.c.b16 %v2505, %v2504
        %v2576 = vpack.c.b16 %v2507, %v2506
        %v2577 = vpack.c.b16 %v2509, %v2508
        %v2578 = vpack.c.b16 %v2511, %v2510
        %v2579 = vpack.c.b16 %v2513, %v2512
        %v2580 = vpack.c.b16 %v2515, %v2514
        %v2581 = vpack.c.b16 %v2517, %v2516
        %v2582 = vpack.c.b16 %v2519, %v2518
        %v2583 = vpack.c.b16 %v2521, %v2520
        %v2584 = vpack.c.b16 %v2523, %v2522
        %v2585 = vpack.c.b16 %v2525, %v2524
        %v2586 = vpack.c.b16 %v2527, %v2526
        %v2587 = vpack.c.b16 %v2529, %v2528
        %v2588 = vpack.c.b16 %v2531, %v2530
        %v2589 = vpack.c.b16 %v2533, %v2532
        %v2590 = vpack.c.b16 %v2535, %v2534
        %v2591 = vpack.c.b16 %v2537, %v2536
        %v2592 = vpack.c.b16 %v2539, %v2538
        %v2593 = vpack.c.b16 %v2541, %v2540
        %v2594 = vpack.c.b16 %v2543, %v2542
        %v2595 = vpack.c.b16 %v2545, %v2544
        %v2596 = vpack.c.b16 %v2547, %v2546
        %v2597 = vpack.c.b16 %v2549, %v2548
        %v2598 = vpack.c.b16 %v2551, %v2550
        %v2599 = vpack.c.b16 %v2553, %v2552
        %v2600 = vpack.c.b16 %v2555, %v2554
        %v2601 = vpack.c.b16 %v2557, %v2556
        %v2602 = vpack.c.b16 %v2559, %v2558
        %v2603 = vpack.c.b16 %v2561, %v2560
        %v2604 = vpack.c.b16 %v2563, %v2562
        %v2605 = vpack.c.b16 %v2565, %v2564
        %2646 = vmatpush.bf16.msra.mxu0 %v2573
        %2647 = vmatpush.bf16.msra.mxu0 %v2572
        %2648 = vmatpush.bf16.msra.mxu0 %v2571
        %2649 = vmatpush.bf16.msra.mxu0 %v2570
        %2650 = vmatpush.bf16.msra.mxu0 %v2569
        %2651 = vmatpush.bf16.msra.mxu0 %v2568
        %2652 = vmatpush.bf16.msra.mxu0 %v2567
        %2653 = vmatpush.bf16.msra.mxu0 %v2566
        %2654 = vmatmul.bf16.gmra.mxu0 %v1910
        %v2655 = vpop.f32.mrf.mxu0
        %v2656 = vadd.f32 0.0, %v2655
        %v2657 = vpop.f32.mrf.mxu0
        %v2658 = vadd.f32 0.0, %v2657
        %2659 = vmatmul.bf16.gmra.mxu0 %v1911
        %v2660 = vpop.f32.mrf.mxu0
        %v2661 = vadd.f32 0.0, %v2660
        %v2662 = vpop.f32.mrf.mxu0
        %v2663 = vadd.f32 0.0, %v2662
        %2664 = vmatmul.bf16.gmra.mxu0 %v1912
        %v2665 = vpop.f32.mrf.mxu0
        %v2666 = vadd.f32 0.0, %v2665
        %v2667 = vpop.f32.mrf.mxu0
        %v2668 = vadd.f32 0.0, %v2667
        %2669 = vmatmul.bf16.gmra.mxu0 %v1913
        %v2670 = vpop.f32.mrf.mxu0
        %v2671 = vadd.f32 0.0, %v2670
        %v2672 = vpop.f32.mrf.mxu0
        %v2673 = vadd.f32 0.0, %v2672
        %2674 = vmatmul.bf16.gmra.mxu0 %v1914
        %v2675 = vpop.f32.mrf.mxu0
        %v2676 = vadd.f32 0.0, %v2675
        %v2677 = vpop.f32.mrf.mxu0
        %v2678 = vadd.f32 0.0, %v2677
        %2679 = vmatmul.bf16.gmra.mxu0 %v1915
        %v2680 = vpop.f32.mrf.mxu0
        %v2681 = vadd.f32 0.0, %v2680
        %v2682 = vpop.f32.mrf.mxu0
        %v2683 = vadd.f32 0.0, %v2682
        %2684 = vmatmul.bf16.gmra.mxu0 %v1916
        %v2685 = vpop.f32.mrf.mxu0
        %v2686 = vadd.f32 0.0, %v2685
        %v2687 = vpop.f32.mrf.mxu0
        %v2688 = vadd.f32 0.0, %v2687
        %2689 = vmatmul.bf16.gmra.mxu0 %v1917
        %v2690 = vpop.f32.mrf.mxu0
        %v2691 = vadd.f32 0.0, %v2690
        %v2692 = vpop.f32.mrf.mxu0
        %v2693 = vadd.f32 0.0, %v2692
        %2694 = vmatmul.bf16.gmra.mxu0 %v1918
        %v2695 = vpop.f32.mrf.mxu0
        %v2696 = vadd.f32 0.0, %v2695
        %v2697 = vpop.f32.mrf.mxu0
        %v2698 = vadd.f32 0.0, %v2697
        %2699 = vmatmul.bf16.gmra.mxu0 %v1919
        %v2700 = vpop.f32.mrf.mxu0
        %v2701 = vadd.f32 0.0, %v2700
        %v2702 = vpop.f32.mrf.mxu0
        %v2703 = vadd.f32 0.0, %v2702
        %2704 = vmatmul.bf16.gmra.mxu0 %v1920
        %v2705 = vpop.f32.mrf.mxu0
        %v2706 = vadd.f32 0.0, %v2705
        %v2707 = vpop.f32.mrf.mxu0
        %v2708 = vadd.f32 0.0, %v2707
        %2709 = vmatmul.bf16.gmra.mxu0 %v1921
        %v2710 = vpop.f32.mrf.mxu0
        %v2711 = vadd.f32 0.0, %v2710
        %v2712 = vpop.f32.mrf.mxu0
        %v2713 = vadd.f32 0.0, %v2712
        %2714 = vmatmul.bf16.gmra.mxu0 %v1922
        %v2715 = vpop.f32.mrf.mxu0
        %v2716 = vadd.f32 0.0, %v2715
        %v2717 = vpop.f32.mrf.mxu0
        %v2718 = vadd.f32 0.0, %v2717
        %2719 = vmatmul.bf16.gmra.mxu0 %v1923
        %v2720 = vpop.f32.mrf.mxu0
        %v2721 = vadd.f32 0.0, %v2720
        %v2722 = vpop.f32.mrf.mxu0
        %v2723 = vadd.f32 0.0, %v2722
        %2724 = vmatmul.bf16.gmra.mxu0 %v1924
        %v2725 = vpop.f32.mrf.mxu0
        %v2726 = vadd.f32 0.0, %v2725
        %v2727 = vpop.f32.mrf.mxu0
        %v2728 = vadd.f32 0.0, %v2727
        %2729 = vmatmul.bf16.gmra.mxu0 %v1925
        %v2730 = vpop.f32.mrf.mxu0
        %v2731 = vadd.f32 0.0, %v2730
        %v2732 = vpop.f32.mrf.mxu0
        %v2733 = vadd.f32 0.0, %v2732
        %2734 = vdwg.mxu0
        %2735 = vmatpush.bf16.msra.mxu0 %v2581
        %2736 = vmatpush.bf16.msra.mxu0 %v2580
        %2737 = vmatpush.bf16.msra.mxu0 %v2579
        %2738 = vmatpush.bf16.msra.mxu0 %v2578
        %2739 = vmatpush.bf16.msra.mxu0 %v2577
        %2740 = vmatpush.bf16.msra.mxu0 %v2576
        %2741 = vmatpush.bf16.msra.mxu0 %v2575
        %2742 = vmatpush.bf16.msra.mxu0 %v2574
        %2743 = vmatmul.bf16.gmra.mxu0 %v2006
        %v2744 = vpop.f32.mrf.mxu0
        %v2745 = vadd.f32 %v2656, %v2744
        %v2746 = vpop.f32.mrf.mxu0
        %v2747 = vadd.f32 %v2658, %v2746
        %2748 = vmatmul.bf16.gmra.mxu0 %v2007
        %v2749 = vpop.f32.mrf.mxu0
        %v2750 = vadd.f32 %v2661, %v2749
        %v2751 = vpop.f32.mrf.mxu0
        %v2752 = vadd.f32 %v2663, %v2751
        %2753 = vmatmul.bf16.gmra.mxu0 %v2008
        %v2754 = vpop.f32.mrf.mxu0
        %v2755 = vadd.f32 %v2666, %v2754
        %v2756 = vpop.f32.mrf.mxu0
        %v2757 = vadd.f32 %v2668, %v2756
        %2758 = vmatmul.bf16.gmra.mxu0 %v2009
        %v2759 = vpop.f32.mrf.mxu0
        %v2760 = vadd.f32 %v2671, %v2759
        %v2761 = vpop.f32.mrf.mxu0
        %v2762 = vadd.f32 %v2673, %v2761
        %2763 = vmatmul.bf16.gmra.mxu0 %v2010
        %v2764 = vpop.f32.mrf.mxu0
        %v2765 = vadd.f32 %v2676, %v2764
        %v2766 = vpop.f32.mrf.mxu0
        %v2767 = vadd.f32 %v2678, %v2766
        %2768 = vmatmul.bf16.gmra.mxu0 %v2011
        %v2769 = vpop.f32.mrf.mxu0
        %v2770 = vadd.f32 %v2681, %v2769
        %v2771 = vpop.f32.mrf.mxu0
        %v2772 = vadd.f32 %v2683, %v2771
        %2773 = vmatmul.bf16.gmra.mxu0 %v2012
        %v2774 = vpop.f32.mrf.mxu0
        %v2775 = vadd.f32 %v2686, %v2774
        %v2776 = vpop.f32.mrf.mxu0
        %v2777 = vadd.f32 %v2688, %v2776
        %2778 = vmatmul.bf16.gmra.mxu0 %v2013
        %v2779 = vpop.f32.mrf.mxu0
        %v2780 = vadd.f32 %v2691, %v2779
        %v2781 = vpop.f32.mrf.mxu0
        %v2782 = vadd.f32 %v2693, %v2781
        %2783 = vmatmul.bf16.gmra.mxu0 %v2014
        %v2784 = vpop.f32.mrf.mxu0
        %v2785 = vadd.f32 %v2696, %v2784
        %v2786 = vpop.f32.mrf.mxu0
        %v2787 = vadd.f32 %v2698, %v2786
        %2788 = vmatmul.bf16.gmra.mxu0 %v2015
        %v2789 = vpop.f32.mrf.mxu0
        %v2790 = vadd.f32 %v2701, %v2789
        %v2791 = vpop.f32.mrf.mxu0
        %v2792 = vadd.f32 %v2703, %v2791
        %2793 = vmatmul.bf16.gmra.mxu0 %v2016
        %v2794 = vpop.f32.mrf.mxu0
        %v2795 = vadd.f32 %v2706, %v2794
        %v2796 = vpop.f32.mrf.mxu0
        %v2797 = vadd.f32 %v2708, %v2796
        %2798 = vmatmul.bf16.gmra.mxu0 %v2017
        %v2799 = vpop.f32.mrf.mxu0
        %v2800 = vadd.f32 %v2711, %v2799
        %v2801 = vpop.f32.mrf.mxu0
        %v2802 = vadd.f32 %v2713, %v2801
        %2803 = vmatmul.bf16.gmra.mxu0 %v2018
        %v2804 = vpop.f32.mrf.mxu0
        %v2805 = vadd.f32 %v2716, %v2804
        %v2806 = vpop.f32.mrf.mxu0
        %v2807 = vadd.f32 %v2718, %v2806
        %2808 = vmatmul.bf16.gmra.mxu0 %v2019
        %v2809 = vpop.f32.mrf.mxu0
        %v2810 = vadd.f32 %v2721, %v2809
        %v2811 = vpop.f32.mrf.mxu0
        %v2812 = vadd.f32 %v2723, %v2811
        %2813 = vmatmul.bf16.gmra.mxu0 %v2020
        %v2814 = vpop.f32.mrf.mxu0
        %v2815 = vadd.f32 %v2726, %v2814
        %v2816 = vpop.f32.mrf.mxu0
        %v2817 = vadd.f32 %v2728, %v2816
        %2818 = vmatmul.bf16.gmra.mxu0 %v2021
        %v2819 = vpop.f32.mrf.mxu0
        %v2820 = vadd.f32 %v2731, %v2819
        %v2821 = vpop.f32.mrf.mxu0
        %v2822 = vadd.f32 %v2733, %v2821
        %2823 = vdwg.mxu0
        %2824 = vmatpush.bf16.msra.mxu0 %v2589
        %2825 = vmatpush.bf16.msra.mxu0 %v2588
        %2826 = vmatpush.bf16.msra.mxu0 %v2587
        %2827 = vmatpush.bf16.msra.mxu0 %v2586
        %2828 = vmatpush.bf16.msra.mxu0 %v2585
        %2829 = vmatpush.bf16.msra.mxu0 %v2584
        %2830 = vmatpush.bf16.msra.mxu0 %v2583
        %2831 = vmatpush.bf16.msra.mxu0 %v2582
        %2832 = vmatmul.bf16.gmra.mxu0 %v2102
        %v2833 = vpop.f32.mrf.mxu0
        %v2834 = vadd.f32 %v2745, %v2833
        %v2835 = vpop.f32.mrf.mxu0
        %v2836 = vadd.f32 %v2747, %v2835
        %2837 = vmatmul.bf16.gmra.mxu0 %v2103
        %v2838 = vpop.f32.mrf.mxu0
        %v2839 = vadd.f32 %v2750, %v2838
        %v2840 = vpop.f32.mrf.mxu0
        %v2841 = vadd.f32 %v2752, %v2840
        %2842 = vmatmul.bf16.gmra.mxu0 %v2104
        %v2843 = vpop.f32.mrf.mxu0
        %v2844 = vadd.f32 %v2755, %v2843
        %v2845 = vpop.f32.mrf.mxu0
        %v2846 = vadd.f32 %v2757, %v2845
        %2847 = vmatmul.bf16.gmra.mxu0 %v2105
        %v2848 = vpop.f32.mrf.mxu0
        %v2849 = vadd.f32 %v2760, %v2848
        %v2850 = vpop.f32.mrf.mxu0
        %v2851 = vadd.f32 %v2762, %v2850
        %2852 = vmatmul.bf16.gmra.mxu0 %v2106
        %v2853 = vpop.f32.mrf.mxu0
        %v2854 = vadd.f32 %v2765, %v2853
        %v2855 = vpop.f32.mrf.mxu0
        %v2856 = vadd.f32 %v2767, %v2855
        %2857 = vmatmul.bf16.gmra.mxu0 %v2107
        %v2858 = vpop.f32.mrf.mxu0
        %v2859 = vadd.f32 %v2770, %v2858
        %v2860 = vpop.f32.mrf.mxu0
        %v2861 = vadd.f32 %v2772, %v2860
        %2862 = vmatmul.bf16.gmra.mxu0 %v2108
        %v2863 = vpop.f32.mrf.mxu0
        %v2864 = vadd.f32 %v2775, %v2863
        %v2865 = vpop.f32.mrf.mxu0
        %v2866 = vadd.f32 %v2777, %v2865
        %2867 = vmatmul.bf16.gmra.mxu0 %v2109
        %v2868 = vpop.f32.mrf.mxu0
        %v2869 = vadd.f32 %v2780, %v2868
        %v2870 = vpop.f32.mrf.mxu0
        %v2871 = vadd.f32 %v2782, %v2870
        %2872 = vmatmul.bf16.gmra.mxu0 %v2110
        %v2873 = vpop.f32.mrf.mxu0
        %v2874 = vadd.f32 %v2785, %v2873
        %v2875 = vpop.f32.mrf.mxu0
        %v2876 = vadd.f32 %v2787, %v2875
        %2877 = vmatmul.bf16.gmra.mxu0 %v2111
        %v2878 = vpop.f32.mrf.mxu0
        %v2879 = vadd.f32 %v2790, %v2878
        %v2880 = vpop.f32.mrf.mxu0
        %v2881 = vadd.f32 %v2792, %v2880
        %2882 = vmatmul.bf16.gmra.mxu0 %v2112
        %v2883 = vpop.f32.mrf.mxu0
        %v2884 = vadd.f32 %v2795, %v2883
        %v2885 = vpop.f32.mrf.mxu0
        %v2886 = vadd.f32 %v2797, %v2885
        %2887 = vmatmul.bf16.gmra.mxu0 %v2113
        %v2888 = vpop.f32.mrf.mxu0
        %v2889 = vadd.f32 %v2800, %v2888
        %v2890 = vpop.f32.mrf.mxu0
        %v2891 = vadd.f32 %v2802, %v2890
        %2892 = vmatmul.bf16.gmra.mxu0 %v2114
        %v2893 = vpop.f32.mrf.mxu0
        %v2894 = vadd.f32 %v2805, %v2893
        %v2895 = vpop.f32.mrf.mxu0
        %v2896 = vadd.f32 %v2807, %v2895
        %2897 = vmatmul.bf16.gmra.mxu0 %v2115
        %v2898 = vpop.f32.mrf.mxu0
        %v2899 = vadd.f32 %v2810, %v2898
        %v2900 = vpop.f32.mrf.mxu0
        %v2901 = vadd.f32 %v2812, %v2900
        %2902 = vmatmul.bf16.gmra.mxu0 %v2116
        %v2903 = vpop.f32.mrf.mxu0
        %v2904 = vadd.f32 %v2815, %v2903
        %v2905 = vpop.f32.mrf.mxu0
        %v2906 = vadd.f32 %v2817, %v2905
        %2907 = vmatmul.bf16.gmra.mxu0 %v2117
        %v2908 = vpop.f32.mrf.mxu0
        %v2909 = vadd.f32 %v2820, %v2908
        %v2910 = vpop.f32.mrf.mxu0
        %v2911 = vadd.f32 %v2822, %v2910
        %2912 = vdwg.mxu0
        %2913 = vmatpush.bf16.msra.mxu0 %v2597
        %2914 = vmatpush.bf16.msra.mxu0 %v2596
        %2915 = vmatpush.bf16.msra.mxu0 %v2595
        %2916 = vmatpush.bf16.msra.mxu0 %v2594
        %2917 = vmatpush.bf16.msra.mxu0 %v2593
        %2918 = vmatpush.bf16.msra.mxu0 %v2592
        %2919 = vmatpush.bf16.msra.mxu0 %v2591
        %2920 = vmatpush.bf16.msra.mxu0 %v2590
        %2921 = vmatmul.bf16.gmra.mxu0 %v2198
        %v2922 = vpop.f32.mrf.mxu0
        %v2923 = vadd.f32 %v2834, %v2922
        %v2924 = vpop.f32.mrf.mxu0
        %v2925 = vadd.f32 %v2836, %v2924
        %2926 = vmatmul.bf16.gmra.mxu0 %v2199
        %v2927 = vpop.f32.mrf.mxu0
        %v2928 = vadd.f32 %v2839, %v2927
        %v2929 = vpop.f32.mrf.mxu0
        %v2930 = vadd.f32 %v2841, %v2929
        %2931 = vmatmul.bf16.gmra.mxu0 %v2200
        %v2932 = vpop.f32.mrf.mxu0
        %v2933 = vadd.f32 %v2844, %v2932
        %v2934 = vpop.f32.mrf.mxu0
        %v2935 = vadd.f32 %v2846, %v2934
        %2936 = vmatmul.bf16.gmra.mxu0 %v2201
        %v2937 = vpop.f32.mrf.mxu0
        %v2938 = vadd.f32 %v2849, %v2937
        %v2939 = vpop.f32.mrf.mxu0
        %v2940 = vadd.f32 %v2851, %v2939
        %2941 = vmatmul.bf16.gmra.mxu0 %v2202
        %v2942 = vpop.f32.mrf.mxu0
        %v2943 = vadd.f32 %v2854, %v2942
        %v2944 = vpop.f32.mrf.mxu0
        %v2945 = vadd.f32 %v2856, %v2944
        %2946 = vmatmul.bf16.gmra.mxu0 %v2203
        %v2947 = vpop.f32.mrf.mxu0
        %v2948 = vadd.f32 %v2859, %v2947
        %v2949 = vpop.f32.mrf.mxu0
        %v2950 = vadd.f32 %v2861, %v2949
        %2951 = vmatmul.bf16.gmra.mxu0 %v2204
        %v2952 = vpop.f32.mrf.mxu0
        %v2953 = vadd.f32 %v2864, %v2952
        %v2954 = vpop.f32.mrf.mxu0
        %v2955 = vadd.f32 %v2866, %v2954
        %2956 = vmatmul.bf16.gmra.mxu0 %v2205
        %v2957 = vpop.f32.mrf.mxu0
        %v2958 = vadd.f32 %v2869, %v2957
        %v2959 = vpop.f32.mrf.mxu0
        %v2960 = vadd.f32 %v2871, %v2959
        %2961 = vmatmul.bf16.gmra.mxu0 %v2206
        %v2962 = vpop.f32.mrf.mxu0
        %v2963 = vadd.f32 %v2874, %v2962
        %v2964 = vpop.f32.mrf.mxu0
        %v2965 = vadd.f32 %v2876, %v2964
        %2966 = vmatmul.bf16.gmra.mxu0 %v2207
        %v2967 = vpop.f32.mrf.mxu0
        %v2968 = vadd.f32 %v2879, %v2967
        %v2969 = vpop.f32.mrf.mxu0
        %v2970 = vadd.f32 %v2881, %v2969
        %2971 = vmatmul.bf16.gmra.mxu0 %v2208
        %v2972 = vpop.f32.mrf.mxu0
        %v2973 = vadd.f32 %v2884, %v2972
        %v2974 = vpop.f32.mrf.mxu0
        %v2975 = vadd.f32 %v2886, %v2974
        %2976 = vmatmul.bf16.gmra.mxu0 %v2209
        %v2977 = vpop.f32.mrf.mxu0
        %v2978 = vadd.f32 %v2889, %v2977
        %v2979 = vpop.f32.mrf.mxu0
        %v2980 = vadd.f32 %v2891, %v2979
        %2981 = vmatmul.bf16.gmra.mxu0 %v2210
        %v2982 = vpop.f32.mrf.mxu0
        %v2983 = vadd.f32 %v2894, %v2982
        %v2984 = vpop.f32.mrf.mxu0
        %v2985 = vadd.f32 %v2896, %v2984
        %2986 = vmatmul.bf16.gmra.mxu0 %v2211
        %v2987 = vpop.f32.mrf.mxu0
        %v2988 = vadd.f32 %v2899, %v2987
        %v2989 = vpop.f32.mrf.mxu0
        %v2990 = vadd.f32 %v2901, %v2989
        %2991 = vmatmul.bf16.gmra.mxu0 %v2212
        %v2992 = vpop.f32.mrf.mxu0
        %v2993 = vadd.f32 %v2904, %v2992
        %v2994 = vpop.f32.mrf.mxu0
        %v2995 = vadd.f32 %v2906, %v2994
        %2996 = vmatmul.bf16.gmra.mxu0 %v2213
        %v2997 = vpop.f32.mrf.mxu0
        %v2998 = vadd.f32 %v2909, %v2997
        %v2999 = vpop.f32.mrf.mxu0
        %v3000 = vadd.f32 %v2911, %v2999
        %3001 = vdwg.mxu0
        %3002 = vmatpush.bf16.msra.mxu0 %v2605
        %3003 = vmatpush.bf16.msra.mxu0 %v2604
        %3004 = vmatpush.bf16.msra.mxu0 %v2603
        %3005 = vmatpush.bf16.msra.mxu0 %v2602
        %3006 = vmatpush.bf16.msra.mxu0 %v2601
        %3007 = vmatpush.bf16.msra.mxu0 %v2600
        %3008 = vmatpush.bf16.msra.mxu0 %v2599
        %3009 = vmatpush.bf16.msra.mxu0 %v2598
        %3010 = vmatmul.bf16.gmra.mxu0 %v2294
        %v3011 = vpop.f32.mrf.mxu0
        %v3012 = vadd.f32 %v2923, %v3011
        %v3013 = vpop.f32.mrf.mxu0
        %v3014 = vadd.f32 %v2925, %v3013
        %3015 = vmatmul.bf16.gmra.mxu0 %v2295
        %v3016 = vpop.f32.mrf.mxu0
        %v3017 = vadd.f32 %v2928, %v3016
        %v3018 = vpop.f32.mrf.mxu0
        %v3019 = vadd.f32 %v2930, %v3018
        %3020 = vmatmul.bf16.gmra.mxu0 %v2296
        %v3021 = vpop.f32.mrf.mxu0
        %v3022 = vadd.f32 %v2933, %v3021
        %v3023 = vpop.f32.mrf.mxu0
        %v3024 = vadd.f32 %v2935, %v3023
        %3025 = vmatmul.bf16.gmra.mxu0 %v2297
        %v3026 = vpop.f32.mrf.mxu0
        %v3027 = vadd.f32 %v2938, %v3026
        %v3028 = vpop.f32.mrf.mxu0
        %v3029 = vadd.f32 %v2940, %v3028
        %3030 = vmatmul.bf16.gmra.mxu0 %v2298
        %v3031 = vpop.f32.mrf.mxu0
        %v3032 = vadd.f32 %v2943, %v3031
        %v3033 = vpop.f32.mrf.mxu0
        %v3034 = vadd.f32 %v2945, %v3033
        %3035 = vmatmul.bf16.gmra.mxu0 %v2299
        %v3036 = vpop.f32.mrf.mxu0
        %v3037 = vadd.f32 %v2948, %v3036
        %v3038 = vpop.f32.mrf.mxu0
        %v3039 = vadd.f32 %v2950, %v3038
        %3040 = vmatmul.bf16.gmra.mxu0 %v2300
        %v3041 = vpop.f32.mrf.mxu0
        %v3042 = vadd.f32 %v2953, %v3041
        %v3043 = vpop.f32.mrf.mxu0
        %v3044 = vadd.f32 %v2955, %v3043
        %3045 = vmatmul.bf16.gmra.mxu0 %v2301
        %v3046 = vpop.f32.mrf.mxu0
        %v3047 = vadd.f32 %v2958, %v3046
        %v3048 = vpop.f32.mrf.mxu0
        %v3049 = vadd.f32 %v2960, %v3048
        %3050 = vmatmul.bf16.gmra.mxu0 %v2302
        %v3051 = vpop.f32.mrf.mxu0
        %v3052 = vadd.f32 %v2963, %v3051
        %v3053 = vpop.f32.mrf.mxu0
        %v3054 = vadd.f32 %v2965, %v3053
        %3055 = vmatmul.bf16.gmra.mxu0 %v2303
        %v3056 = vpop.f32.mrf.mxu0
        %v3057 = vadd.f32 %v2968, %v3056
        %v3058 = vpop.f32.mrf.mxu0
        %v3059 = vadd.f32 %v2970, %v3058
        %3060 = vmatmul.bf16.gmra.mxu0 %v2304
        %v3061 = vpop.f32.mrf.mxu0
        %v3062 = vadd.f32 %v2973, %v3061
        %v3063 = vpop.f32.mrf.mxu0
        %v3064 = vadd.f32 %v2975, %v3063
        %3065 = vmatmul.bf16.gmra.mxu0 %v2305
        %v3066 = vpop.f32.mrf.mxu0
        %v3067 = vadd.f32 %v2978, %v3066
        %v3068 = vpop.f32.mrf.mxu0
        %v3069 = vadd.f32 %v2980, %v3068
        %3070 = vmatmul.bf16.gmra.mxu0 %v2306
        %v3071 = vpop.f32.mrf.mxu0
        %v3072 = vadd.f32 %v2983, %v3071
        %v3073 = vpop.f32.mrf.mxu0
        %v3074 = vadd.f32 %v2985, %v3073
        %3075 = vmatmul.bf16.gmra.mxu0 %v2307
        %v3076 = vpop.f32.mrf.mxu0
        %v3077 = vadd.f32 %v2988, %v3076
        %v3078 = vpop.f32.mrf.mxu0
        %v3079 = vadd.f32 %v2990, %v3078
        %3080 = vmatmul.bf16.gmra.mxu0 %v2308
        %v3081 = vpop.f32.mrf.mxu0
        %v3082 = vadd.f32 %v2993, %v3081
        %v3083 = vpop.f32.mrf.mxu0
        %v3084 = vadd.f32 %v2995, %v3083
        %3085 = vmatmul.bf16.gmra.mxu0 %v2309
        %v3086 = vpop.f32.mrf.mxu0
        %v3087 = vadd.f32 %v2998, %v3086
        %v3088 = vpop.f32.mrf.mxu0
        %v3089 = vadd.f32 %v3000, %v3088
        %3090 = vdwg.mxu0
        %v3091 = vld [vmem:[%s2] sm:$0x1]
        %v3093 = vperm.slane %v3091, 0
        %v3095 = vadd.f32 %v3012, %v3093
        %v3096 = vadd.f32 %v3014, %v3093
        %v3097 = vadd.f32 %v3017, %v3093
        %v3098 = vadd.f32 %v3019, %v3093
        %v3099 = vadd.f32 %v3022, %v3093
        %v3100 = vadd.f32 %v3024, %v3093
        %v3101 = vadd.f32 %v3027, %v3093
        %v3102 = vadd.f32 %v3029, %v3093
        %v3103 = vadd.f32 %v3032, %v3093
        %v3104 = vadd.f32 %v3034, %v3093
        %v3105 = vadd.f32 %v3037, %v3093
        %v3106 = vadd.f32 %v3039, %v3093
        %v3107 = vadd.f32 %v3042, %v3093
        %v3108 = vadd.f32 %v3044, %v3093
        %v3109 = vadd.f32 %v3047, %v3093
        %v3110 = vadd.f32 %v3049, %v3093
        %v3111 = vadd.f32 %v3052, %v3093
        %v3112 = vadd.f32 %v3054, %v3093
        %v3113 = vadd.f32 %v3057, %v3093
        %v3114 = vadd.f32 %v3059, %v3093
        %v3115 = vadd.f32 %v3062, %v3093
        %v3116 = vadd.f32 %v3064, %v3093
        %v3117 = vadd.f32 %v3067, %v3093
        %v3118 = vadd.f32 %v3069, %v3093
        %v3119 = vadd.f32 %v3072, %v3093
        %v3120 = vadd.f32 %v3074, %v3093
        %v3121 = vadd.f32 %v3077, %v3093
        %v3122 = vadd.f32 %v3079, %v3093
        %v3123 = vadd.f32 %v3082, %v3093
        %v3124 = vadd.f32 %v3084, %v3093
        %v3125 = vadd.f32 %v3087, %v3093
        %v3126 = vadd.f32 %v3089, %v3093
        %v3127 = vlaneseq
        %v3128 = vshrl.u32 %v3127, 7
        %v3129 = vadd.s32 %v3128, 8
        %vm3130 = vcmp.lt.s32.totalorder %v3128, 12
        %vm3131 = vcmp.lt.s32.totalorder %v3129, 12
        %v3132 = vsel %vm3130, 1, 0
        %v3133 = vsel %vm3131, 1, 0
        %vm3134 = vcmp.eq.s32.totalorder %v3132, 1
        %vm3135 = vcmp.eq.s32.totalorder %v3133, 1
        %v3136 = vsel %vm3134, %v3095, -1e+30
        %v3137 = vsel %vm3135, %v3096, -1e+30
        %v3138 = vsel %vm3134, %v3097, -1e+30
        %v3139 = vsel %vm3135, %v3098, -1e+30
        %v3140 = vsel %vm3134, %v3099, -1e+30
        %v3141 = vsel %vm3135, %v3100, -1e+30
        %v3142 = vsel %vm3134, %v3101, -1e+30
        %v3143 = vsel %vm3135, %v3102, -1e+30
        %v3144 = vsel %vm3134, %v3103, -1e+30
        %v3145 = vsel %vm3135, %v3104, -1e+30
        %v3146 = vsel %vm3134, %v3105, -1e+30
        %v3147 = vsel %vm3135, %v3106, -1e+30
        %v3148 = vsel %vm3134, %v3107, -1e+30
        %v3149 = vsel %vm3135, %v3108, -1e+30
        %v3150 = vsel %vm3134, %v3109, -1e+30
        %v3151 = vsel %vm3135, %v3110, -1e+30
        %v3152 = vsel %vm3134, %v3111, -1e+30
        %v3153 = vsel %vm3135, %v3112, -1e+30
        %v3154 = vsel %vm3134, %v3113, -1e+30
        %v3155 = vsel %vm3135, %v3114, -1e+30
        %v3156 = vsel %vm3134, %v3115, -1e+30
        %v3157 = vsel %vm3135, %v3116, -1e+30
        %v3158 = vsel %vm3134, %v3117, -1e+30
        %v3159 = vsel %vm3135, %v3118, -1e+30
        %v3160 = vsel %vm3134, %v3119, -1e+30
        %v3161 = vsel %vm3135, %v3120, -1e+30
        %v3162 = vsel %vm3134, %v3121, -1e+30
        %v3163 = vsel %vm3135, %v3122, -1e+30
        %v3164 = vsel %vm3134, %v3123, -1e+30
        %v3165 = vsel %vm3135, %v3124, -1e+30
        %v3166 = vsel %vm3134, %v3125, -1e+30
        %v3167 = vsel %vm3135, %v3126, -1e+30
        %v3168 = vmax.f32 %v3136, %v3137
        %v3169 = vrot.slane %v3168, 4
        %v3170 = vmax.f32 %v3168, %v3169
        %v3171 = vrot.slane %v3170, 2
        %v3172 = vmax.f32 %v3170, %v3171
        %v3173 = vrot.slane %v3172, 1
        %v3174 = vmax.f32 %v3172, %v3173
        %v3175 = vmax.f32 %v3138, %v3139
        %v3176 = vrot.slane %v3175, 4
        %v3177 = vmax.f32 %v3175, %v3176
        %v3178 = vrot.slane %v3177, 2
        %v3179 = vmax.f32 %v3177, %v3178
        %v3180 = vrot.slane %v3179, 1
        %v3181 = vmax.f32 %v3179, %v3180
        %v3182 = vmax.f32 %v3140, %v3141
        %v3183 = vrot.slane %v3182, 4
        %v3184 = vmax.f32 %v3182, %v3183
        %v3185 = vrot.slane %v3184, 2
        %v3186 = vmax.f32 %v3184, %v3185
        %v3187 = vrot.slane %v3186, 1
        %v3188 = vmax.f32 %v3186, %v3187
        %v3189 = vmax.f32 %v3142, %v3143
        %v3190 = vrot.slane %v3189, 4
        %v3191 = vmax.f32 %v3189, %v3190
        %v3192 = vrot.slane %v3191, 2
        %v3193 = vmax.f32 %v3191, %v3192
        %v3194 = vrot.slane %v3193, 1
        %v3195 = vmax.f32 %v3193, %v3194
        %v3196 = vmax.f32 %v3144, %v3145
        %v3197 = vrot.slane %v3196, 4
        %v3198 = vmax.f32 %v3196, %v3197
        %v3199 = vrot.slane %v3198, 2
        %v3200 = vmax.f32 %v3198, %v3199
        %v3201 = vrot.slane %v3200, 1
        %v3202 = vmax.f32 %v3200, %v3201
        %v3203 = vmax.f32 %v3146, %v3147
        %v3204 = vrot.slane %v3203, 4
        %v3205 = vmax.f32 %v3203, %v3204
        %v3206 = vrot.slane %v3205, 2
        %v3207 = vmax.f32 %v3205, %v3206
        %v3208 = vrot.slane %v3207, 1
        %v3209 = vmax.f32 %v3207, %v3208
        %v3210 = vmax.f32 %v3148, %v3149
        %v3211 = vrot.slane %v3210, 4
        %v3212 = vmax.f32 %v3210, %v3211
        %v3213 = vrot.slane %v3212, 2
        %v3214 = vmax.f32 %v3212, %v3213
        %v3215 = vrot.slane %v3214, 1
        %v3216 = vmax.f32 %v3214, %v3215
        %v3217 = vmax.f32 %v3150, %v3151
        %v3218 = vrot.slane %v3217, 4
        %v3219 = vmax.f32 %v3217, %v3218
        %v3220 = vrot.slane %v3219, 2
        %v3221 = vmax.f32 %v3219, %v3220
        %v3222 = vrot.slane %v3221, 1
        %v3223 = vmax.f32 %v3221, %v3222
        %v3224 = vmax.f32 %v3152, %v3153
        %v3225 = vrot.slane %v3224, 4
        %v3226 = vmax.f32 %v3224, %v3225
        %v3227 = vrot.slane %v3226, 2
        %v3228 = vmax.f32 %v3226, %v3227
        %v3229 = vrot.slane %v3228, 1
        %v3230 = vmax.f32 %v3228, %v3229
        %v3231 = vmax.f32 %v3154, %v3155
        %v3232 = vrot.slane %v3231, 4
        %v3233 = vmax.f32 %v3231, %v3232
        %v3234 = vrot.slane %v3233, 2
        %v3235 = vmax.f32 %v3233, %v3234
        %v3236 = vrot.slane %v3235, 1
        %v3237 = vmax.f32 %v3235, %v3236
        %v3238 = vmax.f32 %v3156, %v3157
        %v3239 = vrot.slane %v3238, 4
        %v3240 = vmax.f32 %v3238, %v3239
        %v3241 = vrot.slane %v3240, 2
        %v3242 = vmax.f32 %v3240, %v3241
        %v3243 = vrot.slane %v3242, 1
        %v3244 = vmax.f32 %v3242, %v3243
        %v3245 = vmax.f32 %v3158, %v3159
        %v3246 = vrot.slane %v3245, 4
        %v3247 = vmax.f32 %v3245, %v3246
        %v3248 = vrot.slane %v3247, 2
        %v3249 = vmax.f32 %v3247, %v3248
        %v3250 = vrot.slane %v3249, 1
        %v3251 = vmax.f32 %v3249, %v3250
        %v3252 = vmax.f32 %v3160, %v3161
        %v3253 = vrot.slane %v3252, 4
        %v3254 = vmax.f32 %v3252, %v3253
        %v3255 = vrot.slane %v3254, 2
        %v3256 = vmax.f32 %v3254, %v3255
        %v3257 = vrot.slane %v3256, 1
        %v3258 = vmax.f32 %v3256, %v3257
        %v3259 = vmax.f32 %v3162, %v3163
        %v3260 = vrot.slane %v3259, 4
        %v3261 = vmax.f32 %v3259, %v3260
        %v3262 = vrot.slane %v3261, 2
        %v3263 = vmax.f32 %v3261, %v3262
        %v3264 = vrot.slane %v3263, 1
        %v3265 = vmax.f32 %v3263, %v3264
        %v3266 = vmax.f32 %v3164, %v3165
        %v3267 = vrot.slane %v3266, 4
        %v3268 = vmax.f32 %v3266, %v3267
        %v3269 = vrot.slane %v3268, 2
        %v3270 = vmax.f32 %v3268, %v3269
        %v3271 = vrot.slane %v3270, 1
        %v3272 = vmax.f32 %v3270, %v3271
        %v3273 = vmax.f32 %v3166, %v3167
        %v3274 = vrot.slane %v3273, 4
        %v3275 = vmax.f32 %v3273, %v3274
        %v3276 = vrot.slane %v3275, 2
        %v3277 = vmax.f32 %v3275, %v3276
        %v3278 = vrot.slane %v3277, 1
        %v3279 = vmax.f32 %v3277, %v3278
        %v3280 = vmax.f32 %v3174, 0.0
        %v3281 = vmax.f32 %v3181, 0.0
        %v3282 = vmax.f32 %v3188, 0.0
        %v3283 = vmax.f32 %v3195, 0.0
        %v3284 = vmax.f32 %v3202, 0.0
        %v3285 = vmax.f32 %v3209, 0.0
        %v3286 = vmax.f32 %v3216, 0.0
        %v3287 = vmax.f32 %v3223, 0.0
        %v3288 = vmax.f32 %v3230, 0.0
        %v3289 = vmax.f32 %v3237, 0.0
        %v3290 = vmax.f32 %v3244, 0.0
        %v3291 = vmax.f32 %v3251, 0.0
        %v3292 = vmax.f32 %v3258, 0.0
        %v3293 = vmax.f32 %v3265, 0.0
        %v3294 = vmax.f32 %v3272, 0.0
        %v3295 = vmax.f32 %v3279, 0.0
        %v3296 = vpack.c.bf16 %v3280, %v3280
        %v3297 = vpack.c.bf16 %v3281, %v3281
        %v3298 = vpack.c.bf16 %v3282, %v3282
        %v3299 = vpack.c.bf16 %v3283, %v3283
        %v3300 = vpack.c.bf16 %v3284, %v3284
        %v3301 = vpack.c.bf16 %v3285, %v3285
        %v3302 = vpack.c.bf16 %v3286, %v3286
        %v3303 = vpack.c.bf16 %v3287, %v3287
        %v3304 = vpack.c.bf16 %v3288, %v3288
        %v3305 = vpack.c.bf16 %v3289, %v3289
        %v3306 = vpack.c.bf16 %v3290, %v3290
        %v3307 = vpack.c.bf16 %v3291, %v3291
        %v3308 = vpack.c.bf16 %v3292, %v3292
        %v3309 = vpack.c.bf16 %v3293, %v3293
        %v3310 = vpack.c.bf16 %v3294, %v3294
        %v3311 = vpack.c.bf16 %v3295, %v3295
        %v3312 = vld [vmem:[%s3] sm:$0xff]
        %v3313 = vld [vmem:[%s3 + $0x8] sm:$0xff]
        %v3314 = vld [vmem:[%s3 + $0x10] sm:$0xff]
        %v3315 = vld [vmem:[%s3 + $0x18] sm:$0xff]
        %v3316 = vld [vmem:[%s3 + $0x20] sm:$0xff]
        %v3317 = vld [vmem:[%s3 + $0x28] sm:$0xff]
        %v3318 = vld [vmem:[%s3 + $0x30] sm:$0xff]
        %v3319 = vld [vmem:[%s3 + $0x38] sm:$0xff]
        %v3320 = vld [vmem:[%s3 + $0x40] sm:$0xff]
        %v3321 = vld [vmem:[%s3 + $0x48] sm:$0xff]
        %v3322 = vld [vmem:[%s3 + $0x50] sm:$0xff]
        %v3323 = vld [vmem:[%s3 + $0x58] sm:$0xff]
        %v3324 = vld [vmem:[%s3 + $0x60] sm:$0xff]
        %v3325 = vld [vmem:[%s3 + $0x68] sm:$0xff]
        %v3326 = vld [vmem:[%s3 + $0x70] sm:$0xff]
        %v3327 = vld [vmem:[%s3 + $0x78] sm:$0xff]
        %v3328 = vld [vmem:[%s4] sm:$0x3]
        %v3330 = vperm.slane %v3328, 0
        %v3331 = vperm.slane %v3328, 1
        %v3350 = vunpack.c.l.b16 %v3296
        %v3351 = vunpack.c.l.b16 %v3297
        %v3352 = vunpack.c.l.b16 %v3298
        %v3353 = vunpack.c.l.b16 %v3299
        %v3354 = vunpack.c.l.b16 %v3300
        %v3355 = vunpack.c.l.b16 %v3301
        %v3356 = vunpack.c.l.b16 %v3302
        %v3357 = vunpack.c.l.b16 %v3303
        %v3358 = vunpack.c.l.b16 %v3304
        %v3359 = vunpack.c.l.b16 %v3305
        %v3360 = vunpack.c.l.b16 %v3306
        %v3361 = vunpack.c.l.b16 %v3307
        %v3362 = vunpack.c.l.b16 %v3308
        %v3363 = vunpack.c.l.b16 %v3309
        %v3364 = vunpack.c.l.b16 %v3310
        %v3365 = vunpack.c.l.b16 %v3311
        %vm3366 = vcmask 1041409
        %v3367 = vsel %vm3366, %v3351, %v3350
        %vm3368 = vcmask 1042434
        %v3369 = vsel %vm3368, %v3352, %v3367
        %vm3370 = vcmask 1043459
        %v3371 = vsel %vm3370, %v3353, %v3369
        %vm3372 = vcmask 1044484
        %v3373 = vsel %vm3372, %v3354, %v3371
        %vm3374 = vcmask 1045509
        %v3375 = vsel %vm3374, %v3355, %v3373
        %vm3376 = vcmask 1046534
        %v3377 = vsel %vm3376, %v3356, %v3375
        %vm3378 = vcmask 1047559
        %v3379 = vsel %vm3378, %v3357, %v3377
        %v3380 = vsel %vm3366, %v3359, %v3358
        %v3381 = vsel %vm3368, %v3360, %v3380
        %v3382 = vsel %vm3370, %v3361, %v3381
        %v3383 = vsel %vm3372, %v3362, %v3382
        %v3384 = vsel %vm3374, %v3363, %v3383
        %v3385 = vsel %vm3376, %v3364, %v3384
        %v3386 = vsel %vm3378, %v3365, %v3385
        %v3387 = vpack.c.b16 %v3386, %v3379
        %v3405 = vunpack.c.l.b16 %v3312
        %v3406 = vunpack.c.h.b16 %v3312
        %v3407 = vunpack.c.l.b16 %v3313
        %v3408 = vunpack.c.h.b16 %v3313
        %v3409 = vunpack.c.l.b16 %v3314
        %v3410 = vunpack.c.h.b16 %v3314
        %v3411 = vunpack.c.l.b16 %v3315
        %v3412 = vunpack.c.h.b16 %v3315
        %v3413 = vunpack.c.l.b16 %v3316
        %v3414 = vunpack.c.h.b16 %v3316
        %v3415 = vunpack.c.l.b16 %v3317
        %v3416 = vunpack.c.h.b16 %v3317
        %v3417 = vunpack.c.l.b16 %v3318
        %v3418 = vunpack.c.h.b16 %v3318
        %v3419 = vunpack.c.l.b16 %v3319
        %v3420 = vunpack.c.h.b16 %v3319
        %v3421 = vunpack.c.l.b16 %v3320
        %v3422 = vunpack.c.h.b16 %v3320
        %v3423 = vunpack.c.l.b16 %v3321
        %v3424 = vunpack.c.h.b16 %v3321
        %v3425 = vunpack.c.l.b16 %v3322
        %v3426 = vunpack.c.h.b16 %v3322
        %v3427 = vunpack.c.l.b16 %v3323
        %v3428 = vunpack.c.h.b16 %v3323
        %v3429 = vunpack.c.l.b16 %v3324
        %v3430 = vunpack.c.h.b16 %v3324
        %v3431 = vunpack.c.l.b16 %v3325
        %v3432 = vunpack.c.h.b16 %v3325
        %v3433 = vunpack.c.l.b16 %v3326
        %v3434 = vunpack.c.h.b16 %v3326
        %v3435 = vunpack.c.l.b16 %v3327
        %v3436 = vunpack.c.h.b16 %v3327
        %v3437 = vpack.c.b16 %v3407, %v3405
        %v3438 = vpack.c.b16 %v3408, %v3406
        %v3439 = vpack.c.b16 %v3411, %v3409
        %v3440 = vpack.c.b16 %v3412, %v3410
        %v3441 = vpack.c.b16 %v3415, %v3413
        %v3442 = vpack.c.b16 %v3416, %v3414
        %v3443 = vpack.c.b16 %v3419, %v3417
        %v3444 = vpack.c.b16 %v3420, %v3418
        %v3445 = vpack.c.b16 %v3423, %v3421
        %v3446 = vpack.c.b16 %v3424, %v3422
        %v3447 = vpack.c.b16 %v3427, %v3425
        %v3448 = vpack.c.b16 %v3428, %v3426
        %v3449 = vpack.c.b16 %v3431, %v3429
        %v3450 = vpack.c.b16 %v3432, %v3430
        %v3451 = vpack.c.b16 %v3435, %v3433
        %v3452 = vpack.c.b16 %v3436, %v3434
        %3469 = vmatpush.bf16.msra.mxu0 %v3451
        %3470 = vmatpush.bf16.msra.mxu0 %v3449
        %3471 = vmatpush.bf16.msra.mxu0 %v3447
        %3472 = vmatpush.bf16.msra.mxu0 %v3445
        %3473 = vmatpush.bf16.msra.mxu0 %v3443
        %3474 = vmatpush.bf16.msra.mxu0 %v3441
        %3475 = vmatpush.bf16.msra.mxu0 %v3439
        %3476 = vmatpush.bf16.msra.mxu0 %v3437
        %3477 = vmatmul.bf16.gmra.mxu0 %v3387
        %v3478 = vpop.f32.mrf.mxu0
        %v3479 = vadd.f32 %v3330, %v3478
        %v3480 = vpop.f32.mrf.mxu0
        %v3481 = vadd.f32 %v3330, %v3480
        %3482 = vdwg.mxu0
        %3483 = vmatpush.bf16.msra.mxu0 %v3452
        %3484 = vmatpush.bf16.msra.mxu0 %v3450
        %3485 = vmatpush.bf16.msra.mxu0 %v3448
        %3486 = vmatpush.bf16.msra.mxu0 %v3446
        %3487 = vmatpush.bf16.msra.mxu0 %v3444
        %3488 = vmatpush.bf16.msra.mxu0 %v3442
        %3489 = vmatpush.bf16.msra.mxu0 %v3440
        %3490 = vmatpush.bf16.msra.mxu0 %v3438
        %3491 = vmatmul.bf16.gmra.mxu0 %v3387
        %v3492 = vpop.f32.mrf.mxu0
        %v3493 = vadd.f32 %v3331, %v3492
        %v3494 = vpop.f32.mrf.mxu0
        %v3495 = vadd.f32 %v3331, %v3494
        %3496 = vdwg.mxu0
        %v3497 = vmax.f32 %v3479, 0.0
        %v3498 = vmax.f32 %v3481, 0.0
        %v3499 = vxor.u32 %v3493, 2147483648
        %v3500 = vxor.u32 %v3495, 2147483648
        %v3501 = vmul.f32 %v3499, 1.442695
        %v3502 = vpow.pop %v3501
        %v3503 = vmul.f32 %v3500, 1.442695
        %v3504 = vpow.pop %v3503
        %v3505 = vadd.f32 %v3502, 1.0
        %v3506 = vadd.f32 %v3504, 1.0
        %v3507 = vrcp.pop %v3505
        %v3508 = vmul.f32 %v3505, %v3507
        %v3509 = vsub.f32 1.0, %v3508
        %v3510 = vmul.f32 %v3507, %v3509
        %v3511 = vadd.f32 %v3507, %v3510
        %vm3512 = vweird.f32 %v3505
        %vm3513 = vweird.f32 %v3507
        %vm3514 = vmor %vm3512, %vm3513
        %v3515 = vsel %vm3514, %v3507, %v3511
        %v3516 = vand.u32 2147483647, %v3505
        %vm3517 = vcmp.eq.f32.partialorder %v3516, 8.507059e+37
        %v3518 = vand.u32 %v3505, 2147483648
        %v3519 = vor.u32 1.1754944e-38, %v3518
        %v3520 = vsel %vm3517, %v3519, %v3515
        %v3521 = vmul.f32 1.0, %v3520
        %v3522 = vrcp.pop %v3506
        %v3523 = vmul.f32 %v3506, %v3522
        %v3524 = vsub.f32 1.0, %v3523
        %v3525 = vmul.f32 %v3522, %v3524
        %v3526 = vadd.f32 %v3522, %v3525
        %vm3527 = vweird.f32 %v3506
        %vm3528 = vweird.f32 %v3522
        %vm3529 = vmor %vm3527, %vm3528
        %v3530 = vsel %vm3529, %v3522, %v3526
        %v3531 = vand.u32 2147483647, %v3506
        %vm3532 = vcmp.eq.f32.partialorder %v3531, 8.507059e+37
        %v3533 = vand.u32 %v3506, 2147483648
        %v3534 = vor.u32 1.1754944e-38, %v3533
        %v3535 = vsel %vm3532, %v3534, %v3530
        %v3536 = vmul.f32 1.0, %v3535
        %v3537 = vmul.f32 %v3521, %v3497
        %v3538 = vmul.f32 %v3536, %v3498
        %v3539 = vsub.f32 1.0, %v3521
        %v3540 = vsub.f32 1.0, %v3536
        %v3557 = vsel %vm3366, %v3281, %v3280
        %v3558 = vsel %vm3368, %v3282, %v3557
        %v3559 = vsel %vm3370, %v3283, %v3558
        %v3560 = vsel %vm3372, %v3284, %v3559
        %v3561 = vsel %vm3374, %v3285, %v3560
        %v3562 = vsel %vm3376, %v3286, %v3561
        %v3563 = vsel %vm3378, %v3287, %v3562
        %v3564 = vsel %vm3366, %v3289, %v3288
        %v3565 = vsel %vm3368, %v3290, %v3564
        %v3566 = vsel %vm3370, %v3291, %v3565
        %v3567 = vsel %vm3372, %v3292, %v3566
        %v3568 = vsel %vm3374, %v3293, %v3567
        %v3569 = vsel %vm3376, %v3294, %v3568
        %v3570 = vsel %vm3378, %v3295, %v3569
        %v3573 = vmul.f32 %v3539, %v3563
        %v3574 = vmul.f32 %v3540, %v3570
        %v3575 = vadd.f32 %v3537, %v3573
        %v3576 = vadd.f32 %v3538, %v3574
        %3577 = vst [vmem:[%s218] sm:$0xff] %v3575
        %3578 = vst [vmem:[%s218 + $0x8] sm:$0xff] %v3576
        %s3579 = sand.u32 %s137, 1
        %s3580 = scalar_lea.sflag [#allocation3], %s3579
        %s3581 = sand.u32 %s137, 1
        %s3582 = smul.addr %s3581, 16
        %s3583 = scalar_lea.vmem [#allocation2], %s3582
        // Predicated region
        $region41: #{model_embeddings_forward.1} parent=39 // pred_check
          %p3584 = pneg %p147
        $region42: #{model_embeddings_forward.1} parent=39 // pred_check_branch
          %3586 = sbr.rel (%p3584) target = $region44
        $region43: #{model_embeddings_forward.1} parent=39 // pred_region
          %s3587 = smul.u32 2, %s19
          %3589 = vsyncadd %s3580, 0
          %s3590 = smul.addr %s3587, 8
          %s3591 = scalar_lea.hbm %s5, %s3590
          %s3592 = sshll.u32 %s3583, 4
          %s3593 = int_to_ptr.vmem [resolvable:$true] %s3592
          %s3594 = sshll.u32 %s3591, 4
          %s3595 = int_to_ptr.hbm [resolvable:$true] %s3594
          %3600 = dma.vmem_to_hbm [thread:$0]  %s3593, 256, %s3595, %s3580, 128, 128, 8
        $region44: #{model_embeddings_forward.1} parent=39 // pred_fallthru
          _
      $region40: #{model_embeddings_forward.1} parent=5 // pred_fallthru
        _
      %p3601 = scmp.le.s32.totalorder 2, %s14
      // Predicated region
      $region45: #{model_embeddings_forward.1} parent=5 // pred_check
        %p3602 = pneg %p3601
      $region46: #{model_embeddings_forward.1} parent=5 // pred_check_branch
        %3604 = sbr.rel (%p3602) target = $region48
      $region47: #{model_embeddings_forward.1} parent=5 // pred_region
        %s3605 = ssub.s32 %s14, 2
        // Predicated region
        $region49: #{model_embeddings_forward.1} parent=47 // pred_check
          %p3606 = pneg %p153
        $region50: #{model_embeddings_forward.1} parent=47 // pred_check_branch
          %3608 = sbr.rel (%p3606) target = $region52
        $region51: #{model_embeddings_forward.1} parent=47 // pred_region
          %s3609 = sand.u32 %s138, 1
          %s3610 = scalar_lea.sflag [#allocation3], %s3609
          %s3611 = sand.u32 %s138, 1
          %s3612 = smul.addr %s3611, 16
          %s3613 = scalar_lea.vmem [#allocation2], %s3612
          %3615 = dma.done %s3610, 256
        $region52: #{model_embeddings_forward.1} parent=47 // pred_fallthru
          _
      $region48: #{model_embeddings_forward.1} parent=5 // pred_fallthru
        _
    $region6: #{model_embeddings_forward.1} parent=1 // loop_footer
      %s18 = sadd.s32 1, %s14
    $region7: #{model_embeddings_forward.1} parent=1 // loop_footer_branch
      %13 = sbr.rel target = $region3
    $region8: #{model_embeddings_forward.1} parent=1 // loop_exit
      _
    %3616 = vsyncpa [#allocation3], 1
    %s3617 = scalar_lea.sflag [#allocation3], 1
    %3618 = vsyncpa %s3617, 1

</llo_original>
